<compile_context>
chip_gen: v7x
topology: tpu7x:2x2x1
jax: 0.10.0
libtpu: 0.0.40
codegen_flags: <defaults>
</compile_context>

<pallas_src>
import jax
import jax.numpy as jnp
from jax.experimental import pallas as pl
from jax.experimental.pallas import tpu as pltpu


def _preact_block_kernel(xp_ref, w1_ref, w2_ref, o_ref, pad_scr):
    """One image per grid step.

    xp_ref : (H+2, W+2, Cin)  zero-padded input (relu(pad(x)) == pad(relu(x)))
    w1_ref : (9*Cin, P)       conv1 weight, rows ordered (ky, kx, cin)
    w2_ref : (9*P,   P)       conv2 weight, same flattening
    o_ref  : (P, H*W)         output tile, spatial on the lane axis (lane-dense)
    pad_scr: (H+2, W+2, P)    padded relu(conv1) used for conv2's 1-px halo
    """
    Hp, Wp, Cin = xp_ref.shape
    H, W = Hp - 2, Wp - 2
    P = w1_ref.shape[-1]
    M = H * W

    x_pad = xp_ref[...].astype(jnp.float32)          # (H+2, W+2, Cin)
    xa = jnp.maximum(x_pad, 0.0)                     # relu (zeros stay zeros)

    # ---- conv1: im2col patch built once, single K = 9*Cin matmul ----
    cols1 = jnp.concatenate(
        [xa[dy:dy + H, dx:dx + W, :].reshape(M, Cin)
         for dy in range(3) for dx in range(3)], axis=-1)        # (M, 9*Cin)
    y1 = jnp.dot(cols1, w1_ref[...].astype(jnp.float32),
                 preferred_element_type=jnp.float32)             # (M, P)
    y1 = jnp.maximum(y1, 0.0)                                    # relu

    # ---- conv2 halo: zero only the 1-pixel border, write the interior once ----
    pad_scr[0:1, :, :] = jnp.zeros((1, Wp, P), jnp.float32)
    pad_scr[H + 1:H + 2, :, :] = jnp.zeros((1, Wp, P), jnp.float32)
    pad_scr[:, 0:1, :] = jnp.zeros((Hp, 1, P), jnp.float32)
    pad_scr[:, W + 1:W + 2, :] = jnp.zeros((Hp, 1, P), jnp.float32)
    pad_scr[1:H + 1, 1:W + 1, :] = y1.reshape(H, W, P)
    y1p = pad_scr[...]                                           # (H+2, W+2, P)

    # ---- conv2: same single-matmul im2col, K = 9*P ----
    cols2 = jnp.concatenate(
        [y1p[dy:dy + H, dx:dx + W, :].reshape(M, P)
         for dy in range(3) for dx in range(3)], axis=-1)        # (M, 9*P)
    y2 = jnp.dot(cols2, w2_ref[...].astype(jnp.float32),
                 preferred_element_type=jnp.float32)             # (M, P)

    # ---- identity shortcut (un-activated x) + lane-dense store ----
    shortcut = x_pad[1:H + 1, 1:W + 1, :].reshape(M, Cin)
    out = (y2 + shortcut).T                                      # (P, M): H*W on lanes
    o_ref[...] = out.astype(o_ref.dtype)


def preact_block_nobn(x_nchw, w1_oihw, w2_oihw):
    """PreActBlock_nobn forward (stride=1, in_planes == planes -> identity shortcut)."""
    # TODO(synk): projection-shortcut path (stride != 1 or in_planes != planes,
    # 1x1 strided conv) is not implemented in this kernel.
    # TODO(synk): for large spatial extents, additionally tile H with a 1-row
    # halo (and feed bf16 operands on v6e/v7x); not needed at these shapes.
    N, Cin, H, W = x_nchw.shape
    P = w1_oihw.shape[0]
    assert w1_oihw.shape == (P, Cin, 3, 3)
    assert w2_oihw.shape == (P, P, 3, 3)
    assert Cin == P, "identity shortcut requires in_planes == planes"

    # NHWC activations, spatially pre-padded by 1 (relu(pad(x)) == pad(relu(x))).
    x_nhwc = jnp.transpose(x_nchw, (0, 2, 3, 1))
    xp = jnp.pad(x_nhwc, ((0, 0), (1, 1), (1, 1), (0, 0)))
    # OIHW -> HWIO, flattened to (ky*kx*cin, cout) to match the in-kernel im2col.
    w1f = jnp.transpose(w1_oihw, (2, 3, 1, 0)).reshape(9 * Cin, P)
    w2f = jnp.transpose(w2_oihw, (2, 3, 1, 0)).reshape(9 * P, P)

    out_flat = pl.pallas_call(
        _preact_block_kernel,
        out_shape=jax.ShapeDtypeStruct((N, P, H * W), x_nchw.dtype),
        grid=(N,),
        in_specs=[
            pl.BlockSpec((None, H + 2, W + 2, Cin), lambda n: (n, 0, 0, 0)),
            pl.BlockSpec((9 * Cin, P), lambda n: (0, 0)),
            pl.BlockSpec((9 * P, P), lambda n: (0, 0)),
        ],
        out_specs=pl.BlockSpec((None, P, H * W), lambda n: (n, 0, 0)),
        scratch_shapes=[pltpu.VMEM((H + 2, W + 2, P), jnp.float32)],
        compiler_params=pltpu.CompilerParams(
            dimension_semantics=("parallel",),
            vmem_limit_bytes=32 * 1024 * 1024,
        ),
    )(xp, w1f, w2f)

    # (N, P, H*W) -> NCHW is a pure reshape; no transpose needed on the way out.
    return out_flat.reshape(N, P, H, W)


def _reference(x, w1, w2):
    """Pure-JAX reference matching the PyTorch forward (NCHW / OIHW)."""
    dn = ('NCHW', 'OIHW', 'NCHW')
    out = jax.nn.relu(x)
    shortcut = x
    out = jax.lax.conv_general_dilated(out, w1, (1, 1), ((1, 1), (1, 1)),
                                       dimension_numbers=dn)
    out = jax.lax.conv_general_dilated(jax.nn.relu(out), w2, (1, 1), ((1, 1), (1, 1)),
                                       dimension_numbers=dn)
    return out + shortcut


if __name__ == "__main__":
    # PreActBlock_nobn(in_planes=4, planes=4, stride=1) -> identity shortcut.
    N, C, H, W = 2, 4, 16, 16
    planes = 4

    key = jax.random.PRNGKey(0)
    kx, k1, k2 = jax.random.split(key, 3)
    x = jax.random.normal(kx, (N, C, H, W), dtype=jnp.float32)
    # PyTorch nn.Conv2d weight layout: (out_channels, in_channels, kh, kw)
    w1 = jax.random.normal(k1, (planes, C, 3, 3), dtype=jnp.float32) * 0.1
    w2 = jax.random.normal(k2, (planes, planes, 3, 3), dtype=jnp.float32) * 0.1

    out = jax.block_until_ready(preact_block_nobn(x, w1, w2))
    ref = jax.block_until_ready(_reference(x, w1, w2))

    assert out.shape == (N, planes, H, W), out.shape
    assert jnp.allclose(out, ref, atol=1e-4, rtol=1e-4), float(jnp.max(jnp.abs(out - ref)))
    print("KERNEL_OK")
</pallas_src>

<mosaic_0001>
module attributes {stable_mosaic.version = 11 : i64} {
  func.func @_preact_block_kernel(%arg0: i32, %arg1: memref<1x18x18x4xf32, #tpu.memory_space<vmem>>, %arg2: memref<36x4xf32, #tpu.memory_space<vmem>>, %arg3: memref<36x4xf32, #tpu.memory_space<vmem>>, %arg4: memref<1x4x256xf32, #tpu.memory_space<vmem>>, %arg5: memref<18x18x4xf32, #tpu.memory_space<vmem>>) attributes {dimension_semantics = [#tpu.dimension_semantics<parallel>], iteration_bounds = array<i64: 2>, scalar_prefetch = 0 : i64, scratch_operands = 1 : i64, tpu.core_type = #tpu.core_type<tc>, window_params = [{transform_indices = @transform_0, window_bounds = array<i64: 1, 18, 18, 4>}, {pipeline_mode = #tpu.pipeline_mode<synchronous>, transform_indices = @transform_1, window_bounds = array<i64: 36, 4>}, {pipeline_mode = #tpu.pipeline_mode<synchronous>, transform_indices = @transform_2, window_bounds = array<i64: 36, 4>}, {transform_indices = @transform_3, window_bounds = array<i64: 1, 4, 256>}]} {
    %c0 = arith.constant 0 : index
    %c0_0 = arith.constant 0 : index
    %c0_1 = arith.constant 0 : index
    %c0_2 = arith.constant 0 : index
    %0 = vector.load %arg1[%c0, %c0_0, %c0_1, %c0_2] : memref<1x18x18x4xf32, #tpu.memory_space<vmem>>, vector<1x18x18x4xf32>
    %1 = vector.shape_cast %0 : vector<1x18x18x4xf32> to vector<18x18x4xf32>
    %cst = arith.constant 0.000000e+00 : f32
    %2 = vector.broadcast %cst : f32 to vector<18x18x4xf32>
    %3 = arith.maximumf %1, %2 : vector<18x18x4xf32>
    %4 = vector.extract_strided_slice %3 {offsets = [0, 0, 0], sizes = [16, 16, 4], strides = [1, 1, 1]} : vector<18x18x4xf32> to vector<16x16x4xf32>
    %5 = vector.shape_cast %4 : vector<16x16x4xf32> to vector<256x4xf32>
    %6 = vector.extract_strided_slice %3 {offsets = [0, 1, 0], sizes = [16, 16, 4], strides = [1, 1, 1]} : vector<18x18x4xf32> to vector<16x16x4xf32>
    %7 = vector.shape_cast %6 : vector<16x16x4xf32> to vector<256x4xf32>
    %8 = vector.extract_strided_slice %3 {offsets = [0, 2, 0], sizes = [16, 16, 4], strides = [1, 1, 1]} : vector<18x18x4xf32> to vector<16x16x4xf32>
    %9 = vector.shape_cast %8 : vector<16x16x4xf32> to vector<256x4xf32>
    %10 = vector.extract_strided_slice %3 {offsets = [1, 0, 0], sizes = [16, 16, 4], strides = [1, 1, 1]} : vector<18x18x4xf32> to vector<16x16x4xf32>
    %11 = vector.shape_cast %10 : vector<16x16x4xf32> to vector<256x4xf32>
    %12 = vector.extract_strided_slice %3 {offsets = [1, 1, 0], sizes = [16, 16, 4], strides = [1, 1, 1]} : vector<18x18x4xf32> to vector<16x16x4xf32>
    %13 = vector.shape_cast %12 : vector<16x16x4xf32> to vector<256x4xf32>
    %14 = vector.extract_strided_slice %3 {offsets = [1, 2, 0], sizes = [16, 16, 4], strides = [1, 1, 1]} : vector<18x18x4xf32> to vector<16x16x4xf32>
    %15 = vector.shape_cast %14 : vector<16x16x4xf32> to vector<256x4xf32>
    %16 = vector.extract_strided_slice %3 {offsets = [2, 0, 0], sizes = [16, 16, 4], strides = [1, 1, 1]} : vector<18x18x4xf32> to vector<16x16x4xf32>
    %17 = vector.shape_cast %16 : vector<16x16x4xf32> to vector<256x4xf32>
    %18 = vector.extract_strided_slice %3 {offsets = [2, 1, 0], sizes = [16, 16, 4], strides = [1, 1, 1]} : vector<18x18x4xf32> to vector<16x16x4xf32>
    %19 = vector.shape_cast %18 : vector<16x16x4xf32> to vector<256x4xf32>
    %20 = vector.extract_strided_slice %3 {offsets = [2, 2, 0], sizes = [16, 16, 4], strides = [1, 1, 1]} : vector<18x18x4xf32> to vector<16x16x4xf32>
    %21 = vector.shape_cast %20 : vector<16x16x4xf32> to vector<256x4xf32>
    %22 = tpu.concatenate %5, %7, %9, %11, %13, %15, %17, %19, %21 in 1 : vector<256x4xf32>, vector<256x4xf32>, vector<256x4xf32>, vector<256x4xf32>, vector<256x4xf32>, vector<256x4xf32>, vector<256x4xf32>, vector<256x4xf32>, vector<256x4xf32> -> vector<256x36xf32>
    %c0_3 = arith.constant 0 : index
    %c0_4 = arith.constant 0 : index
    %23 = vector.load %arg2[%c0_3, %c0_4] : memref<36x4xf32, #tpu.memory_space<vmem>>, vector<36x4xf32>
    %cst_5 = arith.constant dense<0.000000e+00> : vector<256x4xf32>
    %24 = tpu.matmul %22, %23, %cst_5 {dimension_numbers = #tpu.dot_dimension_numbers<[1], [0], [0], [1], [0, 0, 1, 1], [], []>} : vector<256x36xf32>, vector<36x4xf32>, vector<256x4xf32> -> vector<256x4xf32>
    %cst_6 = arith.constant 0.000000e+00 : f32
    %25 = vector.broadcast %cst_6 : f32 to vector<256x4xf32>
    %26 = arith.maximumf %24, %25 : vector<256x4xf32>
    %cst_7 = arith.constant 0.000000e+00 : f32
    %27 = vector.broadcast %cst_7 : f32 to vector<1x18x4xf32>
    %c0_8 = arith.constant 0 : index
    %c0_9 = arith.constant 0 : index
    %c0_10 = arith.constant 0 : index
    %28 = vector.load %arg5[%c0_8, %c0_9, %c0_10] : memref<18x18x4xf32, #tpu.memory_space<vmem>>, vector<1x18x4xf32>
    tpu.vector_store %arg5[%c0_8, %c0_9, %c0_10], %27 {strides = array<i32>} : memref<18x18x4xf32, #tpu.memory_space<vmem>>, vector<1x18x4xf32>,
    %cst_11 = arith.constant 0.000000e+00 : f32
    %29 = vector.broadcast %cst_11 : f32 to vector<1x18x4xf32>
    %c17 = arith.constant 17 : index
    %c0_12 = arith.constant 0 : index
    %c0_13 = arith.constant 0 : index
    %30 = vector.load %arg5[%c17, %c0_12, %c0_13] : memref<18x18x4xf32, #tpu.memory_space<vmem>>, vector<1x18x4xf32>
    tpu.vector_store %arg5[%c17, %c0_12, %c0_13], %29 {strides = array<i32>} : memref<18x18x4xf32, #tpu.memory_space<vmem>>, vector<1x18x4xf32>,
    %cst_14 = arith.constant 0.000000e+00 : f32
    %31 = vector.broadcast %cst_14 : f32 to vector<18x1x4xf32>
    %c0_15 = arith.constant 0 : index
    %c0_16 = arith.constant 0 : index
    %c0_17 = arith.constant 0 : index
    %32 = vector.load %arg5[%c0_15, %c0_16, %c0_17] : memref<18x18x4xf32, #tpu.memory_space<vmem>>, vector<18x1x4xf32>
    tpu.vector_store %arg5[%c0_15, %c0_16, %c0_17], %31 {strides = array<i32>} : memref<18x18x4xf32, #tpu.memory_space<vmem>>, vector<18x1x4xf32>,
    %cst_18 = arith.constant 0.000000e+00 : f32
    %33 = vector.broadcast %cst_18 : f32 to vector<18x1x4xf32>
    %c0_19 = arith.constant 0 : index
    %c17_20 = arith.constant 17 : index
    %c0_21 = arith.constant 0 : index
    %34 = vector.load %arg5[%c0_19, %c17_20, %c0_21] : memref<18x18x4xf32, #tpu.memory_space<vmem>>, vector<18x1x4xf32>
    tpu.vector_store %arg5[%c0_19, %c17_20, %c0_21], %33 {strides = array<i32>} : memref<18x18x4xf32, #tpu.memory_space<vmem>>, vector<18x1x4xf32>,
    %35 = vector.shape_cast %26 : vector<256x4xf32> to vector<16x16x4xf32>
    %c1 = arith.constant 1 : index
    %c1_22 = arith.constant 1 : index
    %c0_23 = arith.constant 0 : index
    %36 = vector.load %arg5[%c1, %c1_22, %c0_23] : memref<18x18x4xf32, #tpu.memory_space<vmem>>, vector<16x16x4xf32>
    tpu.vector_store %arg5[%c1, %c1_22, %c0_23], %35 {strides = array<i32>} : memref<18x18x4xf32, #tpu.memory_space<vmem>>, vector<16x16x4xf32>,
    %c0_24 = arith.constant 0 : index
    %c0_25 = arith.constant 0 : index
    %c0_26 = arith.constant 0 : index
    %37 = vector.load %arg5[%c0_24, %c0_25, %c0_26] : memref<18x18x4xf32, #tpu.memory_space<vmem>>, vector<18x18x4xf32>
    %38 = vector.extract_strided_slice %37 {offsets = [0, 0, 0], sizes = [16, 16, 4], strides = [1, 1, 1]} : vector<18x18x4xf32> to vector<16x16x4xf32>
    %39 = vector.shape_cast %38 : vector<16x16x4xf32> to vector<256x4xf32>
    %40 = vector.extract_strided_slice %37 {offsets = [0, 1, 0], sizes = [16, 16, 4], strides = [1, 1, 1]} : vector<18x18x4xf32> to vector<16x16x4xf32>
    %41 = vector.shape_cast %40 : vector<16x16x4xf32> to vector<256x4xf32>
    %42 = vector.extract_strided_slice %37 {offsets = [0, 2, 0], sizes = [16, 16, 4], strides = [1, 1, 1]} : vector<18x18x4xf32> to vector<16x16x4xf32>
    %43 = vector.shape_cast %42 : vector<16x16x4xf32> to vector<256x4xf32>
    %44 = vector.extract_strided_slice %37 {offsets = [1, 0, 0], sizes = [16, 16, 4], strides = [1, 1, 1]} : vector<18x18x4xf32> to vector<16x16x4xf32>
    %45 = vector.shape_cast %44 : vector<16x16x4xf32> to vector<256x4xf32>
    %46 = vector.extract_strided_slice %37 {offsets = [1, 1, 0], sizes = [16, 16, 4], strides = [1, 1, 1]} : vector<18x18x4xf32> to vector<16x16x4xf32>
    %47 = vector.shape_cast %46 : vector<16x16x4xf32> to vector<256x4xf32>
    %48 = vector.extract_strided_slice %37 {offsets = [1, 2, 0], sizes = [16, 16, 4], strides = [1, 1, 1]} : vector<18x18x4xf32> to vector<16x16x4xf32>
    %49 = vector.shape_cast %48 : vector<16x16x4xf32> to vector<256x4xf32>
    %50 = vector.extract_strided_slice %37 {offsets = [2, 0, 0], sizes = [16, 16, 4], strides = [1, 1, 1]} : vector<18x18x4xf32> to vector<16x16x4xf32>
    %51 = vector.shape_cast %50 : vector<16x16x4xf32> to vector<256x4xf32>
    %52 = vector.extract_strided_slice %37 {offsets = [2, 1, 0], sizes = [16, 16, 4], strides = [1, 1, 1]} : vector<18x18x4xf32> to vector<16x16x4xf32>
    %53 = vector.shape_cast %52 : vector<16x16x4xf32> to vector<256x4xf32>
    %54 = vector.extract_strided_slice %37 {offsets = [2, 2, 0], sizes = [16, 16, 4], strides = [1, 1, 1]} : vector<18x18x4xf32> to vector<16x16x4xf32>
    %55 = vector.shape_cast %54 : vector<16x16x4xf32> to vector<256x4xf32>
    %56 = tpu.concatenate %39, %41, %43, %45, %47, %49, %51, %53, %55 in 1 : vector<256x4xf32>, vector<256x4xf32>, vector<256x4xf32>, vector<256x4xf32>, vector<256x4xf32>, vector<256x4xf32>, vector<256x4xf32>, vector<256x4xf32>, vector<256x4xf32> -> vector<256x36xf32>
    %c0_27 = arith.constant 0 : index
    %c0_28 = arith.constant 0 : index
    %57 = vector.load %arg3[%c0_27, %c0_28] : memref<36x4xf32, #tpu.memory_space<vmem>>, vector<36x4xf32>
    %cst_29 = arith.constant dense<0.000000e+00> : vector<256x4xf32>
    %58 = tpu.matmul %56, %57, %cst_29 {dimension_numbers = #tpu.dot_dimension_numbers<[1], [0], [0], [1], [0, 0, 1, 1], [], []>} : vector<256x36xf32>, vector<36x4xf32>, vector<256x4xf32> -> vector<256x4xf32>
    %59 = vector.extract_strided_slice %1 {offsets = [1, 1, 0], sizes = [16, 16, 4], strides = [1, 1, 1]} : vector<18x18x4xf32> to vector<16x16x4xf32>
    %60 = vector.shape_cast %59 : vector<16x16x4xf32> to vector<256x4xf32>
    %61 = arith.addf %58, %60 : vector<256x4xf32>
    %62 = tpu.transpose %61, [1, 0] : vector<256x4xf32> -> vector<4x256xf32>
    %c0_30 = arith.constant 0 : index
    %c0_31 = arith.constant 0 : index
    %c0_32 = arith.constant 0 : index
    %63 = vector.load %arg4[%c0_30, %c0_31, %c0_32] : memref<1x4x256xf32, #tpu.memory_space<vmem>>, vector<1x4x256xf32>
    %64 = vector.shape_cast %63 : vector<1x4x256xf32> to vector<4x256xf32>
    %65 = vector.shape_cast %62 : vector<4x256xf32> to vector<1x4x256xf32>
    tpu.vector_store %arg4[%c0_30, %c0_31, %c0_32], %65 {strides = array<i32>} : memref<1x4x256xf32, #tpu.memory_space<vmem>>, vector<1x4x256xf32>,
    return
  }
  func.func @transform_0(%arg0: i32) -> (i32, i32, i32, i32) {
    %c0_i32 = arith.constant 0 : i32
    %c0_i32_0 = arith.constant 0 : i32
    %c0_i32_1 = arith.constant 0 : i32
    %c0_i32_2 = arith.constant 0 : i32
    return %arg0, %c0_i32, %c0_i32_0, %c0_i32_1 : i32, i32, i32, i32
  }
  func.func @transform_1(%arg0: i32) -> (i32, i32) {
    %c0_i32 = arith.constant 0 : i32
    %c0_i32_0 = arith.constant 0 : i32
    %c0_i32_1 = arith.constant 0 : i32
    return %c0_i32, %c0_i32_0 : i32, i32
  }
  func.func @transform_2(%arg0: i32) -> (i32, i32) {
    %c0_i32 = arith.constant 0 : i32
    %c0_i32_0 = arith.constant 0 : i32
    %c0_i32_1 = arith.constant 0 : i32
    return %c0_i32, %c0_i32_0 : i32, i32
  }
  func.func @transform_3(%arg0: i32) -> (i32, i32, i32) {
    %c0_i32 = arith.constant 0 : i32
    %c0_i32_0 = arith.constant 0 : i32
    %c0_i32_1 = arith.constant 0 : i32
    return %arg0, %c0_i32, %c0_i32_0 : i32, i32, i32
  }
}

</mosaic_0001>

<llo_original>
// kernel: tpu_custom_call.1
$region0: #{tpu_custom_call.1}
  #allocation0 [shape = 'u32[]', space=smem, size = 0x4, offset = 0x4, fixed_abs, tag = 'smem constant byte address 0x4 - core index']
  #allocation1 [shape = 'u32[144,128]{1,0:T(1,128)}', space=vmem, size = 0x12000, scoped, tag = 'internal scratch']
  #allocation2 [shape = 'f32[18,18,4]{2,1,0:T(8,128)}', space=vmem, size = 0x36000, scoped, tag = 'scratch operand']
  %s0 = inlined_call_operand.vmem [shape: f32[2,18,18,4], index: 0, kind: input, shape index: {}]
  %s1 = inlined_call_operand.vmem [shape: f32[36,4], index: 1, kind: input, shape index: {}]
  %s2 = inlined_call_operand.vmem [shape: f32[36,4], index: 2, kind: input, shape index: {}]
  %s3 = inlined_call_operand.hbm [shape: f32[2,4,256], index: 3, kind: output, shape index: {}]
  %s4 = sld [smem:[#allocation0]]
  $region45: #{tpu_custom_call.1} parent=0
    _
  %s6 = ssub.s32 1, %s4
  %s7 = scalar_select 0, %s6, %s4
  $region1: #{tpu_custom_call.1} parent=0
    #allocation3 [shape = 'u8[8192]{0}', space=vmem, size = 0x2000, scoped, tag = 'output window, operand 0']
    #allocation4 [shape = 's32[2]{0}', space=sflag, size = 0x8, scoped, tag = 'scoped memory for tpu_custom_call.1']
    %8 = vsyncpa [#allocation4], 0
    %s9 = scalar_lea.sflag [#allocation4], 1
    %10 = vsyncpa %s9, 0
    loop: start=0, step=1, limit=4
    $region2: #{tpu_custom_call.1} parent=1 // loop_pre_header
      _
    $region3: #{tpu_custom_call.1} parent=1 // loop_header
      %s12 = sphi 0, %s16
      %p13 = scmp.ge.s32.totalorder %s12, 4
      %s22 = sphi 0, %s24
      %s25 = sphi 0, %s22
      %s26 = sphi 0, %s25
      %s42 = sphi 0, %s26
      %s46 = sphi 0, %s46
      %s48 = sphi 0, %s46
      %s49 = sphi 0, %s48
      %s63 = sphi 0, %s49
      %s67 = sphi 0, %s67
      %s69 = sphi 0, %s67
      %s70 = sphi 0, %s69
      %s84 = sphi 0, %s70
      %s90 = sphi 0, %s92
      %s93 = sphi 0, %s90
      %s94 = sphi 0, %s93
      %s110 = sphi 0, %s94
    $region4: #{tpu_custom_call.1} parent=1 // loop_header_branch
      %15 = sbr.rel (%p13) target = $region8
    $region5: #{tpu_custom_call.1} parent=1 // loop_body
      %s17 = ssub.s32 %s12, 1
      %s18 = ssub.s32 %s12, 2
      %s19 = sadd.s32 %s12, 1
      %s20 = ssub.s32 %s12, %s19
      %p21 = scmp.eq.s32.totalorder %s20, 0
      %s23 = sadd.s32 %s22, 1
      %s24 = scalar_select %p21, %s22, %s23
      %p27 = pneg %p21
      %p28 = scmp.eq.s32.totalorder %s12, 1
      %p29 = por %p27, %p28
      %p30 = scmp.ne.s32.totalorder %s22, %s25
      %p31 = scmp.eq.s32.totalorder %s12, 0
      %p32 = por %p30, %p31
      %p33 = scmp.ne.s32.totalorder %s22, %s25
      %p34 = scmp.eq.s32.totalorder %s17, 1
      %p35 = por %p33, %p34
      %p36 = scmp.ne.s32.totalorder %s25, %s26
      %p37 = scmp.eq.s32.totalorder %s17, 0
      %p38 = por %p36, %p37
      %p39 = scmp.ne.s32.totalorder %s25, %s26
      %p40 = scmp.eq.s32.totalorder %s18, 1
      %p41 = por %p39, %p40
      %p43 = scmp.ne.s32.totalorder %s26, %s42
      %p44 = scmp.eq.s32.totalorder %s18, 0
      %p45 = por %p43, %p44
      %s47 = sadd.s32 %s46, 1
      %p50 = scmp.eq.s32.totalorder %s12, 1
      %p51 = scmp.ne.s32.totalorder %s46, %s48
      %p52 = scmp.eq.s32.totalorder %s12, 0
      %p53 = por %p51, %p52
      %p54 = scmp.ne.s32.totalorder %s46, %s48
      %p55 = scmp.eq.s32.totalorder %s17, 1
      %p56 = por %p54, %p55
      %p57 = scmp.ne.s32.totalorder %s48, %s49
      %p58 = scmp.eq.s32.totalorder %s17, 0
      %p59 = por %p57, %p58
      %p60 = scmp.ne.s32.totalorder %s48, %s49
      %p61 = scmp.eq.s32.totalorder %s18, 1
      %p62 = por %p60, %p61
      %p64 = scmp.ne.s32.totalorder %s49, %s63
      %p65 = scmp.eq.s32.totalorder %s18, 0
      %p66 = por %p64, %p65
      %s68 = sadd.s32 %s67, 1
      %p71 = scmp.eq.s32.totalorder %s12, 1
      %p72 = scmp.ne.s32.totalorder %s67, %s69
      %p73 = scmp.eq.s32.totalorder %s12, 0
      %p74 = por %p72, %p73
      %p75 = scmp.ne.s32.totalorder %s67, %s69
      %p76 = scmp.eq.s32.totalorder %s17, 1
      %p77 = por %p75, %p76
      %p78 = scmp.ne.s32.totalorder %s69, %s70
      %p79 = scmp.eq.s32.totalorder %s17, 0
      %p80 = por %p78, %p79
      %p81 = scmp.ne.s32.totalorder %s69, %s70
      %p82 = scmp.eq.s32.totalorder %s18, 1
      %p83 = por %p81, %p82
      %p85 = scmp.ne.s32.totalorder %s70, %s84
      %p86 = scmp.eq.s32.totalorder %s18, 0
      %p87 = por %p85, %p86
      %s88 = ssub.s32 %s12, %s19
      %p89 = scmp.eq.s32.totalorder %s88, 0
      %s91 = sadd.s32 %s90, 1
      %s92 = scalar_select %p89, %s90, %s91
      %p95 = pneg %p89
      %p96 = scmp.eq.s32.totalorder %s12, 1
      %p97 = por %p95, %p96
      %p98 = scmp.ne.s32.totalorder %s90, %s93
      %p99 = scmp.eq.s32.totalorder %s12, 0
      %p100 = por %p98, %p99
      %p101 = scmp.ne.s32.totalorder %s90, %s93
      %p102 = scmp.eq.s32.totalorder %s17, 1
      %p103 = por %p101, %p102
      %p104 = scmp.ne.s32.totalorder %s93, %s94
      %p105 = scmp.eq.s32.totalorder %s17, 0
      %p106 = por %p104, %p105
      %p107 = scmp.ne.s32.totalorder %s93, %s94
      %p108 = scmp.eq.s32.totalorder %s18, 1
      %p109 = por %p107, %p108
      %p111 = scmp.ne.s32.totalorder %s94, %s110
      %p112 = scmp.eq.s32.totalorder %s18, 0
      %p113 = por %p111, %p112
      %p114 = scmp.le.s32.totalorder 1, %s12
      %p115 = scmp.lt.s32.totalorder %s12, 3
      %p116 = pnand %p114, %p115
      %p117 = pneg %p116
      // Predicated region
      $region9: #{tpu_custom_call.1} parent=5 // pred_check
        _
      $region10: #{tpu_custom_call.1} parent=5 // pred_check_branch
        %119 = sbr.rel (%p116) target = $region12
      $region11: #{tpu_custom_call.1} parent=5 // pred_region
        %s120 = ssub.s32 %s12, 1
        // Predicated region
        $region13: #{tpu_custom_call.1} parent=11 // pred_check
          %p121 = pneg %p59
        $region14: #{tpu_custom_call.1} parent=11 // pred_check_branch
          %123 = sbr.rel (%p121) target = $region16
        $region15: #{tpu_custom_call.1} parent=11 // pred_region
          _
        $region16: #{tpu_custom_call.1} parent=11 // pred_fallthru
          _
        // Predicated region
        $region17: #{tpu_custom_call.1} parent=11 // pred_check
          %p124 = pneg %p80
        $region18: #{tpu_custom_call.1} parent=11 // pred_check_branch
          %126 = sbr.rel (%p124) target = $region20
        $region19: #{tpu_custom_call.1} parent=11 // pred_region
          _
        $region20: #{tpu_custom_call.1} parent=11 // pred_fallthru
          _
      $region12: #{tpu_custom_call.1} parent=5 // pred_fallthru
        _
      %p127 = scmp.lt.s32.totalorder %s12, 2
      // Predicated region
      $region21: #{tpu_custom_call.1} parent=5 // pred_check
        %p128 = pneg %p127
      $region22: #{tpu_custom_call.1} parent=5 // pred_check_branch
        %130 = sbr.rel (%p128) target = $region24
      $region23: #{tpu_custom_call.1} parent=5 // pred_region
        // Predicated region
        $region25: #{tpu_custom_call.1} parent=23 // pred_check
          %p131 = pneg %p32
        $region26: #{tpu_custom_call.1} parent=23 // pred_check_branch
          %133 = sbr.rel (%p131) target = $region28
        $region27: #{tpu_custom_call.1} parent=23 // pred_region
          %p134 = scmp.lt.s32.totalorder %s12, 1
          %s135 = scalar_select %p134, %s12, 1
          %s136 = smul.addr %s135, 54
          %s137 = smul.addr %s136, 8
          %s138 = scalar_lea.vmem %s0, %s137
        $region28: #{tpu_custom_call.1} parent=23 // pred_fallthru
          _
      $region24: #{tpu_custom_call.1} parent=5 // pred_fallthru
        _
      %p139 = scmp.le.s32.totalorder 1, %s12
      %p140 = scmp.lt.s32.totalorder %s12, 3
      %p141 = pnand %p139, %p140
      %p142 = pneg %p141
      // Predicated region
      $region29: #{tpu_custom_call.1} parent=5 // pred_check
        _
      $region30: #{tpu_custom_call.1} parent=5 // pred_check_branch
        %144 = sbr.rel (%p141) target = $region32
      $region31: #{tpu_custom_call.1} parent=5 // pred_region
        %s145 = ssub.s32 %s12, 1
        %p146 = scmp.lt.s32.totalorder %s17, 1
        %s147 = scalar_select %p146, %s17, 1
        %s148 = smul.addr %s147, 54
        %s149 = smul.addr %s148, 8
        %s150 = scalar_lea.vmem %s0, %s149
        %p151 = pneg %p38
        %p152 = pneg %p35
        %p153 = pneg %p59
        %p154 = pneg %p56
        %p155 = pneg %p80
        %p156 = pneg %p77
        %p157 = pneg %p106
        %p158 = pneg %p103
        %s159 = sand.u32 %s93, 1
        %s160 = scalar_lea.sflag [#allocation4], %s159
        %s161 = sand.u32 %s93, 1
        %s162 = smul.addr %s161, 8
        %s163 = scalar_lea.vmem [#allocation3], %s162
        %p164 = scmp.lt.s32.totalorder %s17, 1
        %s165 = scalar_select %p164, %s17, 1
        %s166 = smul.addr %s165, 54
        %s167 = smul.addr %s166, 8
        %s168 = scalar_lea.vmem %s0, %s167
        %v169 = vld [vmem:[%s168] sm:$0xff]
        %v170 = vld [vmem:[%s168 + $0x8] sm:$0xff]
        %v171 = vld [vmem:[%s168 + $0x10] sm:$0x3]
        %v172 = vld [vmem:[%s168 + $0x18] sm:$0xff]
        %v173 = vld [vmem:[%s168 + $0x20] sm:$0xff]
        %v174 = vld [vmem:[%s168 + $0x28] sm:$0x3]
        %v175 = vld [vmem:[%s168 + $0x30] sm:$0xff]
        %v176 = vld [vmem:[%s168 + $0x38] sm:$0xff]
        %v177 = vld [vmem:[%s168 + $0x40] sm:$0x3]
        %v178 = vld [vmem:[%s168 + $0x48] sm:$0xff]
        %v179 = vld [vmem:[%s168 + $0x50] sm:$0xff]
        %v180 = vld [vmem:[%s168 + $0x58] sm:$0x3]
        %v181 = vld [vmem:[%s168 + $0x60] sm:$0xff]
        %v182 = vld [vmem:[%s168 + $0x68] sm:$0xff]
        %v183 = vld [vmem:[%s168 + $0x70] sm:$0x3]
        %v184 = vld [vmem:[%s168 + $0x78] sm:$0xff]
        %v185 = vld [vmem:[%s168 + $0x80] sm:$0xff]
        %v186 = vld [vmem:[%s168 + $0x88] sm:$0x3]
        %v187 = vld [vmem:[%s168 + $0x90] sm:$0xff]
        %v188 = vld [vmem:[%s168 + $0x98] sm:$0xff]
        %v189 = vld [vmem:[%s168 + $0xa0] sm:$0x3]
        %v190 = vld [vmem:[%s168 + $0xa8] sm:$0xff]
        %v191 = vld [vmem:[%s168 + $0xb0] sm:$0xff]
        %v192 = vld [vmem:[%s168 + $0xb8] sm:$0x3]
        %v193 = vld [vmem:[%s168 + $0xc0] sm:$0xff]
        %v194 = vld [vmem:[%s168 + $0xc8] sm:$0xff]
        %v195 = vld [vmem:[%s168 + $0xd0] sm:$0x3]
        %v196 = vld [vmem:[%s168 + $0xd8] sm:$0xff]
        %v197 = vld [vmem:[%s168 + $0xe0] sm:$0xff]
        %v198 = vld [vmem:[%s168 + $0xe8] sm:$0x3]
        %v199 = vld [vmem:[%s168 + $0xf0] sm:$0xff]
        %v200 = vld [vmem:[%s168 + $0xf8] sm:$0xff]
        %v201 = vld [vmem:[%s168 + $0x100] sm:$0x3]
        %v202 = vld [vmem:[%s168 + $0x108] sm:$0xff]
        %v203 = vld [vmem:[%s168 + $0x110] sm:$0xff]
        %v204 = vld [vmem:[%s168 + $0x118] sm:$0x3]
        %v205 = vld [vmem:[%s168 + $0x120] sm:$0xff]
        %v206 = vld [vmem:[%s168 + $0x128] sm:$0xff]
        %v207 = vld [vmem:[%s168 + $0x130] sm:$0x3]
        %v208 = vld [vmem:[%s168 + $0x138] sm:$0xff]
        %v209 = vld [vmem:[%s168 + $0x140] sm:$0xff]
        %v210 = vld [vmem:[%s168 + $0x148] sm:$0x3]
        %v211 = vld [vmem:[%s168 + $0x150] sm:$0xff]
        %v212 = vld [vmem:[%s168 + $0x158] sm:$0xff]
        %v213 = vld [vmem:[%s168 + $0x160] sm:$0x3]
        %v214 = vld [vmem:[%s168 + $0x168] sm:$0xff]
        %v215 = vld [vmem:[%s168 + $0x170] sm:$0xff]
        %v216 = vld [vmem:[%s168 + $0x178] sm:$0x3]
        %v217 = vld [vmem:[%s168 + $0x180] sm:$0xff]
        %v218 = vld [vmem:[%s168 + $0x188] sm:$0xff]
        %v219 = vld [vmem:[%s168 + $0x190] sm:$0x3]
        %v220 = vld [vmem:[%s168 + $0x198] sm:$0xff]
        %v221 = vld [vmem:[%s168 + $0x1a0] sm:$0xff]
        %v222 = vld [vmem:[%s168 + $0x1a8] sm:$0x3]
        %v223 = vmax.f32 %v169, 0.0
        %v224 = vmax.f32 %v170, 0.0
        %v225 = vmax.f32 %v171, 0.0
        %v226 = vmax.f32 %v172, 0.0
        %v227 = vmax.f32 %v173, 0.0
        %v228 = vmax.f32 %v174, 0.0
        %v229 = vmax.f32 %v175, 0.0
        %v230 = vmax.f32 %v176, 0.0
        %v231 = vmax.f32 %v177, 0.0
        %v232 = vmax.f32 %v178, 0.0
        %v233 = vmax.f32 %v179, 0.0
        %v234 = vmax.f32 %v180, 0.0
        %v235 = vmax.f32 %v181, 0.0
        %v236 = vmax.f32 %v182, 0.0
        %v237 = vmax.f32 %v183, 0.0
        %v238 = vmax.f32 %v184, 0.0
        %v239 = vmax.f32 %v185, 0.0
        %v240 = vmax.f32 %v186, 0.0
        %v241 = vmax.f32 %v187, 0.0
        %v242 = vmax.f32 %v188, 0.0
        %v243 = vmax.f32 %v189, 0.0
        %v244 = vmax.f32 %v190, 0.0
        %v245 = vmax.f32 %v191, 0.0
        %v246 = vmax.f32 %v192, 0.0
        %v247 = vmax.f32 %v193, 0.0
        %v248 = vmax.f32 %v194, 0.0
        %v249 = vmax.f32 %v195, 0.0
        %v250 = vmax.f32 %v196, 0.0
        %v251 = vmax.f32 %v197, 0.0
        %v252 = vmax.f32 %v198, 0.0
        %v253 = vmax.f32 %v199, 0.0
        %v254 = vmax.f32 %v200, 0.0
        %v255 = vmax.f32 %v201, 0.0
        %v256 = vmax.f32 %v202, 0.0
        %v257 = vmax.f32 %v203, 0.0
        %v258 = vmax.f32 %v204, 0.0
        %v259 = vmax.f32 %v205, 0.0
        %v260 = vmax.f32 %v206, 0.0
        %v261 = vmax.f32 %v207, 0.0
        %v262 = vmax.f32 %v208, 0.0
        %v263 = vmax.f32 %v209, 0.0
        %v264 = vmax.f32 %v210, 0.0
        %v265 = vmax.f32 %v211, 0.0
        %v266 = vmax.f32 %v212, 0.0
        %v267 = vmax.f32 %v213, 0.0
        %v268 = vmax.f32 %v214, 0.0
        %v269 = vmax.f32 %v215, 0.0
        %v270 = vmax.f32 %v216, 0.0
        %v271 = vmax.f32 %v217, 0.0
        %v272 = vmax.f32 %v218, 0.0
        %v273 = vmax.f32 %v219, 0.0
        %v274 = vmax.f32 %v220, 0.0
        %v275 = vmax.f32 %v221, 0.0
        %v276 = vmax.f32 %v222, 0.0
        %vm325 = vcmask 1046528
        %v326 = vrot.slane %v223, 1
        %v327 = vrot.slane %v224, 1
        %v328 = vsel %vm325, %v326, %v327
        %v329 = vrot.slane %v225, 1
        %v330 = vsel %vm325, %v327, %v329
        %v331 = vrot.slane %v226, 1
        %v332 = vrot.slane %v227, 1
        %v333 = vsel %vm325, %v331, %v332
        %v334 = vrot.slane %v228, 1
        %v335 = vsel %vm325, %v332, %v334
        %v336 = vrot.slane %v229, 1
        %v337 = vrot.slane %v230, 1
        %v338 = vsel %vm325, %v336, %v337
        %v339 = vrot.slane %v231, 1
        %v340 = vsel %vm325, %v337, %v339
        %v341 = vrot.slane %v232, 1
        %v342 = vrot.slane %v233, 1
        %v343 = vsel %vm325, %v341, %v342
        %v344 = vrot.slane %v234, 1
        %v345 = vsel %vm325, %v342, %v344
        %v346 = vrot.slane %v235, 1
        %v347 = vrot.slane %v236, 1
        %v348 = vsel %vm325, %v346, %v347
        %v349 = vrot.slane %v237, 1
        %v350 = vsel %vm325, %v347, %v349
        %v351 = vrot.slane %v238, 1
        %v352 = vrot.slane %v239, 1
        %v353 = vsel %vm325, %v351, %v352
        %v354 = vrot.slane %v240, 1
        %v355 = vsel %vm325, %v352, %v354
        %v356 = vrot.slane %v241, 1
        %v357 = vrot.slane %v242, 1
        %v358 = vsel %vm325, %v356, %v357
        %v359 = vrot.slane %v243, 1
        %v360 = vsel %vm325, %v357, %v359
        %v361 = vrot.slane %v244, 1
        %v362 = vrot.slane %v245, 1
        %v363 = vsel %vm325, %v361, %v362
        %v364 = vrot.slane %v246, 1
        %v365 = vsel %vm325, %v362, %v364
        %v366 = vrot.slane %v247, 1
        %v367 = vrot.slane %v248, 1
        %v368 = vsel %vm325, %v366, %v367
        %v369 = vrot.slane %v249, 1
        %v370 = vsel %vm325, %v367, %v369
        %v371 = vrot.slane %v250, 1
        %v372 = vrot.slane %v251, 1
        %v373 = vsel %vm325, %v371, %v372
        %v374 = vrot.slane %v252, 1
        %v375 = vsel %vm325, %v372, %v374
        %v376 = vrot.slane %v253, 1
        %v377 = vrot.slane %v254, 1
        %v378 = vsel %vm325, %v376, %v377
        %v379 = vrot.slane %v255, 1
        %v380 = vsel %vm325, %v377, %v379
        %v381 = vrot.slane %v256, 1
        %v382 = vrot.slane %v257, 1
        %v383 = vsel %vm325, %v381, %v382
        %v384 = vrot.slane %v258, 1
        %v385 = vsel %vm325, %v382, %v384
        %v386 = vrot.slane %v259, 1
        %v387 = vrot.slane %v260, 1
        %v388 = vsel %vm325, %v386, %v387
        %v389 = vrot.slane %v261, 1
        %v390 = vsel %vm325, %v387, %v389
        %v391 = vrot.slane %v262, 1
        %v392 = vrot.slane %v263, 1
        %v393 = vsel %vm325, %v391, %v392
        %v394 = vrot.slane %v264, 1
        %v395 = vsel %vm325, %v392, %v394
        %v396 = vrot.slane %v265, 1
        %v397 = vrot.slane %v266, 1
        %v398 = vsel %vm325, %v396, %v397
        %v399 = vrot.slane %v267, 1
        %v400 = vsel %vm325, %v397, %v399
        %v401 = vrot.slane %v268, 1
        %v402 = vrot.slane %v269, 1
        %v403 = vsel %vm325, %v401, %v402
        %v404 = vrot.slane %v270, 1
        %v405 = vsel %vm325, %v402, %v404
        %vm406 = vcmask 1045504
        %v407 = vrot.slane %v223, 2
        %v408 = vrot.slane %v224, 2
        %v409 = vsel %vm406, %v407, %v408
        %v410 = vrot.slane %v225, 2
        %v411 = vsel %vm406, %v408, %v410
        %v412 = vrot.slane %v226, 2
        %v413 = vrot.slane %v227, 2
        %v414 = vsel %vm406, %v412, %v413
        %v415 = vrot.slane %v228, 2
        %v416 = vsel %vm406, %v413, %v415
        %v417 = vrot.slane %v229, 2
        %v418 = vrot.slane %v230, 2
        %v419 = vsel %vm406, %v417, %v418
        %v420 = vrot.slane %v231, 2
        %v421 = vsel %vm406, %v418, %v420
        %v422 = vrot.slane %v232, 2
        %v423 = vrot.slane %v233, 2
        %v424 = vsel %vm406, %v422, %v423
        %v425 = vrot.slane %v234, 2
        %v426 = vsel %vm406, %v423, %v425
        %v427 = vrot.slane %v235, 2
        %v428 = vrot.slane %v236, 2
        %v429 = vsel %vm406, %v427, %v428
        %v430 = vrot.slane %v237, 2
        %v431 = vsel %vm406, %v428, %v430
        %v432 = vrot.slane %v238, 2
        %v433 = vrot.slane %v239, 2
        %v434 = vsel %vm406, %v432, %v433
        %v435 = vrot.slane %v240, 2
        %v436 = vsel %vm406, %v433, %v435
        %v437 = vrot.slane %v241, 2
        %v438 = vrot.slane %v242, 2
        %v439 = vsel %vm406, %v437, %v438
        %v440 = vrot.slane %v243, 2
        %v441 = vsel %vm406, %v438, %v440
        %v442 = vrot.slane %v244, 2
        %v443 = vrot.slane %v245, 2
        %v444 = vsel %vm406, %v442, %v443
        %v445 = vrot.slane %v246, 2
        %v446 = vsel %vm406, %v443, %v445
        %v447 = vrot.slane %v247, 2
        %v448 = vrot.slane %v248, 2
        %v449 = vsel %vm406, %v447, %v448
        %v450 = vrot.slane %v249, 2
        %v451 = vsel %vm406, %v448, %v450
        %v452 = vrot.slane %v250, 2
        %v453 = vrot.slane %v251, 2
        %v454 = vsel %vm406, %v452, %v453
        %v455 = vrot.slane %v252, 2
        %v456 = vsel %vm406, %v453, %v455
        %v457 = vrot.slane %v253, 2
        %v458 = vrot.slane %v254, 2
        %v459 = vsel %vm406, %v457, %v458
        %v460 = vrot.slane %v255, 2
        %v461 = vsel %vm406, %v458, %v460
        %v462 = vrot.slane %v256, 2
        %v463 = vrot.slane %v257, 2
        %v464 = vsel %vm406, %v462, %v463
        %v465 = vrot.slane %v258, 2
        %v466 = vsel %vm406, %v463, %v465
        %v467 = vrot.slane %v259, 2
        %v468 = vrot.slane %v260, 2
        %v469 = vsel %vm406, %v467, %v468
        %v470 = vrot.slane %v261, 2
        %v471 = vsel %vm406, %v468, %v470
        %v472 = vrot.slane %v262, 2
        %v473 = vrot.slane %v263, 2
        %v474 = vsel %vm406, %v472, %v473
        %v475 = vrot.slane %v264, 2
        %v476 = vsel %vm406, %v473, %v475
        %v477 = vrot.slane %v265, 2
        %v478 = vrot.slane %v266, 2
        %v479 = vsel %vm406, %v477, %v478
        %v480 = vrot.slane %v267, 2
        %v481 = vsel %vm406, %v478, %v480
        %v482 = vrot.slane %v268, 2
        %v483 = vrot.slane %v269, 2
        %v484 = vsel %vm406, %v482, %v483
        %v485 = vrot.slane %v270, 2
        %v486 = vsel %vm406, %v483, %v485
        %v490 = vrot.slane %v271, 1
        %v491 = vrot.slane %v272, 1
        %v492 = vsel %vm325, %v490, %v491
        %v493 = vrot.slane %v273, 1
        %v494 = vsel %vm325, %v491, %v493
        %v495 = vrot.slane %v271, 2
        %v496 = vrot.slane %v272, 2
        %v497 = vsel %vm406, %v495, %v496
        %v498 = vrot.slane %v273, 2
        %v499 = vsel %vm406, %v496, %v498
        %v503 = vrot.slane %v274, 1
        %v504 = vrot.slane %v275, 1
        %v505 = vsel %vm325, %v503, %v504
        %v506 = vrot.slane %v276, 1
        %v507 = vsel %vm325, %v504, %v506
        %v508 = vrot.slane %v274, 2
        %v509 = vrot.slane %v275, 2
        %v510 = vsel %vm406, %v508, %v509
        %v511 = vrot.slane %v276, 2
        %v512 = vsel %vm406, %v509, %v511
        %513 = vrot.lane.b32.xlu0 %v328, 4
        %v514 = vpop.permute.xlu0 %513
        %515 = vrot.lane.b32.xlu0 %v330, 4
        %v516 = vpop.permute.xlu0 %515
        %517 = vrot.lane.b32.xlu0 %v333, 4
        %v518 = vpop.permute.xlu0 %517
        %519 = vrot.lane.b32.xlu0 %v335, 4
        %v520 = vpop.permute.xlu0 %519
        %521 = vrot.lane.b32.xlu0 %v338, 4
        %v522 = vpop.permute.xlu0 %521
        %523 = vrot.lane.b32.xlu0 %v340, 4
        %v524 = vpop.permute.xlu0 %523
        %525 = vrot.lane.b32.xlu0 %v343, 4
        %v526 = vpop.permute.xlu0 %525
        %527 = vrot.lane.b32.xlu0 %v345, 4
        %v528 = vpop.permute.xlu0 %527
        %529 = vrot.lane.b32.xlu0 %v348, 4
        %v530 = vpop.permute.xlu0 %529
        %531 = vrot.lane.b32.xlu0 %v350, 4
        %v532 = vpop.permute.xlu0 %531
        %533 = vrot.lane.b32.xlu0 %v353, 4
        %v534 = vpop.permute.xlu0 %533
        %535 = vrot.lane.b32.xlu0 %v355, 4
        %v536 = vpop.permute.xlu0 %535
        %537 = vrot.lane.b32.xlu0 %v358, 4
        %v538 = vpop.permute.xlu0 %537
        %539 = vrot.lane.b32.xlu0 %v360, 4
        %v540 = vpop.permute.xlu0 %539
        %541 = vrot.lane.b32.xlu0 %v363, 4
        %v542 = vpop.permute.xlu0 %541
        %543 = vrot.lane.b32.xlu0 %v365, 4
        %v544 = vpop.permute.xlu0 %543
        %545 = vrot.lane.b32.xlu0 %v368, 4
        %v546 = vpop.permute.xlu0 %545
        %547 = vrot.lane.b32.xlu0 %v370, 4
        %v548 = vpop.permute.xlu0 %547
        %549 = vrot.lane.b32.xlu0 %v373, 4
        %v550 = vpop.permute.xlu0 %549
        %551 = vrot.lane.b32.xlu0 %v375, 4
        %v552 = vpop.permute.xlu0 %551
        %553 = vrot.lane.b32.xlu0 %v378, 4
        %v554 = vpop.permute.xlu0 %553
        %555 = vrot.lane.b32.xlu0 %v380, 4
        %v556 = vpop.permute.xlu0 %555
        %557 = vrot.lane.b32.xlu0 %v383, 4
        %v558 = vpop.permute.xlu0 %557
        %559 = vrot.lane.b32.xlu0 %v385, 4
        %v560 = vpop.permute.xlu0 %559
        %561 = vrot.lane.b32.xlu0 %v388, 4
        %v562 = vpop.permute.xlu0 %561
        %563 = vrot.lane.b32.xlu0 %v390, 4
        %v564 = vpop.permute.xlu0 %563
        %565 = vrot.lane.b32.xlu0 %v393, 4
        %v566 = vpop.permute.xlu0 %565
        %567 = vrot.lane.b32.xlu0 %v395, 4
        %v568 = vpop.permute.xlu0 %567
        %569 = vrot.lane.b32.xlu0 %v398, 4
        %v570 = vpop.permute.xlu0 %569
        %571 = vrot.lane.b32.xlu0 %v400, 4
        %v572 = vpop.permute.xlu0 %571
        %573 = vrot.lane.b32.xlu0 %v403, 4
        %v574 = vpop.permute.xlu0 %573
        %575 = vrot.lane.b32.xlu0 %v405, 4
        %v576 = vpop.permute.xlu0 %575
        %609 = vrot.lane.b32.xlu0 %v409, 8
        %v610 = vpop.permute.xlu0 %609
        %611 = vrot.lane.b32.xlu0 %v411, 8
        %v612 = vpop.permute.xlu0 %611
        %613 = vrot.lane.b32.xlu0 %v414, 8
        %v614 = vpop.permute.xlu0 %613
        %615 = vrot.lane.b32.xlu0 %v416, 8
        %v616 = vpop.permute.xlu0 %615
        %617 = vrot.lane.b32.xlu0 %v419, 8
        %v618 = vpop.permute.xlu0 %617
        %619 = vrot.lane.b32.xlu0 %v421, 8
        %v620 = vpop.permute.xlu0 %619
        %621 = vrot.lane.b32.xlu0 %v424, 8
        %v622 = vpop.permute.xlu0 %621
        %623 = vrot.lane.b32.xlu0 %v426, 8
        %v624 = vpop.permute.xlu0 %623
        %625 = vrot.lane.b32.xlu0 %v429, 8
        %v626 = vpop.permute.xlu0 %625
        %627 = vrot.lane.b32.xlu0 %v431, 8
        %v628 = vpop.permute.xlu0 %627
        %629 = vrot.lane.b32.xlu0 %v434, 8
        %v630 = vpop.permute.xlu0 %629
        %631 = vrot.lane.b32.xlu0 %v436, 8
        %v632 = vpop.permute.xlu0 %631
        %633 = vrot.lane.b32.xlu0 %v439, 8
        %v634 = vpop.permute.xlu0 %633
        %635 = vrot.lane.b32.xlu0 %v441, 8
        %v636 = vpop.permute.xlu0 %635
        %637 = vrot.lane.b32.xlu0 %v444, 8
        %v638 = vpop.permute.xlu0 %637
        %639 = vrot.lane.b32.xlu0 %v446, 8
        %v640 = vpop.permute.xlu0 %639
        %641 = vrot.lane.b32.xlu0 %v449, 8
        %v642 = vpop.permute.xlu0 %641
        %643 = vrot.lane.b32.xlu0 %v451, 8
        %v644 = vpop.permute.xlu0 %643
        %645 = vrot.lane.b32.xlu0 %v454, 8
        %v646 = vpop.permute.xlu0 %645
        %647 = vrot.lane.b32.xlu0 %v456, 8
        %v648 = vpop.permute.xlu0 %647
        %649 = vrot.lane.b32.xlu0 %v459, 8
        %v650 = vpop.permute.xlu0 %649
        %651 = vrot.lane.b32.xlu0 %v461, 8
        %v652 = vpop.permute.xlu0 %651
        %653 = vrot.lane.b32.xlu0 %v464, 8
        %v654 = vpop.permute.xlu0 %653
        %655 = vrot.lane.b32.xlu0 %v466, 8
        %v656 = vpop.permute.xlu0 %655
        %657 = vrot.lane.b32.xlu0 %v469, 8
        %v658 = vpop.permute.xlu0 %657
        %659 = vrot.lane.b32.xlu0 %v471, 8
        %v660 = vpop.permute.xlu0 %659
        %661 = vrot.lane.b32.xlu0 %v474, 8
        %v662 = vpop.permute.xlu0 %661
        %663 = vrot.lane.b32.xlu0 %v476, 8
        %v664 = vpop.permute.xlu0 %663
        %665 = vrot.lane.b32.xlu0 %v479, 8
        %v666 = vpop.permute.xlu0 %665
        %667 = vrot.lane.b32.xlu0 %v481, 8
        %v668 = vpop.permute.xlu0 %667
        %669 = vrot.lane.b32.xlu0 %v484, 8
        %v670 = vpop.permute.xlu0 %669
        %671 = vrot.lane.b32.xlu0 %v486, 8
        %v672 = vpop.permute.xlu0 %671
        %705 = vrot.lane.b32.xlu0 %v226, 12
        %v706 = vpop.permute.xlu0 %705
        %707 = vrot.lane.b32.xlu0 %v227, 12
        %v708 = vpop.permute.xlu0 %707
        %709 = vrot.lane.b32.xlu0 %v229, 12
        %v710 = vpop.permute.xlu0 %709
        %711 = vrot.lane.b32.xlu0 %v230, 12
        %v712 = vpop.permute.xlu0 %711
        %713 = vrot.lane.b32.xlu0 %v232, 12
        %v714 = vpop.permute.xlu0 %713
        %715 = vrot.lane.b32.xlu0 %v233, 12
        %v716 = vpop.permute.xlu0 %715
        %717 = vrot.lane.b32.xlu0 %v235, 12
        %v718 = vpop.permute.xlu0 %717
        %719 = vrot.lane.b32.xlu0 %v236, 12
        %v720 = vpop.permute.xlu0 %719
        %721 = vrot.lane.b32.xlu0 %v238, 12
        %v722 = vpop.permute.xlu0 %721
        %723 = vrot.lane.b32.xlu0 %v239, 12
        %v724 = vpop.permute.xlu0 %723
        %725 = vrot.lane.b32.xlu0 %v241, 12
        %v726 = vpop.permute.xlu0 %725
        %727 = vrot.lane.b32.xlu0 %v242, 12
        %v728 = vpop.permute.xlu0 %727
        %729 = vrot.lane.b32.xlu0 %v244, 12
        %v730 = vpop.permute.xlu0 %729
        %731 = vrot.lane.b32.xlu0 %v245, 12
        %v732 = vpop.permute.xlu0 %731
        %733 = vrot.lane.b32.xlu0 %v247, 12
        %v734 = vpop.permute.xlu0 %733
        %735 = vrot.lane.b32.xlu0 %v248, 12
        %v736 = vpop.permute.xlu0 %735
        %737 = vrot.lane.b32.xlu0 %v250, 12
        %v738 = vpop.permute.xlu0 %737
        %739 = vrot.lane.b32.xlu0 %v251, 12
        %v740 = vpop.permute.xlu0 %739
        %741 = vrot.lane.b32.xlu0 %v253, 12
        %v742 = vpop.permute.xlu0 %741
        %743 = vrot.lane.b32.xlu0 %v254, 12
        %v744 = vpop.permute.xlu0 %743
        %745 = vrot.lane.b32.xlu0 %v256, 12
        %v746 = vpop.permute.xlu0 %745
        %747 = vrot.lane.b32.xlu0 %v257, 12
        %v748 = vpop.permute.xlu0 %747
        %749 = vrot.lane.b32.xlu0 %v259, 12
        %v750 = vpop.permute.xlu0 %749
        %751 = vrot.lane.b32.xlu0 %v260, 12
        %v752 = vpop.permute.xlu0 %751
        %753 = vrot.lane.b32.xlu0 %v262, 12
        %v754 = vpop.permute.xlu0 %753
        %755 = vrot.lane.b32.xlu0 %v263, 12
        %v756 = vpop.permute.xlu0 %755
        %757 = vrot.lane.b32.xlu0 %v265, 12
        %v758 = vpop.permute.xlu0 %757
        %759 = vrot.lane.b32.xlu0 %v266, 12
        %v760 = vpop.permute.xlu0 %759
        %761 = vrot.lane.b32.xlu0 %v268, 12
        %v762 = vpop.permute.xlu0 %761
        %763 = vrot.lane.b32.xlu0 %v269, 12
        %v764 = vpop.permute.xlu0 %763
        %765 = vrot.lane.b32.xlu0 %v271, 12
        %v766 = vpop.permute.xlu0 %765
        %767 = vrot.lane.b32.xlu0 %v272, 12
        %v768 = vpop.permute.xlu0 %767
        %801 = vrot.lane.b32.xlu0 %v333, 16
        %v802 = vpop.permute.xlu0 %801
        %803 = vrot.lane.b32.xlu0 %v335, 16
        %v804 = vpop.permute.xlu0 %803
        %805 = vrot.lane.b32.xlu0 %v338, 16
        %v806 = vpop.permute.xlu0 %805
        %807 = vrot.lane.b32.xlu0 %v340, 16
        %v808 = vpop.permute.xlu0 %807
        %809 = vrot.lane.b32.xlu0 %v343, 16
        %v810 = vpop.permute.xlu0 %809
        %811 = vrot.lane.b32.xlu0 %v345, 16
        %v812 = vpop.permute.xlu0 %811
        %813 = vrot.lane.b32.xlu0 %v348, 16
        %v814 = vpop.permute.xlu0 %813
        %815 = vrot.lane.b32.xlu0 %v350, 16
        %v816 = vpop.permute.xlu0 %815
        %817 = vrot.lane.b32.xlu0 %v353, 16
        %v818 = vpop.permute.xlu0 %817
        %819 = vrot.lane.b32.xlu0 %v355, 16
        %v820 = vpop.permute.xlu0 %819
        %821 = vrot.lane.b32.xlu0 %v358, 16
        %v822 = vpop.permute.xlu0 %821
        %823 = vrot.lane.b32.xlu0 %v360, 16
        %v824 = vpop.permute.xlu0 %823
        %825 = vrot.lane.b32.xlu0 %v363, 16
        %v826 = vpop.permute.xlu0 %825
        %827 = vrot.lane.b32.xlu0 %v365, 16
        %v828 = vpop.permute.xlu0 %827
        %829 = vrot.lane.b32.xlu0 %v368, 16
        %v830 = vpop.permute.xlu0 %829
        %831 = vrot.lane.b32.xlu0 %v370, 16
        %v832 = vpop.permute.xlu0 %831
        %833 = vrot.lane.b32.xlu0 %v373, 16
        %v834 = vpop.permute.xlu0 %833
        %835 = vrot.lane.b32.xlu0 %v375, 16
        %v836 = vpop.permute.xlu0 %835
        %837 = vrot.lane.b32.xlu0 %v378, 16
        %v838 = vpop.permute.xlu0 %837
        %839 = vrot.lane.b32.xlu0 %v380, 16
        %v840 = vpop.permute.xlu0 %839
        %841 = vrot.lane.b32.xlu0 %v383, 16
        %v842 = vpop.permute.xlu0 %841
        %843 = vrot.lane.b32.xlu0 %v385, 16
        %v844 = vpop.permute.xlu0 %843
        %845 = vrot.lane.b32.xlu0 %v388, 16
        %v846 = vpop.permute.xlu0 %845
        %847 = vrot.lane.b32.xlu0 %v390, 16
        %v848 = vpop.permute.xlu0 %847
        %849 = vrot.lane.b32.xlu0 %v393, 16
        %v850 = vpop.permute.xlu0 %849
        %851 = vrot.lane.b32.xlu0 %v395, 16
        %v852 = vpop.permute.xlu0 %851
        %853 = vrot.lane.b32.xlu0 %v398, 16
        %v854 = vpop.permute.xlu0 %853
        %855 = vrot.lane.b32.xlu0 %v400, 16
        %v856 = vpop.permute.xlu0 %855
        %857 = vrot.lane.b32.xlu0 %v403, 16
        %v858 = vpop.permute.xlu0 %857
        %859 = vrot.lane.b32.xlu0 %v405, 16
        %v860 = vpop.permute.xlu0 %859
        %861 = vrot.lane.b32.xlu0 %v492, 16
        %v862 = vpop.permute.xlu0 %861
        %863 = vrot.lane.b32.xlu0 %v494, 16
        %v864 = vpop.permute.xlu0 %863
        %897 = vrot.lane.b32.xlu0 %v414, 20
        %v898 = vpop.permute.xlu0 %897
        %899 = vrot.lane.b32.xlu0 %v416, 20
        %v900 = vpop.permute.xlu0 %899
        %901 = vrot.lane.b32.xlu0 %v419, 20
        %v902 = vpop.permute.xlu0 %901
        %903 = vrot.lane.b32.xlu0 %v421, 20
        %v904 = vpop.permute.xlu0 %903
        %905 = vrot.lane.b32.xlu0 %v424, 20
        %v906 = vpop.permute.xlu0 %905
        %907 = vrot.lane.b32.xlu0 %v426, 20
        %v908 = vpop.permute.xlu0 %907
        %909 = vrot.lane.b32.xlu0 %v429, 20
        %v910 = vpop.permute.xlu0 %909
        %911 = vrot.lane.b32.xlu0 %v431, 20
        %v912 = vpop.permute.xlu0 %911
        %913 = vrot.lane.b32.xlu0 %v434, 20
        %v914 = vpop.permute.xlu0 %913
        %915 = vrot.lane.b32.xlu0 %v436, 20
        %v916 = vpop.permute.xlu0 %915
        %917 = vrot.lane.b32.xlu0 %v439, 20
        %v918 = vpop.permute.xlu0 %917
        %919 = vrot.lane.b32.xlu0 %v441, 20
        %v920 = vpop.permute.xlu0 %919
        %921 = vrot.lane.b32.xlu0 %v444, 20
        %v922 = vpop.permute.xlu0 %921
        %923 = vrot.lane.b32.xlu0 %v446, 20
        %v924 = vpop.permute.xlu0 %923
        %925 = vrot.lane.b32.xlu0 %v449, 20
        %v926 = vpop.permute.xlu0 %925
        %927 = vrot.lane.b32.xlu0 %v451, 20
        %v928 = vpop.permute.xlu0 %927
        %929 = vrot.lane.b32.xlu0 %v454, 20
        %v930 = vpop.permute.xlu0 %929
        %931 = vrot.lane.b32.xlu0 %v456, 20
        %v932 = vpop.permute.xlu0 %931
        %933 = vrot.lane.b32.xlu0 %v459, 20
        %v934 = vpop.permute.xlu0 %933
        %935 = vrot.lane.b32.xlu0 %v461, 20
        %v936 = vpop.permute.xlu0 %935
        %937 = vrot.lane.b32.xlu0 %v464, 20
        %v938 = vpop.permute.xlu0 %937
        %939 = vrot.lane.b32.xlu0 %v466, 20
        %v940 = vpop.permute.xlu0 %939
        %941 = vrot.lane.b32.xlu0 %v469, 20
        %v942 = vpop.permute.xlu0 %941
        %943 = vrot.lane.b32.xlu0 %v471, 20
        %v944 = vpop.permute.xlu0 %943
        %945 = vrot.lane.b32.xlu0 %v474, 20
        %v946 = vpop.permute.xlu0 %945
        %947 = vrot.lane.b32.xlu0 %v476, 20
        %v948 = vpop.permute.xlu0 %947
        %949 = vrot.lane.b32.xlu0 %v479, 20
        %v950 = vpop.permute.xlu0 %949
        %951 = vrot.lane.b32.xlu0 %v481, 20
        %v952 = vpop.permute.xlu0 %951
        %953 = vrot.lane.b32.xlu0 %v484, 20
        %v954 = vpop.permute.xlu0 %953
        %955 = vrot.lane.b32.xlu0 %v486, 20
        %v956 = vpop.permute.xlu0 %955
        %957 = vrot.lane.b32.xlu0 %v497, 20
        %v958 = vpop.permute.xlu0 %957
        %959 = vrot.lane.b32.xlu0 %v499, 20
        %v960 = vpop.permute.xlu0 %959
        %993 = vrot.lane.b32.xlu0 %v229, 24
        %v994 = vpop.permute.xlu0 %993
        %995 = vrot.lane.b32.xlu0 %v230, 24
        %v996 = vpop.permute.xlu0 %995
        %997 = vrot.lane.b32.xlu0 %v232, 24
        %v998 = vpop.permute.xlu0 %997
        %999 = vrot.lane.b32.xlu0 %v233, 24
        %v1000 = vpop.permute.xlu0 %999
        %1001 = vrot.lane.b32.xlu0 %v235, 24
        %v1002 = vpop.permute.xlu0 %1001
        %1003 = vrot.lane.b32.xlu0 %v236, 24
        %v1004 = vpop.permute.xlu0 %1003
        %1005 = vrot.lane.b32.xlu0 %v238, 24
        %v1006 = vpop.permute.xlu0 %1005
        %1007 = vrot.lane.b32.xlu0 %v239, 24
        %v1008 = vpop.permute.xlu0 %1007
        %1009 = vrot.lane.b32.xlu0 %v241, 24
        %v1010 = vpop.permute.xlu0 %1009
        %1011 = vrot.lane.b32.xlu0 %v242, 24
        %v1012 = vpop.permute.xlu0 %1011
        %1013 = vrot.lane.b32.xlu0 %v244, 24
        %v1014 = vpop.permute.xlu0 %1013
        %1015 = vrot.lane.b32.xlu0 %v245, 24
        %v1016 = vpop.permute.xlu0 %1015
        %1017 = vrot.lane.b32.xlu0 %v247, 24
        %v1018 = vpop.permute.xlu0 %1017
        %1019 = vrot.lane.b32.xlu0 %v248, 24
        %v1020 = vpop.permute.xlu0 %1019
        %1021 = vrot.lane.b32.xlu0 %v250, 24
        %v1022 = vpop.permute.xlu0 %1021
        %1023 = vrot.lane.b32.xlu0 %v251, 24
        %v1024 = vpop.permute.xlu0 %1023
        %1025 = vrot.lane.b32.xlu0 %v253, 24
        %v1026 = vpop.permute.xlu0 %1025
        %1027 = vrot.lane.b32.xlu0 %v254, 24
        %v1028 = vpop.permute.xlu0 %1027
        %1029 = vrot.lane.b32.xlu0 %v256, 24
        %v1030 = vpop.permute.xlu0 %1029
        %1031 = vrot.lane.b32.xlu0 %v257, 24
        %v1032 = vpop.permute.xlu0 %1031
        %1033 = vrot.lane.b32.xlu0 %v259, 24
        %v1034 = vpop.permute.xlu0 %1033
        %1035 = vrot.lane.b32.xlu0 %v260, 24
        %v1036 = vpop.permute.xlu0 %1035
        %1037 = vrot.lane.b32.xlu0 %v262, 24
        %v1038 = vpop.permute.xlu0 %1037
        %1039 = vrot.lane.b32.xlu0 %v263, 24
        %v1040 = vpop.permute.xlu0 %1039
        %1041 = vrot.lane.b32.xlu0 %v265, 24
        %v1042 = vpop.permute.xlu0 %1041
        %1043 = vrot.lane.b32.xlu0 %v266, 24
        %v1044 = vpop.permute.xlu0 %1043
        %1045 = vrot.lane.b32.xlu0 %v268, 24
        %v1046 = vpop.permute.xlu0 %1045
        %1047 = vrot.lane.b32.xlu0 %v269, 24
        %v1048 = vpop.permute.xlu0 %1047
        %1049 = vrot.lane.b32.xlu0 %v271, 24
        %v1050 = vpop.permute.xlu0 %1049
        %1051 = vrot.lane.b32.xlu0 %v272, 24
        %v1052 = vpop.permute.xlu0 %1051
        %1053 = vrot.lane.b32.xlu0 %v274, 24
        %v1054 = vpop.permute.xlu0 %1053
        %1055 = vrot.lane.b32.xlu0 %v275, 24
        %v1056 = vpop.permute.xlu0 %1055
        %1089 = vrot.lane.b32.xlu0 %v338, 28
        %v1090 = vpop.permute.xlu0 %1089
        %1091 = vrot.lane.b32.xlu0 %v340, 28
        %v1092 = vpop.permute.xlu0 %1091
        %1093 = vrot.lane.b32.xlu0 %v343, 28
        %v1094 = vpop.permute.xlu0 %1093
        %1095 = vrot.lane.b32.xlu0 %v345, 28
        %v1096 = vpop.permute.xlu0 %1095
        %1097 = vrot.lane.b32.xlu0 %v348, 28
        %v1098 = vpop.permute.xlu0 %1097
        %1099 = vrot.lane.b32.xlu0 %v350, 28
        %v1100 = vpop.permute.xlu0 %1099
        %1101 = vrot.lane.b32.xlu0 %v353, 28
        %v1102 = vpop.permute.xlu0 %1101
        %1103 = vrot.lane.b32.xlu0 %v355, 28
        %v1104 = vpop.permute.xlu0 %1103
        %1105 = vrot.lane.b32.xlu0 %v358, 28
        %v1106 = vpop.permute.xlu0 %1105
        %1107 = vrot.lane.b32.xlu0 %v360, 28
        %v1108 = vpop.permute.xlu0 %1107
        %1109 = vrot.lane.b32.xlu0 %v363, 28
        %v1110 = vpop.permute.xlu0 %1109
        %1111 = vrot.lane.b32.xlu0 %v365, 28
        %v1112 = vpop.permute.xlu0 %1111
        %1113 = vrot.lane.b32.xlu0 %v368, 28
        %v1114 = vpop.permute.xlu0 %1113
        %1115 = vrot.lane.b32.xlu0 %v370, 28
        %v1116 = vpop.permute.xlu0 %1115
        %1117 = vrot.lane.b32.xlu0 %v373, 28
        %v1118 = vpop.permute.xlu0 %1117
        %1119 = vrot.lane.b32.xlu0 %v375, 28
        %v1120 = vpop.permute.xlu0 %1119
        %1121 = vrot.lane.b32.xlu0 %v378, 28
        %v1122 = vpop.permute.xlu0 %1121
        %1123 = vrot.lane.b32.xlu0 %v380, 28
        %v1124 = vpop.permute.xlu0 %1123
        %1125 = vrot.lane.b32.xlu0 %v383, 28
        %v1126 = vpop.permute.xlu0 %1125
        %1127 = vrot.lane.b32.xlu0 %v385, 28
        %v1128 = vpop.permute.xlu0 %1127
        %1129 = vrot.lane.b32.xlu0 %v388, 28
        %v1130 = vpop.permute.xlu0 %1129
        %1131 = vrot.lane.b32.xlu0 %v390, 28
        %v1132 = vpop.permute.xlu0 %1131
        %1133 = vrot.lane.b32.xlu0 %v393, 28
        %v1134 = vpop.permute.xlu0 %1133
        %1135 = vrot.lane.b32.xlu0 %v395, 28
        %v1136 = vpop.permute.xlu0 %1135
        %1137 = vrot.lane.b32.xlu0 %v398, 28
        %v1138 = vpop.permute.xlu0 %1137
        %1139 = vrot.lane.b32.xlu0 %v400, 28
        %v1140 = vpop.permute.xlu0 %1139
        %1141 = vrot.lane.b32.xlu0 %v403, 28
        %v1142 = vpop.permute.xlu0 %1141
        %1143 = vrot.lane.b32.xlu0 %v405, 28
        %v1144 = vpop.permute.xlu0 %1143
        %1145 = vrot.lane.b32.xlu0 %v492, 28
        %v1146 = vpop.permute.xlu0 %1145
        %1147 = vrot.lane.b32.xlu0 %v494, 28
        %v1148 = vpop.permute.xlu0 %1147
        %1149 = vrot.lane.b32.xlu0 %v505, 28
        %v1150 = vpop.permute.xlu0 %1149
        %1151 = vrot.lane.b32.xlu0 %v507, 28
        %v1152 = vpop.permute.xlu0 %1151
        %1185 = vrot.lane.b32.xlu0 %v419, 32
        %v1186 = vpop.permute.xlu0 %1185
        %1187 = vrot.lane.b32.xlu0 %v421, 32
        %v1188 = vpop.permute.xlu0 %1187
        %1189 = vrot.lane.b32.xlu0 %v424, 32
        %v1190 = vpop.permute.xlu0 %1189
        %1191 = vrot.lane.b32.xlu0 %v426, 32
        %v1192 = vpop.permute.xlu0 %1191
        %1193 = vrot.lane.b32.xlu0 %v429, 32
        %v1194 = vpop.permute.xlu0 %1193
        %1195 = vrot.lane.b32.xlu0 %v431, 32
        %v1196 = vpop.permute.xlu0 %1195
        %1197 = vrot.lane.b32.xlu0 %v434, 32
        %v1198 = vpop.permute.xlu0 %1197
        %1199 = vrot.lane.b32.xlu0 %v436, 32
        %v1200 = vpop.permute.xlu0 %1199
        %1201 = vrot.lane.b32.xlu0 %v439, 32
        %v1202 = vpop.permute.xlu0 %1201
        %1203 = vrot.lane.b32.xlu0 %v441, 32
        %v1204 = vpop.permute.xlu0 %1203
        %1205 = vrot.lane.b32.xlu0 %v444, 32
        %v1206 = vpop.permute.xlu0 %1205
        %1207 = vrot.lane.b32.xlu0 %v446, 32
        %v1208 = vpop.permute.xlu0 %1207
        %1209 = vrot.lane.b32.xlu0 %v449, 32
        %v1210 = vpop.permute.xlu0 %1209
        %1211 = vrot.lane.b32.xlu0 %v451, 32
        %v1212 = vpop.permute.xlu0 %1211
        %1213 = vrot.lane.b32.xlu0 %v454, 32
        %v1214 = vpop.permute.xlu0 %1213
        %1215 = vrot.lane.b32.xlu0 %v456, 32
        %v1216 = vpop.permute.xlu0 %1215
        %1217 = vrot.lane.b32.xlu0 %v459, 32
        %v1218 = vpop.permute.xlu0 %1217
        %1219 = vrot.lane.b32.xlu0 %v461, 32
        %v1220 = vpop.permute.xlu0 %1219
        %1221 = vrot.lane.b32.xlu0 %v464, 32
        %v1222 = vpop.permute.xlu0 %1221
        %1223 = vrot.lane.b32.xlu0 %v466, 32
        %v1224 = vpop.permute.xlu0 %1223
        %1225 = vrot.lane.b32.xlu0 %v469, 32
        %v1226 = vpop.permute.xlu0 %1225
        %1227 = vrot.lane.b32.xlu0 %v471, 32
        %v1228 = vpop.permute.xlu0 %1227
        %1229 = vrot.lane.b32.xlu0 %v474, 32
        %v1230 = vpop.permute.xlu0 %1229
        %1231 = vrot.lane.b32.xlu0 %v476, 32
        %v1232 = vpop.permute.xlu0 %1231
        %1233 = vrot.lane.b32.xlu0 %v479, 32
        %v1234 = vpop.permute.xlu0 %1233
        %1235 = vrot.lane.b32.xlu0 %v481, 32
        %v1236 = vpop.permute.xlu0 %1235
        %1237 = vrot.lane.b32.xlu0 %v484, 32
        %v1238 = vpop.permute.xlu0 %1237
        %1239 = vrot.lane.b32.xlu0 %v486, 32
        %v1240 = vpop.permute.xlu0 %1239
        %1241 = vrot.lane.b32.xlu0 %v497, 32
        %v1242 = vpop.permute.xlu0 %1241
        %1243 = vrot.lane.b32.xlu0 %v499, 32
        %v1244 = vpop.permute.xlu0 %1243
        %1245 = vrot.lane.b32.xlu0 %v510, 32
        %v1246 = vpop.permute.xlu0 %1245
        %1247 = vrot.lane.b32.xlu0 %v512, 32
        %v1248 = vpop.permute.xlu0 %1247
        %vm1281 = vcmask 31744
        %v1282 = vsel %vm1281, %v223, %v514
        %v1283 = vsel %vm1281, %v224, %v516
        %v1284 = vsel %vm1281, %v226, %v518
        %v1285 = vsel %vm1281, %v227, %v520
        %v1286 = vsel %vm1281, %v229, %v522
        %v1287 = vsel %vm1281, %v230, %v524
        %v1288 = vsel %vm1281, %v232, %v526
        %v1289 = vsel %vm1281, %v233, %v528
        %v1290 = vsel %vm1281, %v235, %v530
        %v1291 = vsel %vm1281, %v236, %v532
        %v1292 = vsel %vm1281, %v238, %v534
        %v1293 = vsel %vm1281, %v239, %v536
        %v1294 = vsel %vm1281, %v241, %v538
        %v1295 = vsel %vm1281, %v242, %v540
        %v1296 = vsel %vm1281, %v244, %v542
        %v1297 = vsel %vm1281, %v245, %v544
        %v1298 = vsel %vm1281, %v247, %v546
        %v1299 = vsel %vm1281, %v248, %v548
        %v1300 = vsel %vm1281, %v250, %v550
        %v1301 = vsel %vm1281, %v251, %v552
        %v1302 = vsel %vm1281, %v253, %v554
        %v1303 = vsel %vm1281, %v254, %v556
        %v1304 = vsel %vm1281, %v256, %v558
        %v1305 = vsel %vm1281, %v257, %v560
        %v1306 = vsel %vm1281, %v259, %v562
        %v1307 = vsel %vm1281, %v260, %v564
        %v1308 = vsel %vm1281, %v262, %v566
        %v1309 = vsel %vm1281, %v263, %v568
        %v1310 = vsel %vm1281, %v265, %v570
        %v1311 = vsel %vm1281, %v266, %v572
        %v1312 = vsel %vm1281, %v268, %v574
        %v1313 = vsel %vm1281, %v269, %v576
        %vm1314 = vcmask 64512
        %v1315 = vsel %vm1314, %v1282, %v610
        %v1316 = vsel %vm1314, %v1283, %v612
        %v1317 = vsel %vm1314, %v1284, %v614
        %v1318 = vsel %vm1314, %v1285, %v616
        %v1319 = vsel %vm1314, %v1286, %v618
        %v1320 = vsel %vm1314, %v1287, %v620
        %v1321 = vsel %vm1314, %v1288, %v622
        %v1322 = vsel %vm1314, %v1289, %v624
        %v1323 = vsel %vm1314, %v1290, %v626
        %v1324 = vsel %vm1314, %v1291, %v628
        %v1325 = vsel %vm1314, %v1292, %v630
        %v1326 = vsel %vm1314, %v1293, %v632
        %v1327 = vsel %vm1314, %v1294, %v634
        %v1328 = vsel %vm1314, %v1295, %v636
        %v1329 = vsel %vm1314, %v1296, %v638
        %v1330 = vsel %vm1314, %v1297, %v640
        %v1331 = vsel %vm1314, %v1298, %v642
        %v1332 = vsel %vm1314, %v1299, %v644
        %v1333 = vsel %vm1314, %v1300, %v646
        %v1334 = vsel %vm1314, %v1301, %v648
        %v1335 = vsel %vm1314, %v1302, %v650
        %v1336 = vsel %vm1314, %v1303, %v652
        %v1337 = vsel %vm1314, %v1304, %v654
        %v1338 = vsel %vm1314, %v1305, %v656
        %v1339 = vsel %vm1314, %v1306, %v658
        %v1340 = vsel %vm1314, %v1307, %v660
        %v1341 = vsel %vm1314, %v1308, %v662
        %v1342 = vsel %vm1314, %v1309, %v664
        %v1343 = vsel %vm1314, %v1310, %v666
        %v1344 = vsel %vm1314, %v1311, %v668
        %v1345 = vsel %vm1314, %v1312, %v670
        %v1346 = vsel %vm1314, %v1313, %v672
        %vm1347 = vcmask 97280
        %v1348 = vsel %vm1347, %v1315, %v706
        %v1349 = vsel %vm1347, %v1316, %v708
        %v1350 = vsel %vm1347, %v1317, %v710
        %v1351 = vsel %vm1347, %v1318, %v712
        %v1352 = vsel %vm1347, %v1319, %v714
        %v1353 = vsel %vm1347, %v1320, %v716
        %v1354 = vsel %vm1347, %v1321, %v718
        %v1355 = vsel %vm1347, %v1322, %v720
        %v1356 = vsel %vm1347, %v1323, %v722
        %v1357 = vsel %vm1347, %v1324, %v724
        %v1358 = vsel %vm1347, %v1325, %v726
        %v1359 = vsel %vm1347, %v1326, %v728
        %v1360 = vsel %vm1347, %v1327, %v730
        %v1361 = vsel %vm1347, %v1328, %v732
        %v1362 = vsel %vm1347, %v1329, %v734
        %v1363 = vsel %vm1347, %v1330, %v736
        %v1364 = vsel %vm1347, %v1331, %v738
        %v1365 = vsel %vm1347, %v1332, %v740
        %v1366 = vsel %vm1347, %v1333, %v742
        %v1367 = vsel %vm1347, %v1334, %v744
        %v1368 = vsel %vm1347, %v1335, %v746
        %v1369 = vsel %vm1347, %v1336, %v748
        %v1370 = vsel %vm1347, %v1337, %v750
        %v1371 = vsel %vm1347, %v1338, %v752
        %v1372 = vsel %vm1347, %v1339, %v754
        %v1373 = vsel %vm1347, %v1340, %v756
        %v1374 = vsel %vm1347, %v1341, %v758
        %v1375 = vsel %vm1347, %v1342, %v760
        %v1376 = vsel %vm1347, %v1343, %v762
        %v1377 = vsel %vm1347, %v1344, %v764
        %v1378 = vsel %vm1347, %v1345, %v766
        %v1379 = vsel %vm1347, %v1346, %v768
        %vm1380 = vcmask 130048
        %v1381 = vsel %vm1380, %v1348, %v802
        %v1382 = vsel %vm1380, %v1349, %v804
        %v1383 = vsel %vm1380, %v1350, %v806
        %v1384 = vsel %vm1380, %v1351, %v808
        %v1385 = vsel %vm1380, %v1352, %v810
        %v1386 = vsel %vm1380, %v1353, %v812
        %v1387 = vsel %vm1380, %v1354, %v814
        %v1388 = vsel %vm1380, %v1355, %v816
        %v1389 = vsel %vm1380, %v1356, %v818
        %v1390 = vsel %vm1380, %v1357, %v820
        %v1391 = vsel %vm1380, %v1358, %v822
        %v1392 = vsel %vm1380, %v1359, %v824
        %v1393 = vsel %vm1380, %v1360, %v826
        %v1394 = vsel %vm1380, %v1361, %v828
        %v1395 = vsel %vm1380, %v1362, %v830
        %v1396 = vsel %vm1380, %v1363, %v832
        %v1397 = vsel %vm1380, %v1364, %v834
        %v1398 = vsel %vm1380, %v1365, %v836
        %v1399 = vsel %vm1380, %v1366, %v838
        %v1400 = vsel %vm1380, %v1367, %v840
        %v1401 = vsel %vm1380, %v1368, %v842
        %v1402 = vsel %vm1380, %v1369, %v844
        %v1403 = vsel %vm1380, %v1370, %v846
        %v1404 = vsel %vm1380, %v1371, %v848
        %v1405 = vsel %vm1380, %v1372, %v850
        %v1406 = vsel %vm1380, %v1373, %v852
        %v1407 = vsel %vm1380, %v1374, %v854
        %v1408 = vsel %vm1380, %v1375, %v856
        %v1409 = vsel %vm1380, %v1376, %v858
        %v1410 = vsel %vm1380, %v1377, %v860
        %v1411 = vsel %vm1380, %v1378, %v862
        %v1412 = vsel %vm1380, %v1379, %v864
        %vm1413 = vcmask 162816
        %v1414 = vsel %vm1413, %v1381, %v898
        %v1415 = vsel %vm1413, %v1382, %v900
        %v1416 = vsel %vm1413, %v1383, %v902
        %v1417 = vsel %vm1413, %v1384, %v904
        %v1418 = vsel %vm1413, %v1385, %v906
        %v1419 = vsel %vm1413, %v1386, %v908
        %v1420 = vsel %vm1413, %v1387, %v910
        %v1421 = vsel %vm1413, %v1388, %v912
        %v1422 = vsel %vm1413, %v1389, %v914
        %v1423 = vsel %vm1413, %v1390, %v916
        %v1424 = vsel %vm1413, %v1391, %v918
        %v1425 = vsel %vm1413, %v1392, %v920
        %v1426 = vsel %vm1413, %v1393, %v922
        %v1427 = vsel %vm1413, %v1394, %v924
        %v1428 = vsel %vm1413, %v1395, %v926
        %v1429 = vsel %vm1413, %v1396, %v928
        %v1430 = vsel %vm1413, %v1397, %v930
        %v1431 = vsel %vm1413, %v1398, %v932
        %v1432 = vsel %vm1413, %v1399, %v934
        %v1433 = vsel %vm1413, %v1400, %v936
        %v1434 = vsel %vm1413, %v1401, %v938
        %v1435 = vsel %vm1413, %v1402, %v940
        %v1436 = vsel %vm1413, %v1403, %v942
        %v1437 = vsel %vm1413, %v1404, %v944
        %v1438 = vsel %vm1413, %v1405, %v946
        %v1439 = vsel %vm1413, %v1406, %v948
        %v1440 = vsel %vm1413, %v1407, %v950
        %v1441 = vsel %vm1413, %v1408, %v952
        %v1442 = vsel %vm1413, %v1409, %v954
        %v1443 = vsel %vm1413, %v1410, %v956
        %v1444 = vsel %vm1413, %v1411, %v958
        %v1445 = vsel %vm1413, %v1412, %v960
        %vm1446 = vcmask 195584
        %v1447 = vsel %vm1446, %v1414, %v994
        %v1448 = vsel %vm1446, %v1415, %v996
        %v1449 = vsel %vm1446, %v1416, %v998
        %v1450 = vsel %vm1446, %v1417, %v1000
        %v1451 = vsel %vm1446, %v1418, %v1002
        %v1452 = vsel %vm1446, %v1419, %v1004
        %v1453 = vsel %vm1446, %v1420, %v1006
        %v1454 = vsel %vm1446, %v1421, %v1008
        %v1455 = vsel %vm1446, %v1422, %v1010
        %v1456 = vsel %vm1446, %v1423, %v1012
        %v1457 = vsel %vm1446, %v1424, %v1014
        %v1458 = vsel %vm1446, %v1425, %v1016
        %v1459 = vsel %vm1446, %v1426, %v1018
        %v1460 = vsel %vm1446, %v1427, %v1020
        %v1461 = vsel %vm1446, %v1428, %v1022
        %v1462 = vsel %vm1446, %v1429, %v1024
        %v1463 = vsel %vm1446, %v1430, %v1026
        %v1464 = vsel %vm1446, %v1431, %v1028
        %v1465 = vsel %vm1446, %v1432, %v1030
        %v1466 = vsel %vm1446, %v1433, %v1032
        %v1467 = vsel %vm1446, %v1434, %v1034
        %v1468 = vsel %vm1446, %v1435, %v1036
        %v1469 = vsel %vm1446, %v1436, %v1038
        %v1470 = vsel %vm1446, %v1437, %v1040
        %v1471 = vsel %vm1446, %v1438, %v1042
        %v1472 = vsel %vm1446, %v1439, %v1044
        %v1473 = vsel %vm1446, %v1440, %v1046
        %v1474 = vsel %vm1446, %v1441, %v1048
        %v1475 = vsel %vm1446, %v1442, %v1050
        %v1476 = vsel %vm1446, %v1443, %v1052
        %v1477 = vsel %vm1446, %v1444, %v1054
        %v1478 = vsel %vm1446, %v1445, %v1056
        %vm1479 = vcmask 228352
        %v1480 = vsel %vm1479, %v1447, %v1090
        %v1481 = vsel %vm1479, %v1448, %v1092
        %v1482 = vsel %vm1479, %v1449, %v1094
        %v1483 = vsel %vm1479, %v1450, %v1096
        %v1484 = vsel %vm1479, %v1451, %v1098
        %v1485 = vsel %vm1479, %v1452, %v1100
        %v1486 = vsel %vm1479, %v1453, %v1102
        %v1487 = vsel %vm1479, %v1454, %v1104
        %v1488 = vsel %vm1479, %v1455, %v1106
        %v1489 = vsel %vm1479, %v1456, %v1108
        %v1490 = vsel %vm1479, %v1457, %v1110
        %v1491 = vsel %vm1479, %v1458, %v1112
        %v1492 = vsel %vm1479, %v1459, %v1114
        %v1493 = vsel %vm1479, %v1460, %v1116
        %v1494 = vsel %vm1479, %v1461, %v1118
        %v1495 = vsel %vm1479, %v1462, %v1120
        %v1496 = vsel %vm1479, %v1463, %v1122
        %v1497 = vsel %vm1479, %v1464, %v1124
        %v1498 = vsel %vm1479, %v1465, %v1126
        %v1499 = vsel %vm1479, %v1466, %v1128
        %v1500 = vsel %vm1479, %v1467, %v1130
        %v1501 = vsel %vm1479, %v1468, %v1132
        %v1502 = vsel %vm1479, %v1469, %v1134
        %v1503 = vsel %vm1479, %v1470, %v1136
        %v1504 = vsel %vm1479, %v1471, %v1138
        %v1505 = vsel %vm1479, %v1472, %v1140
        %v1506 = vsel %vm1479, %v1473, %v1142
        %v1507 = vsel %vm1479, %v1474, %v1144
        %v1508 = vsel %vm1479, %v1475, %v1146
        %v1509 = vsel %vm1479, %v1476, %v1148
        %v1510 = vsel %vm1479, %v1477, %v1150
        %v1511 = vsel %vm1479, %v1478, %v1152
        %vm1512 = vcmask 261120
        %v1513 = vsel %vm1512, %v1480, %v1186
        %v1514 = vsel %vm1512, %v1481, %v1188
        %v1515 = vsel %vm1512, %v1482, %v1190
        %v1516 = vsel %vm1512, %v1483, %v1192
        %v1517 = vsel %vm1512, %v1484, %v1194
        %v1518 = vsel %vm1512, %v1485, %v1196
        %v1519 = vsel %vm1512, %v1486, %v1198
        %v1520 = vsel %vm1512, %v1487, %v1200
        %v1521 = vsel %vm1512, %v1488, %v1202
        %v1522 = vsel %vm1512, %v1489, %v1204
        %v1523 = vsel %vm1512, %v1490, %v1206
        %v1524 = vsel %vm1512, %v1491, %v1208
        %v1525 = vsel %vm1512, %v1492, %v1210
        %v1526 = vsel %vm1512, %v1493, %v1212
        %v1527 = vsel %vm1512, %v1494, %v1214
        %v1528 = vsel %vm1512, %v1495, %v1216
        %v1529 = vsel %vm1512, %v1496, %v1218
        %v1530 = vsel %vm1512, %v1497, %v1220
        %v1531 = vsel %vm1512, %v1498, %v1222
        %v1532 = vsel %vm1512, %v1499, %v1224
        %v1533 = vsel %vm1512, %v1500, %v1226
        %v1534 = vsel %vm1512, %v1501, %v1228
        %v1535 = vsel %vm1512, %v1502, %v1230
        %v1536 = vsel %vm1512, %v1503, %v1232
        %v1537 = vsel %vm1512, %v1504, %v1234
        %v1538 = vsel %vm1512, %v1505, %v1236
        %v1539 = vsel %vm1512, %v1506, %v1238
        %v1540 = vsel %vm1512, %v1507, %v1240
        %v1541 = vsel %vm1512, %v1508, %v1242
        %v1542 = vsel %vm1512, %v1509, %v1244
        %v1543 = vsel %vm1512, %v1510, %v1246
        %v1544 = vsel %vm1512, %v1511, %v1248
        %v1545 = vld [vmem:[%s1] sm:$0xff]
        %v1546 = vld [vmem:[%s1 + $0x8] sm:$0xff]
        %v1547 = vld [vmem:[%s1 + $0x10] sm:$0xff]
        %v1548 = vld [vmem:[%s1 + $0x18] sm:$0xff]
        %v1549 = vld [vmem:[%s1 + $0x20] sm:$0xf]
        %vm1550 = vcmask 293888
        %v1552 = vsel %vm1550, %v1513, 0
        %v1555 = vsel %vm1550, %v1514, 0
        %v1558 = vsel %vm1550, %v1515, 0
        %v1561 = vsel %vm1550, %v1516, 0
        %v1564 = vsel %vm1550, %v1517, 0
        %v1567 = vsel %vm1550, %v1518, 0
        %v1570 = vsel %vm1550, %v1519, 0
        %v1573 = vsel %vm1550, %v1520, 0
        %v1576 = vsel %vm1550, %v1521, 0
        %v1579 = vsel %vm1550, %v1522, 0
        %v1582 = vsel %vm1550, %v1523, 0
        %v1585 = vsel %vm1550, %v1524, 0
        %v1588 = vsel %vm1550, %v1525, 0
        %v1591 = vsel %vm1550, %v1526, 0
        %v1594 = vsel %vm1550, %v1527, 0
        %v1597 = vsel %vm1550, %v1528, 0
        %v1600 = vsel %vm1550, %v1529, 0
        %v1603 = vsel %vm1550, %v1530, 0
        %v1606 = vsel %vm1550, %v1531, 0
        %v1609 = vsel %vm1550, %v1532, 0
        %v1612 = vsel %vm1550, %v1533, 0
        %v1615 = vsel %vm1550, %v1534, 0
        %v1618 = vsel %vm1550, %v1535, 0
        %v1621 = vsel %vm1550, %v1536, 0
        %v1624 = vsel %vm1550, %v1537, 0
        %v1627 = vsel %vm1550, %v1538, 0
        %v1630 = vsel %vm1550, %v1539, 0
        %v1633 = vsel %vm1550, %v1540, 0
        %v1636 = vsel %vm1550, %v1541, 0
        %v1639 = vsel %vm1550, %v1542, 0
        %v1642 = vsel %vm1550, %v1543, 0
        %v1645 = vsel %vm1550, %v1544, 0
        %vm1647 = vcmask 1043456
        %v1649 = vsel %vm1647, %v1549, 0
        %1651 = vmatprep.subr.mxu0 0.0
        %1652 = vmatpush1.msra.mxu0 %v1545
        %1653 = vmatprep.subr.mxu0 0.0
        %1654 = vmatpush1.msra.mxu0 %v1546
        %1655 = vmatprep.subr.mxu0 0.0
        %1656 = vmatpush1.msra.mxu0 %v1547
        %1657 = vmatprep.subr.mxu0 0.0
        %1658 = vmatpush1.msra.mxu0 %v1548
        %1659 = vmatprep.subr.mxu0 0.0
        %1660 = vmatpush1.msra.mxu0 %v1649
        %1661 = vmatprep.subr.mxu0 0.0
        %1662 = vmatpush1.msra.mxu0 0.0
        %1663 = vmatprep.subr.mxu0 0.0
        %1664 = vmatpush1.msra.mxu0 0.0
        %1665 = vmatprep.subr.mxu0 0.0
        %1666 = vmatpush1.msra.mxu0 0.0
        %1667 = vmatprep.subr.mxu0 0.0
        %1668 = vmatpush1.msra.mxu0 0.0
        %1669 = vmatprep.subr.mxu0 0.0
        %1670 = vmatpush1.msra.mxu0 0.0
        %1671 = vmatprep.subr.mxu0 0.0
        %1672 = vmatpush1.msra.mxu0 0.0
        %1673 = vmatprep.subr.mxu0 0.0
        %1674 = vmatpush1.msra.mxu0 0.0
        %1675 = vmatprep.subr.mxu0 0.0
        %1676 = vmatpush1.msra.mxu0 0.0
        %1677 = vmatprep.subr.mxu0 0.0
        %1678 = vmatpush1.msra.mxu0 0.0
        %1679 = vmatprep.subr.mxu0 0.0
        %1680 = vmatpush1.msra.mxu0 0.0
        %1681 = vmatprep.subr.mxu0 0.0
        %1682 = vmatpush1.msra.mxu0 0.0
        %1683 = vmatprep.subr.mxu0 0.0
        %1684 = vmatpush1.msra.mxu0 0.0
        %1685 = vmatprep.subr.mxu0 0.0
        %1686 = vmatpush1.msra.mxu0 0.0
        %1687 = vmatprep.subr.mxu0 0.0
        %1688 = vmatpush1.msra.mxu0 0.0
        %1689 = vmatprep.subr.mxu0 0.0
        %1690 = vmatpush1.msra.mxu0 0.0
        %1691 = vmatprep.subr.mxu0 0.0
        %1692 = vmatpush1.msra.mxu0 0.0
        %1693 = vmatprep.subr.mxu0 0.0
        %1694 = vmatpush1.msra.mxu0 0.0
        %1695 = vmatprep.subr.mxu0 0.0
        %1696 = vmatpush1.msra.mxu0 0.0
        %1697 = vmatprep.subr.mxu0 0.0
        %1698 = vmatpush1.msra.mxu0 0.0
        %1699 = vmatprep.subr.mxu0 0.0
        %1700 = vmatpush1.msra.mxu0 0.0
        %1701 = vmatprep.subr.mxu0 0.0
        %1702 = vmatpush1.msra.mxu0 0.0
        %1703 = vmatprep.subr.mxu0 0.0
        %1704 = vmatpush1.msra.mxu0 0.0
        %1705 = vmatprep.subr.mxu0 0.0
        %1706 = vmatpush1.msra.mxu0 0.0
        %1707 = vmatprep.subr.mxu0 0.0
        %1708 = vmatpush1.msra.mxu0 0.0
        %1709 = vmatprep.subr.mxu0 0.0
        %1710 = vmatpush1.msra.mxu0 0.0
        %1711 = vmatprep.subr.mxu0 0.0
        %1712 = vmatpush1.msra.mxu0 0.0
        %1713 = vmatprep.subr.mxu0 0.0
        %1714 = vmatpush1.msra.mxu0 0.0
        %1715 = vmatprep.mubr.f32.mxu0 0.0
        %1716 = vmatmul.mubr.f32.gmra.mrb[0].mxu0 %v1552
        %v1717 = vpop.f32.mrb[0].mxu0
        %v1718 = vadd.f32 0.0, %v1717
        %v1719 = vpop.f32.mrb[0].mxu0
        %1720 = vmatprep.mubr.f32.mxu0 0.0
        %1721 = vmatmul.mubr.f32.gmra.mrb[0].mxu0 %v1555
        %v1722 = vpop.f32.mrb[0].mxu0
        %v1723 = vadd.f32 0.0, %v1722
        %v1724 = vpop.f32.mrb[0].mxu0
        %1725 = vmatprep.mubr.f32.mxu0 0.0
        %1726 = vmatmul.mubr.f32.gmra.mrb[0].mxu0 %v1558
        %v1727 = vpop.f32.mrb[0].mxu0
        %v1728 = vadd.f32 0.0, %v1727
        %v1729 = vpop.f32.mrb[0].mxu0
        %1730 = vmatprep.mubr.f32.mxu0 0.0
        %1731 = vmatmul.mubr.f32.gmra.mrb[0].mxu0 %v1561
        %v1732 = vpop.f32.mrb[0].mxu0
        %v1733 = vadd.f32 0.0, %v1732
        %v1734 = vpop.f32.mrb[0].mxu0
        %1735 = vmatprep.mubr.f32.mxu0 0.0
        %1736 = vmatmul.mubr.f32.gmra.mrb[0].mxu0 %v1564
        %v1737 = vpop.f32.mrb[0].mxu0
        %v1738 = vadd.f32 0.0, %v1737
        %v1739 = vpop.f32.mrb[0].mxu0
        %1740 = vmatprep.mubr.f32.mxu0 0.0
        %1741 = vmatmul.mubr.f32.gmra.mrb[0].mxu0 %v1567
        %v1742 = vpop.f32.mrb[0].mxu0
        %v1743 = vadd.f32 0.0, %v1742
        %v1744 = vpop.f32.mrb[0].mxu0
        %1745 = vmatprep.mubr.f32.mxu0 0.0
        %1746 = vmatmul.mubr.f32.gmra.mrb[0].mxu0 %v1570
        %v1747 = vpop.f32.mrb[0].mxu0
        %v1748 = vadd.f32 0.0, %v1747
        %v1749 = vpop.f32.mrb[0].mxu0
        %1750 = vmatprep.mubr.f32.mxu0 0.0
        %1751 = vmatmul.mubr.f32.gmra.mrb[0].mxu0 %v1573
        %v1752 = vpop.f32.mrb[0].mxu0
        %v1753 = vadd.f32 0.0, %v1752
        %v1754 = vpop.f32.mrb[0].mxu0
        %1755 = vmatprep.mubr.f32.mxu0 0.0
        %1756 = vmatmul.mubr.f32.gmra.mrb[0].mxu0 %v1576
        %v1757 = vpop.f32.mrb[0].mxu0
        %v1758 = vadd.f32 0.0, %v1757
        %v1759 = vpop.f32.mrb[0].mxu0
        %1760 = vmatprep.mubr.f32.mxu0 0.0
        %1761 = vmatmul.mubr.f32.gmra.mrb[0].mxu0 %v1579
        %v1762 = vpop.f32.mrb[0].mxu0
        %v1763 = vadd.f32 0.0, %v1762
        %v1764 = vpop.f32.mrb[0].mxu0
        %1765 = vmatprep.mubr.f32.mxu0 0.0
        %1766 = vmatmul.mubr.f32.gmra.mrb[0].mxu0 %v1582
        %v1767 = vpop.f32.mrb[0].mxu0
        %v1768 = vadd.f32 0.0, %v1767
        %v1769 = vpop.f32.mrb[0].mxu0
        %1770 = vmatprep.mubr.f32.mxu0 0.0
        %1771 = vmatmul.mubr.f32.gmra.mrb[0].mxu0 %v1585
        %v1772 = vpop.f32.mrb[0].mxu0
        %v1773 = vadd.f32 0.0, %v1772
        %v1774 = vpop.f32.mrb[0].mxu0
        %1775 = vmatprep.mubr.f32.mxu0 0.0
        %1776 = vmatmul.mubr.f32.gmra.mrb[0].mxu0 %v1588
        %v1777 = vpop.f32.mrb[0].mxu0
        %v1778 = vadd.f32 0.0, %v1777
        %v1779 = vpop.f32.mrb[0].mxu0
        %1780 = vmatprep.mubr.f32.mxu0 0.0
        %1781 = vmatmul.mubr.f32.gmra.mrb[0].mxu0 %v1591
        %v1782 = vpop.f32.mrb[0].mxu0
        %v1783 = vadd.f32 0.0, %v1782
        %v1784 = vpop.f32.mrb[0].mxu0
        %1785 = vmatprep.mubr.f32.mxu0 0.0
        %1786 = vmatmul.mubr.f32.gmra.mrb[0].mxu0 %v1594
        %v1787 = vpop.f32.mrb[0].mxu0
        %v1788 = vadd.f32 0.0, %v1787
        %v1789 = vpop.f32.mrb[0].mxu0
        %1790 = vmatprep.mubr.f32.mxu0 0.0
        %1791 = vmatmul.mubr.f32.gmra.mrb[0].mxu0 %v1597
        %v1792 = vpop.f32.mrb[0].mxu0
        %v1793 = vadd.f32 0.0, %v1792
        %v1794 = vpop.f32.mrb[0].mxu0
        %1795 = vmatprep.mubr.f32.mxu0 0.0
        %1796 = vmatmul.mubr.f32.gmra.mrb[0].mxu0 %v1600
        %v1797 = vpop.f32.mrb[0].mxu0
        %v1798 = vadd.f32 0.0, %v1797
        %v1799 = vpop.f32.mrb[0].mxu0
        %1800 = vmatprep.mubr.f32.mxu0 0.0
        %1801 = vmatmul.mubr.f32.gmra.mrb[0].mxu0 %v1603
        %v1802 = vpop.f32.mrb[0].mxu0
        %v1803 = vadd.f32 0.0, %v1802
        %v1804 = vpop.f32.mrb[0].mxu0
        %1805 = vmatprep.mubr.f32.mxu0 0.0
        %1806 = vmatmul.mubr.f32.gmra.mrb[0].mxu0 %v1606
        %v1807 = vpop.f32.mrb[0].mxu0
        %v1808 = vadd.f32 0.0, %v1807
        %v1809 = vpop.f32.mrb[0].mxu0
        %1810 = vmatprep.mubr.f32.mxu0 0.0
        %1811 = vmatmul.mubr.f32.gmra.mrb[0].mxu0 %v1609
        %v1812 = vpop.f32.mrb[0].mxu0
        %v1813 = vadd.f32 0.0, %v1812
        %v1814 = vpop.f32.mrb[0].mxu0
        %1815 = vmatprep.mubr.f32.mxu0 0.0
        %1816 = vmatmul.mubr.f32.gmra.mrb[0].mxu0 %v1612
        %v1817 = vpop.f32.mrb[0].mxu0
        %v1818 = vadd.f32 0.0, %v1817
        %v1819 = vpop.f32.mrb[0].mxu0
        %1820 = vmatprep.mubr.f32.mxu0 0.0
        %1821 = vmatmul.mubr.f32.gmra.mrb[0].mxu0 %v1615
        %v1822 = vpop.f32.mrb[0].mxu0
        %v1823 = vadd.f32 0.0, %v1822
        %v1824 = vpop.f32.mrb[0].mxu0
        %1825 = vmatprep.mubr.f32.mxu0 0.0
        %1826 = vmatmul.mubr.f32.gmra.mrb[0].mxu0 %v1618
        %v1827 = vpop.f32.mrb[0].mxu0
        %v1828 = vadd.f32 0.0, %v1827
        %v1829 = vpop.f32.mrb[0].mxu0
        %1830 = vmatprep.mubr.f32.mxu0 0.0
        %1831 = vmatmul.mubr.f32.gmra.mrb[0].mxu0 %v1621
        %v1832 = vpop.f32.mrb[0].mxu0
        %v1833 = vadd.f32 0.0, %v1832
        %v1834 = vpop.f32.mrb[0].mxu0
        %1835 = vmatprep.mubr.f32.mxu0 0.0
        %1836 = vmatmul.mubr.f32.gmra.mrb[0].mxu0 %v1624
        %v1837 = vpop.f32.mrb[0].mxu0
        %v1838 = vadd.f32 0.0, %v1837
        %v1839 = vpop.f32.mrb[0].mxu0
        %1840 = vmatprep.mubr.f32.mxu0 0.0
        %1841 = vmatmul.mubr.f32.gmra.mrb[0].mxu0 %v1627
        %v1842 = vpop.f32.mrb[0].mxu0
        %v1843 = vadd.f32 0.0, %v1842
        %v1844 = vpop.f32.mrb[0].mxu0
        %1845 = vmatprep.mubr.f32.mxu0 0.0
        %1846 = vmatmul.mubr.f32.gmra.mrb[0].mxu0 %v1630
        %v1847 = vpop.f32.mrb[0].mxu0
        %v1848 = vadd.f32 0.0, %v1847
        %v1849 = vpop.f32.mrb[0].mxu0
        %1850 = vmatprep.mubr.f32.mxu0 0.0
        %1851 = vmatmul.mubr.f32.gmra.mrb[0].mxu0 %v1633
        %v1852 = vpop.f32.mrb[0].mxu0
        %v1853 = vadd.f32 0.0, %v1852
        %v1854 = vpop.f32.mrb[0].mxu0
        %1855 = vmatprep.mubr.f32.mxu0 0.0
        %1856 = vmatmul.mubr.f32.gmra.mrb[0].mxu0 %v1636
        %v1857 = vpop.f32.mrb[0].mxu0
        %v1858 = vadd.f32 0.0, %v1857
        %v1859 = vpop.f32.mrb[0].mxu0
        %1860 = vmatprep.mubr.f32.mxu0 0.0
        %1861 = vmatmul.mubr.f32.gmra.mrb[0].mxu0 %v1639
        %v1862 = vpop.f32.mrb[0].mxu0
        %v1863 = vadd.f32 0.0, %v1862
        %v1864 = vpop.f32.mrb[0].mxu0
        %1865 = vmatprep.mubr.f32.mxu0 0.0
        %1866 = vmatmul.mubr.f32.gmra.mrb[0].mxu0 %v1642
        %v1867 = vpop.f32.mrb[0].mxu0
        %v1868 = vadd.f32 0.0, %v1867
        %v1869 = vpop.f32.mrb[0].mxu0
        %1870 = vmatprep.mubr.f32.mxu0 0.0
        %1871 = vmatmul.mubr.f32.gmra.mrb[0].mxu0 %v1645
        %v1872 = vpop.f32.mrb[0].mxu0
        %v1873 = vadd.f32 0.0, %v1872
        %v1874 = vpop.f32.mrb[0].mxu0
        %1875 = vdwg.mxu0
        %v1876 = vmax.f32 %v1718, 0.0
        %v1877 = vmax.f32 %v1723, 0.0
        %v1878 = vmax.f32 %v1728, 0.0
        %v1879 = vmax.f32 %v1733, 0.0
        %v1880 = vmax.f32 %v1738, 0.0
        %v1881 = vmax.f32 %v1743, 0.0
        %v1882 = vmax.f32 %v1748, 0.0
        %v1883 = vmax.f32 %v1753, 0.0
        %v1884 = vmax.f32 %v1758, 0.0
        %v1885 = vmax.f32 %v1763, 0.0
        %v1886 = vmax.f32 %v1768, 0.0
        %v1887 = vmax.f32 %v1773, 0.0
        %v1888 = vmax.f32 %v1778, 0.0
        %v1889 = vmax.f32 %v1783, 0.0
        %v1890 = vmax.f32 %v1788, 0.0
        %v1891 = vmax.f32 %v1793, 0.0
        %v1892 = vmax.f32 %v1798, 0.0
        %v1893 = vmax.f32 %v1803, 0.0
        %v1894 = vmax.f32 %v1808, 0.0
        %v1895 = vmax.f32 %v1813, 0.0
        %v1896 = vmax.f32 %v1818, 0.0
        %v1897 = vmax.f32 %v1823, 0.0
        %v1898 = vmax.f32 %v1828, 0.0
        %v1899 = vmax.f32 %v1833, 0.0
        %v1900 = vmax.f32 %v1838, 0.0
        %v1901 = vmax.f32 %v1843, 0.0
        %v1902 = vmax.f32 %v1848, 0.0
        %v1903 = vmax.f32 %v1853, 0.0
        %v1904 = vmax.f32 %v1858, 0.0
        %v1905 = vmax.f32 %v1863, 0.0
        %v1906 = vmax.f32 %v1868, 0.0
        %v1907 = vmax.f32 %v1873, 0.0
        %1908 = vst.msk [vmem:[#allocation2] sm:$0xff] %vm1281, 0.0
        %1909 = vst.msk [vmem:[#allocation2 + $0x8] sm:$0xff] %vm1281, 0.0
        %vm1910 = vcmask 25600
        %1911 = vst.msk [vmem:[#allocation2 + $0x10] sm:$0x3] %vm1910, 0.0
        %s1912 = scalar_lea.vmem [#allocation2], 408
        %1913 = vst.msk [vmem:[%s1912] sm:$0xff] %vm1281, 0.0
        %1914 = vst.msk [vmem:[%s1912 + $0x8] sm:$0xff] %vm1281, 0.0
        %1915 = vst.msk [vmem:[%s1912 + $0x10] sm:$0x3] %vm1910, 0.0
        %vm1916 = vcmask 24576
        %1917 = vst.msk [vmem:[#allocation2] sm:$0x1] %vm1916, 0.0
        %1918 = vst.msk [vmem:[#allocation2 + $0x18] sm:$0x1] %vm1916, 0.0
        %1919 = vst.msk [vmem:[#allocation2 + $0x30] sm:$0x1] %vm1916, 0.0
        %1920 = vst.msk [vmem:[#allocation2 + $0x48] sm:$0x1] %vm1916, 0.0
        %1921 = vst.msk [vmem:[#allocation2 + $0x60] sm:$0x1] %vm1916, 0.0
        %1922 = vst.msk [vmem:[#allocation2 + $0x78] sm:$0x1] %vm1916, 0.0
        %1923 = vst.msk [vmem:[#allocation2 + $0x90] sm:$0x1] %vm1916, 0.0
        %1924 = vst.msk [vmem:[#allocation2 + $0xa8] sm:$0x1] %vm1916, 0.0
        %1925 = vst.msk [vmem:[#allocation2 + $0xc0] sm:$0x1] %vm1916, 0.0
        %1926 = vst.msk [vmem:[#allocation2 + $0xd8] sm:$0x1] %vm1916, 0.0
        %1927 = vst.msk [vmem:[#allocation2 + $0xf0] sm:$0x1] %vm1916, 0.0
        %1928 = vst.msk [vmem:[#allocation2 + $0x108] sm:$0x1] %vm1916, 0.0
        %1929 = vst.msk [vmem:[#allocation2 + $0x120] sm:$0x1] %vm1916, 0.0
        %1930 = vst.msk [vmem:[#allocation2 + $0x138] sm:$0x1] %vm1916, 0.0
        %1931 = vst.msk [vmem:[#allocation2 + $0x150] sm:$0x1] %vm1916, 0.0
        %1932 = vst.msk [vmem:[#allocation2 + $0x168] sm:$0x1] %vm1916, 0.0
        %1933 = vst.msk [vmem:[#allocation2 + $0x180] sm:$0x1] %vm1916, 0.0
        %1934 = vst.msk [vmem:[#allocation2 + $0x198] sm:$0x1] %vm1916, 0.0
        %1935 = vst.msk [vmem:[#allocation2 + $0x11] sm:$0x1] %vm1916, 0.0
        %1936 = vst.msk [vmem:[#allocation2 + $0x29] sm:$0x1] %vm1916, 0.0
        %1937 = vst.msk [vmem:[#allocation2 + $0x41] sm:$0x1] %vm1916, 0.0
        %1938 = vst.msk [vmem:[#allocation2 + $0x59] sm:$0x1] %vm1916, 0.0
        %1939 = vst.msk [vmem:[#allocation2 + $0x71] sm:$0x1] %vm1916, 0.0
        %1940 = vst.msk [vmem:[#allocation2 + $0x89] sm:$0x1] %vm1916, 0.0
        %1941 = vst.msk [vmem:[#allocation2 + $0xa1] sm:$0x1] %vm1916, 0.0
        %1942 = vst.msk [vmem:[#allocation2 + $0xb9] sm:$0x1] %vm1916, 0.0
        %1943 = vst.msk [vmem:[#allocation2 + $0xd1] sm:$0x1] %vm1916, 0.0
        %1944 = vst.msk [vmem:[#allocation2 + $0xe9] sm:$0x1] %vm1916, 0.0
        %1945 = vst.msk [vmem:[#allocation2 + $0x101] sm:$0x1] %vm1916, 0.0
        %1946 = vst.msk [vmem:[#allocation2 + $0x119] sm:$0x1] %vm1916, 0.0
        %1947 = vst.msk [vmem:[#allocation2 + $0x131] sm:$0x1] %vm1916, 0.0
        %1948 = vst.msk [vmem:[#allocation2 + $0x149] sm:$0x1] %vm1916, 0.0
        %1949 = vst.msk [vmem:[#allocation2 + $0x161] sm:$0x1] %vm1916, 0.0
        %1950 = vst.msk [vmem:[#allocation2 + $0x179] sm:$0x1] %vm1916, 0.0
        %1951 = vst.msk [vmem:[#allocation2 + $0x191] sm:$0x1] %vm1916, 0.0
        %1952 = vst.msk [vmem:[#allocation2 + $0x1a9] sm:$0x1] %vm1916, 0.0
        %s1953 = scalar_lea.vmem [#allocation2], 24
        %1954 = vst.msk [vmem:[%s1953 + $0x1] sm:$0xff] %vm1281, %v1876
        %1955 = vst.msk [vmem:[%s1953 + $0x9] sm:$0xff] %vm1281, %v1877
        %1956 = vst.msk [vmem:[%s1953 + $0x19] sm:$0xff] %vm1281, %v1878
        %1957 = vst.msk [vmem:[%s1953 + $0x21] sm:$0xff] %vm1281, %v1879
        %1958 = vst.msk [vmem:[%s1953 + $0x31] sm:$0xff] %vm1281, %v1880
        %1959 = vst.msk [vmem:[%s1953 + $0x39] sm:$0xff] %vm1281, %v1881
        %1960 = vst.msk [vmem:[%s1953 + $0x49] sm:$0xff] %vm1281, %v1882
        %1961 = vst.msk [vmem:[%s1953 + $0x51] sm:$0xff] %vm1281, %v1883
        %1962 = vst.msk [vmem:[%s1953 + $0x61] sm:$0xff] %vm1281, %v1884
        %1963 = vst.msk [vmem:[%s1953 + $0x69] sm:$0xff] %vm1281, %v1885
        %1964 = vst.msk [vmem:[%s1953 + $0x79] sm:$0xff] %vm1281, %v1886
        %1965 = vst.msk [vmem:[%s1953 + $0x81] sm:$0xff] %vm1281, %v1887
        %1966 = vst.msk [vmem:[%s1953 + $0x91] sm:$0xff] %vm1281, %v1888
        %1967 = vst.msk [vmem:[%s1953 + $0x99] sm:$0xff] %vm1281, %v1889
        %1968 = vst.msk [vmem:[%s1953 + $0xa9] sm:$0xff] %vm1281, %v1890
        %1969 = vst.msk [vmem:[%s1953 + $0xb1] sm:$0xff] %vm1281, %v1891
        %1970 = vst.msk [vmem:[%s1953 + $0xc1] sm:$0xff] %vm1281, %v1892
        %1971 = vst.msk [vmem:[%s1953 + $0xc9] sm:$0xff] %vm1281, %v1893
        %1972 = vst.msk [vmem:[%s1953 + $0xd9] sm:$0xff] %vm1281, %v1894
        %1973 = vst.msk [vmem:[%s1953 + $0xe1] sm:$0xff] %vm1281, %v1895
        %1974 = vst.msk [vmem:[%s1953 + $0xf1] sm:$0xff] %vm1281, %v1896
        %1975 = vst.msk [vmem:[%s1953 + $0xf9] sm:$0xff] %vm1281, %v1897
        %1976 = vst.msk [vmem:[%s1953 + $0x109] sm:$0xff] %vm1281, %v1898
        %1977 = vst.msk [vmem:[%s1953 + $0x111] sm:$0xff] %vm1281, %v1899
        %1978 = vst.msk [vmem:[%s1953 + $0x121] sm:$0xff] %vm1281, %v1900
        %1979 = vst.msk [vmem:[%s1953 + $0x129] sm:$0xff] %vm1281, %v1901
        %1980 = vst.msk [vmem:[%s1953 + $0x139] sm:$0xff] %vm1281, %v1902
        %1981 = vst.msk [vmem:[%s1953 + $0x141] sm:$0xff] %vm1281, %v1903
        %1982 = vst.msk [vmem:[%s1953 + $0x151] sm:$0xff] %vm1281, %v1904
        %1983 = vst.msk [vmem:[%s1953 + $0x159] sm:$0xff] %vm1281, %v1905
        %1984 = vst.msk [vmem:[%s1953 + $0x169] sm:$0xff] %vm1281, %v1906
        %1985 = vst.msk [vmem:[%s1953 + $0x171] sm:$0xff] %vm1281, %v1907
        %v1986 = vld [vmem:[#allocation2] sm:$0xff]
        %v1987 = vld [vmem:[#allocation2 + $0x8] sm:$0xff]
        %v1988 = vld [vmem:[#allocation2 + $0x10] sm:$0x3]
        %v1989 = vld [vmem:[#allocation2 + $0x18] sm:$0xff]
        %v1990 = vld [vmem:[#allocation2 + $0x20] sm:$0xff]
        %v1991 = vld [vmem:[#allocation2 + $0x28] sm:$0x3]
        %v1992 = vld [vmem:[#allocation2 + $0x30] sm:$0xff]
        %v1993 = vld [vmem:[#allocation2 + $0x38] sm:$0xff]
        %v1994 = vld [vmem:[#allocation2 + $0x40] sm:$0x3]
        %v1995 = vld [vmem:[#allocation2 + $0x48] sm:$0xff]
        %v1996 = vld [vmem:[#allocation2 + $0x50] sm:$0xff]
        %v1997 = vld [vmem:[#allocation2 + $0x58] sm:$0x3]
        %v1998 = vld [vmem:[#allocation2 + $0x60] sm:$0xff]
        %v1999 = vld [vmem:[#allocation2 + $0x68] sm:$0xff]
        %v2000 = vld [vmem:[#allocation2 + $0x70] sm:$0x3]
        %v2001 = vld [vmem:[#allocation2 + $0x78] sm:$0xff]
        %v2002 = vld [vmem:[#allocation2 + $0x80] sm:$0xff]
        %v2003 = vld [vmem:[#allocation2 + $0x88] sm:$0x3]
        %v2004 = vld [vmem:[#allocation2 + $0x90] sm:$0xff]
        %v2005 = vld [vmem:[#allocation2 + $0x98] sm:$0xff]
        %v2006 = vld [vmem:[#allocation2 + $0xa0] sm:$0x3]
        %v2007 = vld [vmem:[#allocation2 + $0xa8] sm:$0xff]
        %v2008 = vld [vmem:[#allocation2 + $0xb0] sm:$0xff]
        %v2009 = vld [vmem:[#allocation2 + $0xb8] sm:$0x3]
        %v2010 = vld [vmem:[#allocation2 + $0xc0] sm:$0xff]
        %v2011 = vld [vmem:[#allocation2 + $0xc8] sm:$0xff]
        %v2012 = vld [vmem:[#allocation2 + $0xd0] sm:$0x3]
        %v2013 = vld [vmem:[#allocation2 + $0xd8] sm:$0xff]
        %v2014 = vld [vmem:[#allocation2 + $0xe0] sm:$0xff]
        %v2015 = vld [vmem:[#allocation2 + $0xe8] sm:$0x3]
        %v2016 = vld [vmem:[#allocation2 + $0xf0] sm:$0xff]
        %v2017 = vld [vmem:[#allocation2 + $0xf8] sm:$0xff]
        %v2018 = vld [vmem:[#allocation2 + $0x100] sm:$0x3]
        %v2019 = vld [vmem:[#allocation2 + $0x108] sm:$0xff]
        %v2020 = vld [vmem:[#allocation2 + $0x110] sm:$0xff]
        %v2021 = vld [vmem:[#allocation2 + $0x118] sm:$0x3]
        %v2022 = vld [vmem:[#allocation2 + $0x120] sm:$0xff]
        %v2023 = vld [vmem:[#allocation2 + $0x128] sm:$0xff]
        %v2024 = vld [vmem:[#allocation2 + $0x130] sm:$0x3]
        %v2025 = vld [vmem:[#allocation2 + $0x138] sm:$0xff]
        %v2026 = vld [vmem:[#allocation2 + $0x140] sm:$0xff]
        %v2027 = vld [vmem:[#allocation2 + $0x148] sm:$0x3]
        %v2028 = vld [vmem:[#allocation2 + $0x150] sm:$0xff]
        %v2029 = vld [vmem:[#allocation2 + $0x158] sm:$0xff]
        %v2030 = vld [vmem:[#allocation2 + $0x160] sm:$0x3]
        %v2031 = vld [vmem:[#allocation2 + $0x168] sm:$0xff]
        %v2032 = vld [vmem:[#allocation2 + $0x170] sm:$0xff]
        %v2033 = vld [vmem:[#allocation2 + $0x178] sm:$0x3]
        %v2034 = vld [vmem:[#allocation2 + $0x180] sm:$0xff]
        %v2035 = vld [vmem:[#allocation2 + $0x188] sm:$0xff]
        %v2036 = vld [vmem:[#allocation2 + $0x190] sm:$0x3]
        %v2037 = vld [vmem:[#allocation2 + $0x198] sm:$0xff]
        %v2038 = vld [vmem:[#allocation2 + $0x1a0] sm:$0xff]
        %v2039 = vld [vmem:[#allocation2 + $0x1a8] sm:$0x3]
        %v2088 = vrot.slane %v1986, 1
        %v2089 = vrot.slane %v1987, 1
        %v2090 = vsel %vm325, %v2088, %v2089
        %v2091 = vrot.slane %v1988, 1
        %v2092 = vsel %vm325, %v2089, %v2091
        %v2093 = vrot.slane %v1989, 1
        %v2094 = vrot.slane %v1990, 1
        %v2095 = vsel %vm325, %v2093, %v2094
        %v2096 = vrot.slane %v1991, 1
        %v2097 = vsel %vm325, %v2094, %v2096
        %v2098 = vrot.slane %v1992, 1
        %v2099 = vrot.slane %v1993, 1
        %v2100 = vsel %vm325, %v2098, %v2099
        %v2101 = vrot.slane %v1994, 1
        %v2102 = vsel %vm325, %v2099, %v2101
        %v2103 = vrot.slane %v1995, 1
        %v2104 = vrot.slane %v1996, 1
        %v2105 = vsel %vm325, %v2103, %v2104
        %v2106 = vrot.slane %v1997, 1
        %v2107 = vsel %vm325, %v2104, %v2106
        %v2108 = vrot.slane %v1998, 1
        %v2109 = vrot.slane %v1999, 1
        %v2110 = vsel %vm325, %v2108, %v2109
        %v2111 = vrot.slane %v2000, 1
        %v2112 = vsel %vm325, %v2109, %v2111
        %v2113 = vrot.slane %v2001, 1
        %v2114 = vrot.slane %v2002, 1
        %v2115 = vsel %vm325, %v2113, %v2114
        %v2116 = vrot.slane %v2003, 1
        %v2117 = vsel %vm325, %v2114, %v2116
        %v2118 = vrot.slane %v2004, 1
        %v2119 = vrot.slane %v2005, 1
        %v2120 = vsel %vm325, %v2118, %v2119
        %v2121 = vrot.slane %v2006, 1
        %v2122 = vsel %vm325, %v2119, %v2121
        %v2123 = vrot.slane %v2007, 1
        %v2124 = vrot.slane %v2008, 1
        %v2125 = vsel %vm325, %v2123, %v2124
        %v2126 = vrot.slane %v2009, 1
        %v2127 = vsel %vm325, %v2124, %v2126
        %v2128 = vrot.slane %v2010, 1
        %v2129 = vrot.slane %v2011, 1
        %v2130 = vsel %vm325, %v2128, %v2129
        %v2131 = vrot.slane %v2012, 1
        %v2132 = vsel %vm325, %v2129, %v2131
        %v2133 = vrot.slane %v2013, 1
        %v2134 = vrot.slane %v2014, 1
        %v2135 = vsel %vm325, %v2133, %v2134
        %v2136 = vrot.slane %v2015, 1
        %v2137 = vsel %vm325, %v2134, %v2136
        %v2138 = vrot.slane %v2016, 1
        %v2139 = vrot.slane %v2017, 1
        %v2140 = vsel %vm325, %v2138, %v2139
        %v2141 = vrot.slane %v2018, 1
        %v2142 = vsel %vm325, %v2139, %v2141
        %v2143 = vrot.slane %v2019, 1
        %v2144 = vrot.slane %v2020, 1
        %v2145 = vsel %vm325, %v2143, %v2144
        %v2146 = vrot.slane %v2021, 1
        %v2147 = vsel %vm325, %v2144, %v2146
        %v2148 = vrot.slane %v2022, 1
        %v2149 = vrot.slane %v2023, 1
        %v2150 = vsel %vm325, %v2148, %v2149
        %v2151 = vrot.slane %v2024, 1
        %v2152 = vsel %vm325, %v2149, %v2151
        %v2153 = vrot.slane %v2025, 1
        %v2154 = vrot.slane %v2026, 1
        %v2155 = vsel %vm325, %v2153, %v2154
        %v2156 = vrot.slane %v2027, 1
        %v2157 = vsel %vm325, %v2154, %v2156
        %v2158 = vrot.slane %v2028, 1
        %v2159 = vrot.slane %v2029, 1
        %v2160 = vsel %vm325, %v2158, %v2159
        %v2161 = vrot.slane %v2030, 1
        %v2162 = vsel %vm325, %v2159, %v2161
        %v2163 = vrot.slane %v2031, 1
        %v2164 = vrot.slane %v2032, 1
        %v2165 = vsel %vm325, %v2163, %v2164
        %v2166 = vrot.slane %v2033, 1
        %v2167 = vsel %vm325, %v2164, %v2166
        %v2168 = vrot.slane %v1986, 2
        %v2169 = vrot.slane %v1987, 2
        %v2170 = vsel %vm406, %v2168, %v2169
        %v2171 = vrot.slane %v1988, 2
        %v2172 = vsel %vm406, %v2169, %v2171
        %v2173 = vrot.slane %v1989, 2
        %v2174 = vrot.slane %v1990, 2
        %v2175 = vsel %vm406, %v2173, %v2174
        %v2176 = vrot.slane %v1991, 2
        %v2177 = vsel %vm406, %v2174, %v2176
        %v2178 = vrot.slane %v1992, 2
        %v2179 = vrot.slane %v1993, 2
        %v2180 = vsel %vm406, %v2178, %v2179
        %v2181 = vrot.slane %v1994, 2
        %v2182 = vsel %vm406, %v2179, %v2181
        %v2183 = vrot.slane %v1995, 2
        %v2184 = vrot.slane %v1996, 2
        %v2185 = vsel %vm406, %v2183, %v2184
        %v2186 = vrot.slane %v1997, 2
        %v2187 = vsel %vm406, %v2184, %v2186
        %v2188 = vrot.slane %v1998, 2
        %v2189 = vrot.slane %v1999, 2
        %v2190 = vsel %vm406, %v2188, %v2189
        %v2191 = vrot.slane %v2000, 2
        %v2192 = vsel %vm406, %v2189, %v2191
        %v2193 = vrot.slane %v2001, 2
        %v2194 = vrot.slane %v2002, 2
        %v2195 = vsel %vm406, %v2193, %v2194
        %v2196 = vrot.slane %v2003, 2
        %v2197 = vsel %vm406, %v2194, %v2196
        %v2198 = vrot.slane %v2004, 2
        %v2199 = vrot.slane %v2005, 2
        %v2200 = vsel %vm406, %v2198, %v2199
        %v2201 = vrot.slane %v2006, 2
        %v2202 = vsel %vm406, %v2199, %v2201
        %v2203 = vrot.slane %v2007, 2
        %v2204 = vrot.slane %v2008, 2
        %v2205 = vsel %vm406, %v2203, %v2204
        %v2206 = vrot.slane %v2009, 2
        %v2207 = vsel %vm406, %v2204, %v2206
        %v2208 = vrot.slane %v2010, 2
        %v2209 = vrot.slane %v2011, 2
        %v2210 = vsel %vm406, %v2208, %v2209
        %v2211 = vrot.slane %v2012, 2
        %v2212 = vsel %vm406, %v2209, %v2211
        %v2213 = vrot.slane %v2013, 2
        %v2214 = vrot.slane %v2014, 2
        %v2215 = vsel %vm406, %v2213, %v2214
        %v2216 = vrot.slane %v2015, 2
        %v2217 = vsel %vm406, %v2214, %v2216
        %v2218 = vrot.slane %v2016, 2
        %v2219 = vrot.slane %v2017, 2
        %v2220 = vsel %vm406, %v2218, %v2219
        %v2221 = vrot.slane %v2018, 2
        %v2222 = vsel %vm406, %v2219, %v2221
        %v2223 = vrot.slane %v2019, 2
        %v2224 = vrot.slane %v2020, 2
        %v2225 = vsel %vm406, %v2223, %v2224
        %v2226 = vrot.slane %v2021, 2
        %v2227 = vsel %vm406, %v2224, %v2226
        %v2228 = vrot.slane %v2022, 2
        %v2229 = vrot.slane %v2023, 2
        %v2230 = vsel %vm406, %v2228, %v2229
        %v2231 = vrot.slane %v2024, 2
        %v2232 = vsel %vm406, %v2229, %v2231
        %v2233 = vrot.slane %v2025, 2
        %v2234 = vrot.slane %v2026, 2
        %v2235 = vsel %vm406, %v2233, %v2234
        %v2236 = vrot.slane %v2027, 2
        %v2237 = vsel %vm406, %v2234, %v2236
        %v2238 = vrot.slane %v2028, 2
        %v2239 = vrot.slane %v2029, 2
        %v2240 = vsel %vm406, %v2238, %v2239
        %v2241 = vrot.slane %v2030, 2
        %v2242 = vsel %vm406, %v2239, %v2241
        %v2243 = vrot.slane %v2031, 2
        %v2244 = vrot.slane %v2032, 2
        %v2245 = vsel %vm406, %v2243, %v2244
        %v2246 = vrot.slane %v2033, 2
        %v2247 = vsel %vm406, %v2244, %v2246
        %v2251 = vrot.slane %v2034, 1
        %v2252 = vrot.slane %v2035, 1
        %v2253 = vsel %vm325, %v2251, %v2252
        %v2254 = vrot.slane %v2036, 1
        %v2255 = vsel %vm325, %v2252, %v2254
        %v2256 = vrot.slane %v2034, 2
        %v2257 = vrot.slane %v2035, 2
        %v2258 = vsel %vm406, %v2256, %v2257
        %v2259 = vrot.slane %v2036, 2
        %v2260 = vsel %vm406, %v2257, %v2259
        %v2264 = vrot.slane %v2037, 1
        %v2265 = vrot.slane %v2038, 1
        %v2266 = vsel %vm325, %v2264, %v2265
        %v2267 = vrot.slane %v2039, 1
        %v2268 = vsel %vm325, %v2265, %v2267
        %v2269 = vrot.slane %v2037, 2
        %v2270 = vrot.slane %v2038, 2
        %v2271 = vsel %vm406, %v2269, %v2270
        %v2272 = vrot.slane %v2039, 2
        %v2273 = vsel %vm406, %v2270, %v2272
        %2274 = vrot.lane.b32.xlu0 %v2090, 4
        %v2275 = vpop.permute.xlu0 %2274
        %2276 = vrot.lane.b32.xlu0 %v2092, 4
        %v2277 = vpop.permute.xlu0 %2276
        %2278 = vrot.lane.b32.xlu0 %v2095, 4
        %v2279 = vpop.permute.xlu0 %2278
        %2280 = vrot.lane.b32.xlu0 %v2097, 4
        %v2281 = vpop.permute.xlu0 %2280
        %2282 = vrot.lane.b32.xlu0 %v2100, 4
        %v2283 = vpop.permute.xlu0 %2282
        %2284 = vrot.lane.b32.xlu0 %v2102, 4
        %v2285 = vpop.permute.xlu0 %2284
        %2286 = vrot.lane.b32.xlu0 %v2105, 4
        %v2287 = vpop.permute.xlu0 %2286
        %2288 = vrot.lane.b32.xlu0 %v2107, 4
        %v2289 = vpop.permute.xlu0 %2288
        %2290 = vrot.lane.b32.xlu0 %v2110, 4
        %v2291 = vpop.permute.xlu0 %2290
        %2292 = vrot.lane.b32.xlu0 %v2112, 4
        %v2293 = vpop.permute.xlu0 %2292
        %2294 = vrot.lane.b32.xlu0 %v2115, 4
        %v2295 = vpop.permute.xlu0 %2294
        %2296 = vrot.lane.b32.xlu0 %v2117, 4
        %v2297 = vpop.permute.xlu0 %2296
        %2298 = vrot.lane.b32.xlu0 %v2120, 4
        %v2299 = vpop.permute.xlu0 %2298
        %2300 = vrot.lane.b32.xlu0 %v2122, 4
        %v2301 = vpop.permute.xlu0 %2300
        %2302 = vrot.lane.b32.xlu0 %v2125, 4
        %v2303 = vpop.permute.xlu0 %2302
        %2304 = vrot.lane.b32.xlu0 %v2127, 4
        %v2305 = vpop.permute.xlu0 %2304
        %2306 = vrot.lane.b32.xlu0 %v2130, 4
        %v2307 = vpop.permute.xlu0 %2306
        %2308 = vrot.lane.b32.xlu0 %v2132, 4
        %v2309 = vpop.permute.xlu0 %2308
        %2310 = vrot.lane.b32.xlu0 %v2135, 4
        %v2311 = vpop.permute.xlu0 %2310
        %2312 = vrot.lane.b32.xlu0 %v2137, 4
        %v2313 = vpop.permute.xlu0 %2312
        %2314 = vrot.lane.b32.xlu0 %v2140, 4
        %v2315 = vpop.permute.xlu0 %2314
        %2316 = vrot.lane.b32.xlu0 %v2142, 4
        %v2317 = vpop.permute.xlu0 %2316
        %2318 = vrot.lane.b32.xlu0 %v2145, 4
        %v2319 = vpop.permute.xlu0 %2318
        %2320 = vrot.lane.b32.xlu0 %v2147, 4
        %v2321 = vpop.permute.xlu0 %2320
        %2322 = vrot.lane.b32.xlu0 %v2150, 4
        %v2323 = vpop.permute.xlu0 %2322
        %2324 = vrot.lane.b32.xlu0 %v2152, 4
        %v2325 = vpop.permute.xlu0 %2324
        %2326 = vrot.lane.b32.xlu0 %v2155, 4
        %v2327 = vpop.permute.xlu0 %2326
        %2328 = vrot.lane.b32.xlu0 %v2157, 4
        %v2329 = vpop.permute.xlu0 %2328
        %2330 = vrot.lane.b32.xlu0 %v2160, 4
        %v2331 = vpop.permute.xlu0 %2330
        %2332 = vrot.lane.b32.xlu0 %v2162, 4
        %v2333 = vpop.permute.xlu0 %2332
        %2334 = vrot.lane.b32.xlu0 %v2165, 4
        %v2335 = vpop.permute.xlu0 %2334
        %2336 = vrot.lane.b32.xlu0 %v2167, 4
        %v2337 = vpop.permute.xlu0 %2336
        %2370 = vrot.lane.b32.xlu0 %v2170, 8
        %v2371 = vpop.permute.xlu0 %2370
        %2372 = vrot.lane.b32.xlu0 %v2172, 8
        %v2373 = vpop.permute.xlu0 %2372
        %2374 = vrot.lane.b32.xlu0 %v2175, 8
        %v2375 = vpop.permute.xlu0 %2374
        %2376 = vrot.lane.b32.xlu0 %v2177, 8
        %v2377 = vpop.permute.xlu0 %2376
        %2378 = vrot.lane.b32.xlu0 %v2180, 8
        %v2379 = vpop.permute.xlu0 %2378
        %2380 = vrot.lane.b32.xlu0 %v2182, 8
        %v2381 = vpop.permute.xlu0 %2380
        %2382 = vrot.lane.b32.xlu0 %v2185, 8
        %v2383 = vpop.permute.xlu0 %2382
        %2384 = vrot.lane.b32.xlu0 %v2187, 8
        %v2385 = vpop.permute.xlu0 %2384
        %2386 = vrot.lane.b32.xlu0 %v2190, 8
        %v2387 = vpop.permute.xlu0 %2386
        %2388 = vrot.lane.b32.xlu0 %v2192, 8
        %v2389 = vpop.permute.xlu0 %2388
        %2390 = vrot.lane.b32.xlu0 %v2195, 8
        %v2391 = vpop.permute.xlu0 %2390
        %2392 = vrot.lane.b32.xlu0 %v2197, 8
        %v2393 = vpop.permute.xlu0 %2392
        %2394 = vrot.lane.b32.xlu0 %v2200, 8
        %v2395 = vpop.permute.xlu0 %2394
        %2396 = vrot.lane.b32.xlu0 %v2202, 8
        %v2397 = vpop.permute.xlu0 %2396
        %2398 = vrot.lane.b32.xlu0 %v2205, 8
        %v2399 = vpop.permute.xlu0 %2398
        %2400 = vrot.lane.b32.xlu0 %v2207, 8
        %v2401 = vpop.permute.xlu0 %2400
        %2402 = vrot.lane.b32.xlu0 %v2210, 8
        %v2403 = vpop.permute.xlu0 %2402
        %2404 = vrot.lane.b32.xlu0 %v2212, 8
        %v2405 = vpop.permute.xlu0 %2404
        %2406 = vrot.lane.b32.xlu0 %v2215, 8
        %v2407 = vpop.permute.xlu0 %2406
        %2408 = vrot.lane.b32.xlu0 %v2217, 8
        %v2409 = vpop.permute.xlu0 %2408
        %2410 = vrot.lane.b32.xlu0 %v2220, 8
        %v2411 = vpop.permute.xlu0 %2410
        %2412 = vrot.lane.b32.xlu0 %v2222, 8
        %v2413 = vpop.permute.xlu0 %2412
        %2414 = vrot.lane.b32.xlu0 %v2225, 8
        %v2415 = vpop.permute.xlu0 %2414
        %2416 = vrot.lane.b32.xlu0 %v2227, 8
        %v2417 = vpop.permute.xlu0 %2416
        %2418 = vrot.lane.b32.xlu0 %v2230, 8
        %v2419 = vpop.permute.xlu0 %2418
        %2420 = vrot.lane.b32.xlu0 %v2232, 8
        %v2421 = vpop.permute.xlu0 %2420
        %2422 = vrot.lane.b32.xlu0 %v2235, 8
        %v2423 = vpop.permute.xlu0 %2422
        %2424 = vrot.lane.b32.xlu0 %v2237, 8
        %v2425 = vpop.permute.xlu0 %2424
        %2426 = vrot.lane.b32.xlu0 %v2240, 8
        %v2427 = vpop.permute.xlu0 %2426
        %2428 = vrot.lane.b32.xlu0 %v2242, 8
        %v2429 = vpop.permute.xlu0 %2428
        %2430 = vrot.lane.b32.xlu0 %v2245, 8
        %v2431 = vpop.permute.xlu0 %2430
        %2432 = vrot.lane.b32.xlu0 %v2247, 8
        %v2433 = vpop.permute.xlu0 %2432
        %2466 = vrot.lane.b32.xlu0 %v1989, 12
        %v2467 = vpop.permute.xlu0 %2466
        %2468 = vrot.lane.b32.xlu0 %v1990, 12
        %v2469 = vpop.permute.xlu0 %2468
        %2470 = vrot.lane.b32.xlu0 %v1992, 12
        %v2471 = vpop.permute.xlu0 %2470
        %2472 = vrot.lane.b32.xlu0 %v1993, 12
        %v2473 = vpop.permute.xlu0 %2472
        %2474 = vrot.lane.b32.xlu0 %v1995, 12
        %v2475 = vpop.permute.xlu0 %2474
        %2476 = vrot.lane.b32.xlu0 %v1996, 12
        %v2477 = vpop.permute.xlu0 %2476
        %2478 = vrot.lane.b32.xlu0 %v1998, 12
        %v2479 = vpop.permute.xlu0 %2478
        %2480 = vrot.lane.b32.xlu0 %v1999, 12
        %v2481 = vpop.permute.xlu0 %2480
        %2482 = vrot.lane.b32.xlu0 %v2001, 12
        %v2483 = vpop.permute.xlu0 %2482
        %2484 = vrot.lane.b32.xlu0 %v2002, 12
        %v2485 = vpop.permute.xlu0 %2484
        %2486 = vrot.lane.b32.xlu0 %v2004, 12
        %v2487 = vpop.permute.xlu0 %2486
        %2488 = vrot.lane.b32.xlu0 %v2005, 12
        %v2489 = vpop.permute.xlu0 %2488
        %2490 = vrot.lane.b32.xlu0 %v2007, 12
        %v2491 = vpop.permute.xlu0 %2490
        %2492 = vrot.lane.b32.xlu0 %v2008, 12
        %v2493 = vpop.permute.xlu0 %2492
        %2494 = vrot.lane.b32.xlu0 %v2010, 12
        %v2495 = vpop.permute.xlu0 %2494
        %2496 = vrot.lane.b32.xlu0 %v2011, 12
        %v2497 = vpop.permute.xlu0 %2496
        %2498 = vrot.lane.b32.xlu0 %v2013, 12
        %v2499 = vpop.permute.xlu0 %2498
        %2500 = vrot.lane.b32.xlu0 %v2014, 12
        %v2501 = vpop.permute.xlu0 %2500
        %2502 = vrot.lane.b32.xlu0 %v2016, 12
        %v2503 = vpop.permute.xlu0 %2502
        %2504 = vrot.lane.b32.xlu0 %v2017, 12
        %v2505 = vpop.permute.xlu0 %2504
        %2506 = vrot.lane.b32.xlu0 %v2019, 12
        %v2507 = vpop.permute.xlu0 %2506
        %2508 = vrot.lane.b32.xlu0 %v2020, 12
        %v2509 = vpop.permute.xlu0 %2508
        %2510 = vrot.lane.b32.xlu0 %v2022, 12
        %v2511 = vpop.permute.xlu0 %2510
        %2512 = vrot.lane.b32.xlu0 %v2023, 12
        %v2513 = vpop.permute.xlu0 %2512
        %2514 = vrot.lane.b32.xlu0 %v2025, 12
        %v2515 = vpop.permute.xlu0 %2514
        %2516 = vrot.lane.b32.xlu0 %v2026, 12
        %v2517 = vpop.permute.xlu0 %2516
        %2518 = vrot.lane.b32.xlu0 %v2028, 12
        %v2519 = vpop.permute.xlu0 %2518
        %2520 = vrot.lane.b32.xlu0 %v2029, 12
        %v2521 = vpop.permute.xlu0 %2520
        %2522 = vrot.lane.b32.xlu0 %v2031, 12
        %v2523 = vpop.permute.xlu0 %2522
        %2524 = vrot.lane.b32.xlu0 %v2032, 12
        %v2525 = vpop.permute.xlu0 %2524
        %2526 = vrot.lane.b32.xlu0 %v2034, 12
        %v2527 = vpop.permute.xlu0 %2526
        %2528 = vrot.lane.b32.xlu0 %v2035, 12
        %v2529 = vpop.permute.xlu0 %2528
        %2562 = vrot.lane.b32.xlu0 %v2095, 16
        %v2563 = vpop.permute.xlu0 %2562
        %2564 = vrot.lane.b32.xlu0 %v2097, 16
        %v2565 = vpop.permute.xlu0 %2564
        %2566 = vrot.lane.b32.xlu0 %v2100, 16
        %v2567 = vpop.permute.xlu0 %2566
        %2568 = vrot.lane.b32.xlu0 %v2102, 16
        %v2569 = vpop.permute.xlu0 %2568
        %2570 = vrot.lane.b32.xlu0 %v2105, 16
        %v2571 = vpop.permute.xlu0 %2570
        %2572 = vrot.lane.b32.xlu0 %v2107, 16
        %v2573 = vpop.permute.xlu0 %2572
        %2574 = vrot.lane.b32.xlu0 %v2110, 16
        %v2575 = vpop.permute.xlu0 %2574
        %2576 = vrot.lane.b32.xlu0 %v2112, 16
        %v2577 = vpop.permute.xlu0 %2576
        %2578 = vrot.lane.b32.xlu0 %v2115, 16
        %v2579 = vpop.permute.xlu0 %2578
        %2580 = vrot.lane.b32.xlu0 %v2117, 16
        %v2581 = vpop.permute.xlu0 %2580
        %2582 = vrot.lane.b32.xlu0 %v2120, 16
        %v2583 = vpop.permute.xlu0 %2582
        %2584 = vrot.lane.b32.xlu0 %v2122, 16
        %v2585 = vpop.permute.xlu0 %2584
        %2586 = vrot.lane.b32.xlu0 %v2125, 16
        %v2587 = vpop.permute.xlu0 %2586
        %2588 = vrot.lane.b32.xlu0 %v2127, 16
        %v2589 = vpop.permute.xlu0 %2588
        %2590 = vrot.lane.b32.xlu0 %v2130, 16
        %v2591 = vpop.permute.xlu0 %2590
        %2592 = vrot.lane.b32.xlu0 %v2132, 16
        %v2593 = vpop.permute.xlu0 %2592
        %2594 = vrot.lane.b32.xlu0 %v2135, 16
        %v2595 = vpop.permute.xlu0 %2594
        %2596 = vrot.lane.b32.xlu0 %v2137, 16
        %v2597 = vpop.permute.xlu0 %2596
        %2598 = vrot.lane.b32.xlu0 %v2140, 16
        %v2599 = vpop.permute.xlu0 %2598
        %2600 = vrot.lane.b32.xlu0 %v2142, 16
        %v2601 = vpop.permute.xlu0 %2600
        %2602 = vrot.lane.b32.xlu0 %v2145, 16
        %v2603 = vpop.permute.xlu0 %2602
        %2604 = vrot.lane.b32.xlu0 %v2147, 16
        %v2605 = vpop.permute.xlu0 %2604
        %2606 = vrot.lane.b32.xlu0 %v2150, 16
        %v2607 = vpop.permute.xlu0 %2606
        %2608 = vrot.lane.b32.xlu0 %v2152, 16
        %v2609 = vpop.permute.xlu0 %2608
        %2610 = vrot.lane.b32.xlu0 %v2155, 16
        %v2611 = vpop.permute.xlu0 %2610
        %2612 = vrot.lane.b32.xlu0 %v2157, 16
        %v2613 = vpop.permute.xlu0 %2612
        %2614 = vrot.lane.b32.xlu0 %v2160, 16
        %v2615 = vpop.permute.xlu0 %2614
        %2616 = vrot.lane.b32.xlu0 %v2162, 16
        %v2617 = vpop.permute.xlu0 %2616
        %2618 = vrot.lane.b32.xlu0 %v2165, 16
        %v2619 = vpop.permute.xlu0 %2618
        %2620 = vrot.lane.b32.xlu0 %v2167, 16
        %v2621 = vpop.permute.xlu0 %2620
        %2622 = vrot.lane.b32.xlu0 %v2253, 16
        %v2623 = vpop.permute.xlu0 %2622
        %2624 = vrot.lane.b32.xlu0 %v2255, 16
        %v2625 = vpop.permute.xlu0 %2624
        %2658 = vrot.lane.b32.xlu0 %v2175, 20
        %v2659 = vpop.permute.xlu0 %2658
        %2660 = vrot.lane.b32.xlu0 %v2177, 20
        %v2661 = vpop.permute.xlu0 %2660
        %2662 = vrot.lane.b32.xlu0 %v2180, 20
        %v2663 = vpop.permute.xlu0 %2662
        %2664 = vrot.lane.b32.xlu0 %v2182, 20
        %v2665 = vpop.permute.xlu0 %2664
        %2666 = vrot.lane.b32.xlu0 %v2185, 20
        %v2667 = vpop.permute.xlu0 %2666
        %2668 = vrot.lane.b32.xlu0 %v2187, 20
        %v2669 = vpop.permute.xlu0 %2668
        %2670 = vrot.lane.b32.xlu0 %v2190, 20
        %v2671 = vpop.permute.xlu0 %2670
        %2672 = vrot.lane.b32.xlu0 %v2192, 20
        %v2673 = vpop.permute.xlu0 %2672
        %2674 = vrot.lane.b32.xlu0 %v2195, 20
        %v2675 = vpop.permute.xlu0 %2674
        %2676 = vrot.lane.b32.xlu0 %v2197, 20
        %v2677 = vpop.permute.xlu0 %2676
        %2678 = vrot.lane.b32.xlu0 %v2200, 20
        %v2679 = vpop.permute.xlu0 %2678
        %2680 = vrot.lane.b32.xlu0 %v2202, 20
        %v2681 = vpop.permute.xlu0 %2680
        %2682 = vrot.lane.b32.xlu0 %v2205, 20
        %v2683 = vpop.permute.xlu0 %2682
        %2684 = vrot.lane.b32.xlu0 %v2207, 20
        %v2685 = vpop.permute.xlu0 %2684
        %2686 = vrot.lane.b32.xlu0 %v2210, 20
        %v2687 = vpop.permute.xlu0 %2686
        %2688 = vrot.lane.b32.xlu0 %v2212, 20
        %v2689 = vpop.permute.xlu0 %2688
        %2690 = vrot.lane.b32.xlu0 %v2215, 20
        %v2691 = vpop.permute.xlu0 %2690
        %2692 = vrot.lane.b32.xlu0 %v2217, 20
        %v2693 = vpop.permute.xlu0 %2692
        %2694 = vrot.lane.b32.xlu0 %v2220, 20
        %v2695 = vpop.permute.xlu0 %2694
        %2696 = vrot.lane.b32.xlu0 %v2222, 20
        %v2697 = vpop.permute.xlu0 %2696
        %2698 = vrot.lane.b32.xlu0 %v2225, 20
        %v2699 = vpop.permute.xlu0 %2698
        %2700 = vrot.lane.b32.xlu0 %v2227, 20
        %v2701 = vpop.permute.xlu0 %2700
        %2702 = vrot.lane.b32.xlu0 %v2230, 20
        %v2703 = vpop.permute.xlu0 %2702
        %2704 = vrot.lane.b32.xlu0 %v2232, 20
        %v2705 = vpop.permute.xlu0 %2704
        %2706 = vrot.lane.b32.xlu0 %v2235, 20
        %v2707 = vpop.permute.xlu0 %2706
        %2708 = vrot.lane.b32.xlu0 %v2237, 20
        %v2709 = vpop.permute.xlu0 %2708
        %2710 = vrot.lane.b32.xlu0 %v2240, 20
        %v2711 = vpop.permute.xlu0 %2710
        %2712 = vrot.lane.b32.xlu0 %v2242, 20
        %v2713 = vpop.permute.xlu0 %2712
        %2714 = vrot.lane.b32.xlu0 %v2245, 20
        %v2715 = vpop.permute.xlu0 %2714
        %2716 = vrot.lane.b32.xlu0 %v2247, 20
        %v2717 = vpop.permute.xlu0 %2716
        %2718 = vrot.lane.b32.xlu0 %v2258, 20
        %v2719 = vpop.permute.xlu0 %2718
        %2720 = vrot.lane.b32.xlu0 %v2260, 20
        %v2721 = vpop.permute.xlu0 %2720
        %2754 = vrot.lane.b32.xlu0 %v1992, 24
        %v2755 = vpop.permute.xlu0 %2754
        %2756 = vrot.lane.b32.xlu0 %v1993, 24
        %v2757 = vpop.permute.xlu0 %2756
        %2758 = vrot.lane.b32.xlu0 %v1995, 24
        %v2759 = vpop.permute.xlu0 %2758
        %2760 = vrot.lane.b32.xlu0 %v1996, 24
        %v2761 = vpop.permute.xlu0 %2760
        %2762 = vrot.lane.b32.xlu0 %v1998, 24
        %v2763 = vpop.permute.xlu0 %2762
        %2764 = vrot.lane.b32.xlu0 %v1999, 24
        %v2765 = vpop.permute.xlu0 %2764
        %2766 = vrot.lane.b32.xlu0 %v2001, 24
        %v2767 = vpop.permute.xlu0 %2766
        %2768 = vrot.lane.b32.xlu0 %v2002, 24
        %v2769 = vpop.permute.xlu0 %2768
        %2770 = vrot.lane.b32.xlu0 %v2004, 24
        %v2771 = vpop.permute.xlu0 %2770
        %2772 = vrot.lane.b32.xlu0 %v2005, 24
        %v2773 = vpop.permute.xlu0 %2772
        %2774 = vrot.lane.b32.xlu0 %v2007, 24
        %v2775 = vpop.permute.xlu0 %2774
        %2776 = vrot.lane.b32.xlu0 %v2008, 24
        %v2777 = vpop.permute.xlu0 %2776
        %2778 = vrot.lane.b32.xlu0 %v2010, 24
        %v2779 = vpop.permute.xlu0 %2778
        %2780 = vrot.lane.b32.xlu0 %v2011, 24
        %v2781 = vpop.permute.xlu0 %2780
        %2782 = vrot.lane.b32.xlu0 %v2013, 24
        %v2783 = vpop.permute.xlu0 %2782
        %2784 = vrot.lane.b32.xlu0 %v2014, 24
        %v2785 = vpop.permute.xlu0 %2784
        %2786 = vrot.lane.b32.xlu0 %v2016, 24
        %v2787 = vpop.permute.xlu0 %2786
        %2788 = vrot.lane.b32.xlu0 %v2017, 24
        %v2789 = vpop.permute.xlu0 %2788
        %2790 = vrot.lane.b32.xlu0 %v2019, 24
        %v2791 = vpop.permute.xlu0 %2790
        %2792 = vrot.lane.b32.xlu0 %v2020, 24
        %v2793 = vpop.permute.xlu0 %2792
        %2794 = vrot.lane.b32.xlu0 %v2022, 24
        %v2795 = vpop.permute.xlu0 %2794
        %2796 = vrot.lane.b32.xlu0 %v2023, 24
        %v2797 = vpop.permute.xlu0 %2796
        %2798 = vrot.lane.b32.xlu0 %v2025, 24
        %v2799 = vpop.permute.xlu0 %2798
        %2800 = vrot.lane.b32.xlu0 %v2026, 24
        %v2801 = vpop.permute.xlu0 %2800
        %2802 = vrot.lane.b32.xlu0 %v2028, 24
        %v2803 = vpop.permute.xlu0 %2802
        %2804 = vrot.lane.b32.xlu0 %v2029, 24
        %v2805 = vpop.permute.xlu0 %2804
        %2806 = vrot.lane.b32.xlu0 %v2031, 24
        %v2807 = vpop.permute.xlu0 %2806
        %2808 = vrot.lane.b32.xlu0 %v2032, 24
        %v2809 = vpop.permute.xlu0 %2808
        %2810 = vrot.lane.b32.xlu0 %v2034, 24
        %v2811 = vpop.permute.xlu0 %2810
        %2812 = vrot.lane.b32.xlu0 %v2035, 24
        %v2813 = vpop.permute.xlu0 %2812
        %2814 = vrot.lane.b32.xlu0 %v2037, 24
        %v2815 = vpop.permute.xlu0 %2814
        %2816 = vrot.lane.b32.xlu0 %v2038, 24
        %v2817 = vpop.permute.xlu0 %2816
        %2850 = vrot.lane.b32.xlu0 %v2100, 28
        %v2851 = vpop.permute.xlu0 %2850
        %2852 = vrot.lane.b32.xlu0 %v2102, 28
        %v2853 = vpop.permute.xlu0 %2852
        %2854 = vrot.lane.b32.xlu0 %v2105, 28
        %v2855 = vpop.permute.xlu0 %2854
        %2856 = vrot.lane.b32.xlu0 %v2107, 28
        %v2857 = vpop.permute.xlu0 %2856
        %2858 = vrot.lane.b32.xlu0 %v2110, 28
        %v2859 = vpop.permute.xlu0 %2858
        %2860 = vrot.lane.b32.xlu0 %v2112, 28
        %v2861 = vpop.permute.xlu0 %2860
        %2862 = vrot.lane.b32.xlu0 %v2115, 28
        %v2863 = vpop.permute.xlu0 %2862
        %2864 = vrot.lane.b32.xlu0 %v2117, 28
        %v2865 = vpop.permute.xlu0 %2864
        %2866 = vrot.lane.b32.xlu0 %v2120, 28
        %v2867 = vpop.permute.xlu0 %2866
        %2868 = vrot.lane.b32.xlu0 %v2122, 28
        %v2869 = vpop.permute.xlu0 %2868
        %2870 = vrot.lane.b32.xlu0 %v2125, 28
        %v2871 = vpop.permute.xlu0 %2870
        %2872 = vrot.lane.b32.xlu0 %v2127, 28
        %v2873 = vpop.permute.xlu0 %2872
        %2874 = vrot.lane.b32.xlu0 %v2130, 28
        %v2875 = vpop.permute.xlu0 %2874
        %2876 = vrot.lane.b32.xlu0 %v2132, 28
        %v2877 = vpop.permute.xlu0 %2876
        %2878 = vrot.lane.b32.xlu0 %v2135, 28
        %v2879 = vpop.permute.xlu0 %2878
        %2880 = vrot.lane.b32.xlu0 %v2137, 28
        %v2881 = vpop.permute.xlu0 %2880
        %2882 = vrot.lane.b32.xlu0 %v2140, 28
        %v2883 = vpop.permute.xlu0 %2882
        %2884 = vrot.lane.b32.xlu0 %v2142, 28
        %v2885 = vpop.permute.xlu0 %2884
        %2886 = vrot.lane.b32.xlu0 %v2145, 28
        %v2887 = vpop.permute.xlu0 %2886
        %2888 = vrot.lane.b32.xlu0 %v2147, 28
        %v2889 = vpop.permute.xlu0 %2888
        %2890 = vrot.lane.b32.xlu0 %v2150, 28
        %v2891 = vpop.permute.xlu0 %2890
        %2892 = vrot.lane.b32.xlu0 %v2152, 28
        %v2893 = vpop.permute.xlu0 %2892
        %2894 = vrot.lane.b32.xlu0 %v2155, 28
        %v2895 = vpop.permute.xlu0 %2894
        %2896 = vrot.lane.b32.xlu0 %v2157, 28
        %v2897 = vpop.permute.xlu0 %2896
        %2898 = vrot.lane.b32.xlu0 %v2160, 28
        %v2899 = vpop.permute.xlu0 %2898
        %2900 = vrot.lane.b32.xlu0 %v2162, 28
        %v2901 = vpop.permute.xlu0 %2900
        %2902 = vrot.lane.b32.xlu0 %v2165, 28
        %v2903 = vpop.permute.xlu0 %2902
        %2904 = vrot.lane.b32.xlu0 %v2167, 28
        %v2905 = vpop.permute.xlu0 %2904
        %2906 = vrot.lane.b32.xlu0 %v2253, 28
        %v2907 = vpop.permute.xlu0 %2906
        %2908 = vrot.lane.b32.xlu0 %v2255, 28
        %v2909 = vpop.permute.xlu0 %2908
        %2910 = vrot.lane.b32.xlu0 %v2266, 28
        %v2911 = vpop.permute.xlu0 %2910
        %2912 = vrot.lane.b32.xlu0 %v2268, 28
        %v2913 = vpop.permute.xlu0 %2912
        %2946 = vrot.lane.b32.xlu0 %v2180, 32
        %v2947 = vpop.permute.xlu0 %2946
        %2948 = vrot.lane.b32.xlu0 %v2182, 32
        %v2949 = vpop.permute.xlu0 %2948
        %2950 = vrot.lane.b32.xlu0 %v2185, 32
        %v2951 = vpop.permute.xlu0 %2950
        %2952 = vrot.lane.b32.xlu0 %v2187, 32
        %v2953 = vpop.permute.xlu0 %2952
        %2954 = vrot.lane.b32.xlu0 %v2190, 32
        %v2955 = vpop.permute.xlu0 %2954
        %2956 = vrot.lane.b32.xlu0 %v2192, 32
        %v2957 = vpop.permute.xlu0 %2956
        %2958 = vrot.lane.b32.xlu0 %v2195, 32
        %v2959 = vpop.permute.xlu0 %2958
        %2960 = vrot.lane.b32.xlu0 %v2197, 32
        %v2961 = vpop.permute.xlu0 %2960
        %2962 = vrot.lane.b32.xlu0 %v2200, 32
        %v2963 = vpop.permute.xlu0 %2962
        %2964 = vrot.lane.b32.xlu0 %v2202, 32
        %v2965 = vpop.permute.xlu0 %2964
        %2966 = vrot.lane.b32.xlu0 %v2205, 32
        %v2967 = vpop.permute.xlu0 %2966
        %2968 = vrot.lane.b32.xlu0 %v2207, 32
        %v2969 = vpop.permute.xlu0 %2968
        %2970 = vrot.lane.b32.xlu0 %v2210, 32
        %v2971 = vpop.permute.xlu0 %2970
        %2972 = vrot.lane.b32.xlu0 %v2212, 32
        %v2973 = vpop.permute.xlu0 %2972
        %2974 = vrot.lane.b32.xlu0 %v2215, 32
        %v2975 = vpop.permute.xlu0 %2974
        %2976 = vrot.lane.b32.xlu0 %v2217, 32
        %v2977 = vpop.permute.xlu0 %2976
        %2978 = vrot.lane.b32.xlu0 %v2220, 32
        %v2979 = vpop.permute.xlu0 %2978
        %2980 = vrot.lane.b32.xlu0 %v2222, 32
        %v2981 = vpop.permute.xlu0 %2980
        %2982 = vrot.lane.b32.xlu0 %v2225, 32
        %v2983 = vpop.permute.xlu0 %2982
        %2984 = vrot.lane.b32.xlu0 %v2227, 32
        %v2985 = vpop.permute.xlu0 %2984
        %2986 = vrot.lane.b32.xlu0 %v2230, 32
        %v2987 = vpop.permute.xlu0 %2986
        %2988 = vrot.lane.b32.xlu0 %v2232, 32
        %v2989 = vpop.permute.xlu0 %2988
        %2990 = vrot.lane.b32.xlu0 %v2235, 32
        %v2991 = vpop.permute.xlu0 %2990
        %2992 = vrot.lane.b32.xlu0 %v2237, 32
        %v2993 = vpop.permute.xlu0 %2992
        %2994 = vrot.lane.b32.xlu0 %v2240, 32
        %v2995 = vpop.permute.xlu0 %2994
        %2996 = vrot.lane.b32.xlu0 %v2242, 32
        %v2997 = vpop.permute.xlu0 %2996
        %2998 = vrot.lane.b32.xlu0 %v2245, 32
        %v2999 = vpop.permute.xlu0 %2998
        %3000 = vrot.lane.b32.xlu0 %v2247, 32
        %v3001 = vpop.permute.xlu0 %3000
        %3002 = vrot.lane.b32.xlu0 %v2258, 32
        %v3003 = vpop.permute.xlu0 %3002
        %3004 = vrot.lane.b32.xlu0 %v2260, 32
        %v3005 = vpop.permute.xlu0 %3004
        %3006 = vrot.lane.b32.xlu0 %v2271, 32
        %v3007 = vpop.permute.xlu0 %3006
        %3008 = vrot.lane.b32.xlu0 %v2273, 32
        %v3009 = vpop.permute.xlu0 %3008
        %v3042 = vsel %vm1281, %v1986, %v2275
        %v3043 = vsel %vm1281, %v1987, %v2277
        %v3044 = vsel %vm1281, %v1989, %v2279
        %v3045 = vsel %vm1281, %v1990, %v2281
        %v3046 = vsel %vm1281, %v1992, %v2283
        %v3047 = vsel %vm1281, %v1993, %v2285
        %v3048 = vsel %vm1281, %v1995, %v2287
        %v3049 = vsel %vm1281, %v1996, %v2289
        %v3050 = vsel %vm1281, %v1998, %v2291
        %v3051 = vsel %vm1281, %v1999, %v2293
        %v3052 = vsel %vm1281, %v2001, %v2295
        %v3053 = vsel %vm1281, %v2002, %v2297
        %v3054 = vsel %vm1281, %v2004, %v2299
        %v3055 = vsel %vm1281, %v2005, %v2301
        %v3056 = vsel %vm1281, %v2007, %v2303
        %v3057 = vsel %vm1281, %v2008, %v2305
        %v3058 = vsel %vm1281, %v2010, %v2307
        %v3059 = vsel %vm1281, %v2011, %v2309
        %v3060 = vsel %vm1281, %v2013, %v2311
        %v3061 = vsel %vm1281, %v2014, %v2313
        %v3062 = vsel %vm1281, %v2016, %v2315
        %v3063 = vsel %vm1281, %v2017, %v2317
        %v3064 = vsel %vm1281, %v2019, %v2319
        %v3065 = vsel %vm1281, %v2020, %v2321
        %v3066 = vsel %vm1281, %v2022, %v2323
        %v3067 = vsel %vm1281, %v2023, %v2325
        %v3068 = vsel %vm1281, %v2025, %v2327
        %v3069 = vsel %vm1281, %v2026, %v2329
        %v3070 = vsel %vm1281, %v2028, %v2331
        %v3071 = vsel %vm1281, %v2029, %v2333
        %v3072 = vsel %vm1281, %v2031, %v2335
        %v3073 = vsel %vm1281, %v2032, %v2337
        %v3074 = vsel %vm1314, %v3042, %v2371
        %v3075 = vsel %vm1314, %v3043, %v2373
        %v3076 = vsel %vm1314, %v3044, %v2375
        %v3077 = vsel %vm1314, %v3045, %v2377
        %v3078 = vsel %vm1314, %v3046, %v2379
        %v3079 = vsel %vm1314, %v3047, %v2381
        %v3080 = vsel %vm1314, %v3048, %v2383
        %v3081 = vsel %vm1314, %v3049, %v2385
        %v3082 = vsel %vm1314, %v3050, %v2387
        %v3083 = vsel %vm1314, %v3051, %v2389
        %v3084 = vsel %vm1314, %v3052, %v2391
        %v3085 = vsel %vm1314, %v3053, %v2393
        %v3086 = vsel %vm1314, %v3054, %v2395
        %v3087 = vsel %vm1314, %v3055, %v2397
        %v3088 = vsel %vm1314, %v3056, %v2399
        %v3089 = vsel %vm1314, %v3057, %v2401
        %v3090 = vsel %vm1314, %v3058, %v2403
        %v3091 = vsel %vm1314, %v3059, %v2405
        %v3092 = vsel %vm1314, %v3060, %v2407
        %v3093 = vsel %vm1314, %v3061, %v2409
        %v3094 = vsel %vm1314, %v3062, %v2411
        %v3095 = vsel %vm1314, %v3063, %v2413
        %v3096 = vsel %vm1314, %v3064, %v2415
        %v3097 = vsel %vm1314, %v3065, %v2417
        %v3098 = vsel %vm1314, %v3066, %v2419
        %v3099 = vsel %vm1314, %v3067, %v2421
        %v3100 = vsel %vm1314, %v3068, %v2423
        %v3101 = vsel %vm1314, %v3069, %v2425
        %v3102 = vsel %vm1314, %v3070, %v2427
        %v3103 = vsel %vm1314, %v3071, %v2429
        %v3104 = vsel %vm1314, %v3072, %v2431
        %v3105 = vsel %vm1314, %v3073, %v2433
        %v3106 = vsel %vm1347, %v3074, %v2467
        %v3107 = vsel %vm1347, %v3075, %v2469
        %v3108 = vsel %vm1347, %v3076, %v2471
        %v3109 = vsel %vm1347, %v3077, %v2473
        %v3110 = vsel %vm1347, %v3078, %v2475
        %v3111 = vsel %vm1347, %v3079, %v2477
        %v3112 = vsel %vm1347, %v3080, %v2479
        %v3113 = vsel %vm1347, %v3081, %v2481
        %v3114 = vsel %vm1347, %v3082, %v2483
        %v3115 = vsel %vm1347, %v3083, %v2485
        %v3116 = vsel %vm1347, %v3084, %v2487
        %v3117 = vsel %vm1347, %v3085, %v2489
        %v3118 = vsel %vm1347, %v3086, %v2491
        %v3119 = vsel %vm1347, %v3087, %v2493
        %v3120 = vsel %vm1347, %v3088, %v2495
        %v3121 = vsel %vm1347, %v3089, %v2497
        %v3122 = vsel %vm1347, %v3090, %v2499
        %v3123 = vsel %vm1347, %v3091, %v2501
        %v3124 = vsel %vm1347, %v3092, %v2503
        %v3125 = vsel %vm1347, %v3093, %v2505
        %v3126 = vsel %vm1347, %v3094, %v2507
        %v3127 = vsel %vm1347, %v3095, %v2509
        %v3128 = vsel %vm1347, %v3096, %v2511
        %v3129 = vsel %vm1347, %v3097, %v2513
        %v3130 = vsel %vm1347, %v3098, %v2515
        %v3131 = vsel %vm1347, %v3099, %v2517
        %v3132 = vsel %vm1347, %v3100, %v2519
        %v3133 = vsel %vm1347, %v3101, %v2521
        %v3134 = vsel %vm1347, %v3102, %v2523
        %v3135 = vsel %vm1347, %v3103, %v2525
        %v3136 = vsel %vm1347, %v3104, %v2527
        %v3137 = vsel %vm1347, %v3105, %v2529
        %v3138 = vsel %vm1380, %v3106, %v2563
        %v3139 = vsel %vm1380, %v3107, %v2565
        %v3140 = vsel %vm1380, %v3108, %v2567
        %v3141 = vsel %vm1380, %v3109, %v2569
        %v3142 = vsel %vm1380, %v3110, %v2571
        %v3143 = vsel %vm1380, %v3111, %v2573
        %v3144 = vsel %vm1380, %v3112, %v2575
        %v3145 = vsel %vm1380, %v3113, %v2577
        %v3146 = vsel %vm1380, %v3114, %v2579
        %v3147 = vsel %vm1380, %v3115, %v2581
        %v3148 = vsel %vm1380, %v3116, %v2583
        %v3149 = vsel %vm1380, %v3117, %v2585
        %v3150 = vsel %vm1380, %v3118, %v2587
        %v3151 = vsel %vm1380, %v3119, %v2589
        %v3152 = vsel %vm1380, %v3120, %v2591
        %v3153 = vsel %vm1380, %v3121, %v2593
        %v3154 = vsel %vm1380, %v3122, %v2595
        %v3155 = vsel %vm1380, %v3123, %v2597
        %v3156 = vsel %vm1380, %v3124, %v2599
        %v3157 = vsel %vm1380, %v3125, %v2601
        %v3158 = vsel %vm1380, %v3126, %v2603
        %v3159 = vsel %vm1380, %v3127, %v2605
        %v3160 = vsel %vm1380, %v3128, %v2607
        %v3161 = vsel %vm1380, %v3129, %v2609
        %v3162 = vsel %vm1380, %v3130, %v2611
        %v3163 = vsel %vm1380, %v3131, %v2613
        %v3164 = vsel %vm1380, %v3132, %v2615
        %v3165 = vsel %vm1380, %v3133, %v2617
        %v3166 = vsel %vm1380, %v3134, %v2619
        %v3167 = vsel %vm1380, %v3135, %v2621
        %v3168 = vsel %vm1380, %v3136, %v2623
        %v3169 = vsel %vm1380, %v3137, %v2625
        %v3170 = vsel %vm1413, %v3138, %v2659
        %v3171 = vsel %vm1413, %v3139, %v2661
        %v3172 = vsel %vm1413, %v3140, %v2663
        %v3173 = vsel %vm1413, %v3141, %v2665
        %v3174 = vsel %vm1413, %v3142, %v2667
        %v3175 = vsel %vm1413, %v3143, %v2669
        %v3176 = vsel %vm1413, %v3144, %v2671
        %v3177 = vsel %vm1413, %v3145, %v2673
        %v3178 = vsel %vm1413, %v3146, %v2675
        %v3179 = vsel %vm1413, %v3147, %v2677
        %v3180 = vsel %vm1413, %v3148, %v2679
        %v3181 = vsel %vm1413, %v3149, %v2681
        %v3182 = vsel %vm1413, %v3150, %v2683
        %v3183 = vsel %vm1413, %v3151, %v2685
        %v3184 = vsel %vm1413, %v3152, %v2687
        %v3185 = vsel %vm1413, %v3153, %v2689
        %v3186 = vsel %vm1413, %v3154, %v2691
        %v3187 = vsel %vm1413, %v3155, %v2693
        %v3188 = vsel %vm1413, %v3156, %v2695
        %v3189 = vsel %vm1413, %v3157, %v2697
        %v3190 = vsel %vm1413, %v3158, %v2699
        %v3191 = vsel %vm1413, %v3159, %v2701
        %v3192 = vsel %vm1413, %v3160, %v2703
        %v3193 = vsel %vm1413, %v3161, %v2705
        %v3194 = vsel %vm1413, %v3162, %v2707
        %v3195 = vsel %vm1413, %v3163, %v2709
        %v3196 = vsel %vm1413, %v3164, %v2711
        %v3197 = vsel %vm1413, %v3165, %v2713
        %v3198 = vsel %vm1413, %v3166, %v2715
        %v3199 = vsel %vm1413, %v3167, %v2717
        %v3200 = vsel %vm1413, %v3168, %v2719
        %v3201 = vsel %vm1413, %v3169, %v2721
        %v3202 = vsel %vm1446, %v3170, %v2755
        %v3203 = vsel %vm1446, %v3171, %v2757
        %v3204 = vsel %vm1446, %v3172, %v2759
        %v3205 = vsel %vm1446, %v3173, %v2761
        %v3206 = vsel %vm1446, %v3174, %v2763
        %v3207 = vsel %vm1446, %v3175, %v2765
        %v3208 = vsel %vm1446, %v3176, %v2767
        %v3209 = vsel %vm1446, %v3177, %v2769
        %v3210 = vsel %vm1446, %v3178, %v2771
        %v3211 = vsel %vm1446, %v3179, %v2773
        %v3212 = vsel %vm1446, %v3180, %v2775
        %v3213 = vsel %vm1446, %v3181, %v2777
        %v3214 = vsel %vm1446, %v3182, %v2779
        %v3215 = vsel %vm1446, %v3183, %v2781
        %v3216 = vsel %vm1446, %v3184, %v2783
        %v3217 = vsel %vm1446, %v3185, %v2785
        %v3218 = vsel %vm1446, %v3186, %v2787
        %v3219 = vsel %vm1446, %v3187, %v2789
        %v3220 = vsel %vm1446, %v3188, %v2791
        %v3221 = vsel %vm1446, %v3189, %v2793
        %v3222 = vsel %vm1446, %v3190, %v2795
        %v3223 = vsel %vm1446, %v3191, %v2797
        %v3224 = vsel %vm1446, %v3192, %v2799
        %v3225 = vsel %vm1446, %v3193, %v2801
        %v3226 = vsel %vm1446, %v3194, %v2803
        %v3227 = vsel %vm1446, %v3195, %v2805
        %v3228 = vsel %vm1446, %v3196, %v2807
        %v3229 = vsel %vm1446, %v3197, %v2809
        %v3230 = vsel %vm1446, %v3198, %v2811
        %v3231 = vsel %vm1446, %v3199, %v2813
        %v3232 = vsel %vm1446, %v3200, %v2815
        %v3233 = vsel %vm1446, %v3201, %v2817
        %v3234 = vsel %vm1479, %v3202, %v2851
        %v3235 = vsel %vm1479, %v3203, %v2853
        %v3236 = vsel %vm1479, %v3204, %v2855
        %v3237 = vsel %vm1479, %v3205, %v2857
        %v3238 = vsel %vm1479, %v3206, %v2859
        %v3239 = vsel %vm1479, %v3207, %v2861
        %v3240 = vsel %vm1479, %v3208, %v2863
        %v3241 = vsel %vm1479, %v3209, %v2865
        %v3242 = vsel %vm1479, %v3210, %v2867
        %v3243 = vsel %vm1479, %v3211, %v2869
        %v3244 = vsel %vm1479, %v3212, %v2871
        %v3245 = vsel %vm1479, %v3213, %v2873
        %v3246 = vsel %vm1479, %v3214, %v2875
        %v3247 = vsel %vm1479, %v3215, %v2877
        %v3248 = vsel %vm1479, %v3216, %v2879
        %v3249 = vsel %vm1479, %v3217, %v2881
        %v3250 = vsel %vm1479, %v3218, %v2883
        %v3251 = vsel %vm1479, %v3219, %v2885
        %v3252 = vsel %vm1479, %v3220, %v2887
        %v3253 = vsel %vm1479, %v3221, %v2889
        %v3254 = vsel %vm1479, %v3222, %v2891
        %v3255 = vsel %vm1479, %v3223, %v2893
        %v3256 = vsel %vm1479, %v3224, %v2895
        %v3257 = vsel %vm1479, %v3225, %v2897
        %v3258 = vsel %vm1479, %v3226, %v2899
        %v3259 = vsel %vm1479, %v3227, %v2901
        %v3260 = vsel %vm1479, %v3228, %v2903
        %v3261 = vsel %vm1479, %v3229, %v2905
        %v3262 = vsel %vm1479, %v3230, %v2907
        %v3263 = vsel %vm1479, %v3231, %v2909
        %v3264 = vsel %vm1479, %v3232, %v2911
        %v3265 = vsel %vm1479, %v3233, %v2913
        %v3266 = vsel %vm1512, %v3234, %v2947
        %v3267 = vsel %vm1512, %v3235, %v2949
        %v3268 = vsel %vm1512, %v3236, %v2951
        %v3269 = vsel %vm1512, %v3237, %v2953
        %v3270 = vsel %vm1512, %v3238, %v2955
        %v3271 = vsel %vm1512, %v3239, %v2957
        %v3272 = vsel %vm1512, %v3240, %v2959
        %v3273 = vsel %vm1512, %v3241, %v2961
        %v3274 = vsel %vm1512, %v3242, %v2963
        %v3275 = vsel %vm1512, %v3243, %v2965
        %v3276 = vsel %vm1512, %v3244, %v2967
        %v3277 = vsel %vm1512, %v3245, %v2969
        %v3278 = vsel %vm1512, %v3246, %v2971
        %v3279 = vsel %vm1512, %v3247, %v2973
        %v3280 = vsel %vm1512, %v3248, %v2975
        %v3281 = vsel %vm1512, %v3249, %v2977
        %v3282 = vsel %vm1512, %v3250, %v2979
        %v3283 = vsel %vm1512, %v3251, %v2981
        %v3284 = vsel %vm1512, %v3252, %v2983
        %v3285 = vsel %vm1512, %v3253, %v2985
        %v3286 = vsel %vm1512, %v3254, %v2987
        %v3287 = vsel %vm1512, %v3255, %v2989
        %v3288 = vsel %vm1512, %v3256, %v2991
        %v3289 = vsel %vm1512, %v3257, %v2993
        %v3290 = vsel %vm1512, %v3258, %v2995
        %v3291 = vsel %vm1512, %v3259, %v2997
        %v3292 = vsel %vm1512, %v3260, %v2999
        %v3293 = vsel %vm1512, %v3261, %v3001
        %v3294 = vsel %vm1512, %v3262, %v3003
        %v3295 = vsel %vm1512, %v3263, %v3005
        %v3296 = vsel %vm1512, %v3264, %v3007
        %v3297 = vsel %vm1512, %v3265, %v3009
        %v3298 = vld [vmem:[%s2] sm:$0xff]
        %v3299 = vld [vmem:[%s2 + $0x8] sm:$0xff]
        %v3300 = vld [vmem:[%s2 + $0x10] sm:$0xff]
        %v3301 = vld [vmem:[%s2 + $0x18] sm:$0xff]
        %v3302 = vld [vmem:[%s2 + $0x20] sm:$0xf]
        %v3351 = vrot.slane %v172, 1
        %v3352 = vrot.slane %v173, 1
        %v3353 = vsel %vm325, %v3351, %v3352
        %v3354 = vrot.slane %v174, 1
        %v3355 = vsel %vm325, %v3352, %v3354
        %v3356 = vrot.slane %v175, 1
        %v3357 = vrot.slane %v176, 1
        %v3358 = vsel %vm325, %v3356, %v3357
        %v3359 = vrot.slane %v177, 1
        %v3360 = vsel %vm325, %v3357, %v3359
        %v3361 = vrot.slane %v178, 1
        %v3362 = vrot.slane %v179, 1
        %v3363 = vsel %vm325, %v3361, %v3362
        %v3364 = vrot.slane %v180, 1
        %v3365 = vsel %vm325, %v3362, %v3364
        %v3366 = vrot.slane %v181, 1
        %v3367 = vrot.slane %v182, 1
        %v3368 = vsel %vm325, %v3366, %v3367
        %v3369 = vrot.slane %v183, 1
        %v3370 = vsel %vm325, %v3367, %v3369
        %v3371 = vrot.slane %v184, 1
        %v3372 = vrot.slane %v185, 1
        %v3373 = vsel %vm325, %v3371, %v3372
        %v3374 = vrot.slane %v186, 1
        %v3375 = vsel %vm325, %v3372, %v3374
        %v3376 = vrot.slane %v187, 1
        %v3377 = vrot.slane %v188, 1
        %v3378 = vsel %vm325, %v3376, %v3377
        %v3379 = vrot.slane %v189, 1
        %v3380 = vsel %vm325, %v3377, %v3379
        %v3381 = vrot.slane %v190, 1
        %v3382 = vrot.slane %v191, 1
        %v3383 = vsel %vm325, %v3381, %v3382
        %v3384 = vrot.slane %v192, 1
        %v3385 = vsel %vm325, %v3382, %v3384
        %v3386 = vrot.slane %v193, 1
        %v3387 = vrot.slane %v194, 1
        %v3388 = vsel %vm325, %v3386, %v3387
        %v3389 = vrot.slane %v195, 1
        %v3390 = vsel %vm325, %v3387, %v3389
        %v3391 = vrot.slane %v196, 1
        %v3392 = vrot.slane %v197, 1
        %v3393 = vsel %vm325, %v3391, %v3392
        %v3394 = vrot.slane %v198, 1
        %v3395 = vsel %vm325, %v3392, %v3394
        %v3396 = vrot.slane %v199, 1
        %v3397 = vrot.slane %v200, 1
        %v3398 = vsel %vm325, %v3396, %v3397
        %v3399 = vrot.slane %v201, 1
        %v3400 = vsel %vm325, %v3397, %v3399
        %v3401 = vrot.slane %v202, 1
        %v3402 = vrot.slane %v203, 1
        %v3403 = vsel %vm325, %v3401, %v3402
        %v3404 = vrot.slane %v204, 1
        %v3405 = vsel %vm325, %v3402, %v3404
        %v3406 = vrot.slane %v205, 1
        %v3407 = vrot.slane %v206, 1
        %v3408 = vsel %vm325, %v3406, %v3407
        %v3409 = vrot.slane %v207, 1
        %v3410 = vsel %vm325, %v3407, %v3409
        %v3411 = vrot.slane %v208, 1
        %v3412 = vrot.slane %v209, 1
        %v3413 = vsel %vm325, %v3411, %v3412
        %v3414 = vrot.slane %v210, 1
        %v3415 = vsel %vm325, %v3412, %v3414
        %v3416 = vrot.slane %v211, 1
        %v3417 = vrot.slane %v212, 1
        %v3418 = vsel %vm325, %v3416, %v3417
        %v3419 = vrot.slane %v213, 1
        %v3420 = vsel %vm325, %v3417, %v3419
        %v3421 = vrot.slane %v214, 1
        %v3422 = vrot.slane %v215, 1
        %v3423 = vsel %vm325, %v3421, %v3422
        %v3424 = vrot.slane %v216, 1
        %v3425 = vsel %vm325, %v3422, %v3424
        %v3426 = vrot.slane %v217, 1
        %v3427 = vrot.slane %v218, 1
        %v3428 = vsel %vm325, %v3426, %v3427
        %v3429 = vrot.slane %v219, 1
        %v3430 = vsel %vm325, %v3427, %v3429
        %v3464 = vsel %vm1550, %v3266, 0
        %v3467 = vsel %vm1550, %v3267, 0
        %v3470 = vsel %vm1550, %v3268, 0
        %v3473 = vsel %vm1550, %v3269, 0
        %v3476 = vsel %vm1550, %v3270, 0
        %v3479 = vsel %vm1550, %v3271, 0
        %v3482 = vsel %vm1550, %v3272, 0
        %v3485 = vsel %vm1550, %v3273, 0
        %v3488 = vsel %vm1550, %v3274, 0
        %v3491 = vsel %vm1550, %v3275, 0
        %v3494 = vsel %vm1550, %v3276, 0
        %v3497 = vsel %vm1550, %v3277, 0
        %v3500 = vsel %vm1550, %v3278, 0
        %v3503 = vsel %vm1550, %v3279, 0
        %v3506 = vsel %vm1550, %v3280, 0
        %v3509 = vsel %vm1550, %v3281, 0
        %v3512 = vsel %vm1550, %v3282, 0
        %v3515 = vsel %vm1550, %v3283, 0
        %v3518 = vsel %vm1550, %v3284, 0
        %v3521 = vsel %vm1550, %v3285, 0
        %v3524 = vsel %vm1550, %v3286, 0
        %v3527 = vsel %vm1550, %v3287, 0
        %v3530 = vsel %vm1550, %v3288, 0
        %v3533 = vsel %vm1550, %v3289, 0
        %v3536 = vsel %vm1550, %v3290, 0
        %v3539 = vsel %vm1550, %v3291, 0
        %v3542 = vsel %vm1550, %v3292, 0
        %v3545 = vsel %vm1550, %v3293, 0
        %v3548 = vsel %vm1550, %v3294, 0
        %v3551 = vsel %vm1550, %v3295, 0
        %v3554 = vsel %vm1550, %v3296, 0
        %v3557 = vsel %vm1550, %v3297, 0
        %v3560 = vsel %vm1647, %v3302, 0
        %3562 = vmatprep.subr.mxu0 0.0
        %3563 = vmatpush1.msra.mxu0 %v3298
        %3564 = vmatprep.subr.mxu0 0.0
        %3565 = vmatpush1.msra.mxu0 %v3299
        %3566 = vmatprep.subr.mxu0 0.0
        %3567 = vmatpush1.msra.mxu0 %v3300
        %3568 = vmatprep.subr.mxu0 0.0
        %3569 = vmatpush1.msra.mxu0 %v3301
        %3570 = vmatprep.subr.mxu0 0.0
        %3571 = vmatpush1.msra.mxu0 %v3560
        %3572 = vmatprep.subr.mxu0 0.0
        %3573 = vmatpush1.msra.mxu0 0.0
        %3574 = vmatprep.subr.mxu0 0.0
        %3575 = vmatpush1.msra.mxu0 0.0
        %3576 = vmatprep.subr.mxu0 0.0
        %3577 = vmatpush1.msra.mxu0 0.0
        %3578 = vmatprep.subr.mxu0 0.0
        %3579 = vmatpush1.msra.mxu0 0.0
        %3580 = vmatprep.subr.mxu0 0.0
        %3581 = vmatpush1.msra.mxu0 0.0
        %3582 = vmatprep.subr.mxu0 0.0
        %3583 = vmatpush1.msra.mxu0 0.0
        %3584 = vmatprep.subr.mxu0 0.0
        %3585 = vmatpush1.msra.mxu0 0.0
        %3586 = vmatprep.subr.mxu0 0.0
        %3587 = vmatpush1.msra.mxu0 0.0
        %3588 = vmatprep.subr.mxu0 0.0
        %3589 = vmatpush1.msra.mxu0 0.0
        %3590 = vmatprep.subr.mxu0 0.0
        %3591 = vmatpush1.msra.mxu0 0.0
        %3592 = vmatprep.subr.mxu0 0.0
        %3593 = vmatpush1.msra.mxu0 0.0
        %3594 = vmatprep.subr.mxu0 0.0
        %3595 = vmatpush1.msra.mxu0 0.0
        %3596 = vmatprep.subr.mxu0 0.0
        %3597 = vmatpush1.msra.mxu0 0.0
        %3598 = vmatprep.subr.mxu0 0.0
        %3599 = vmatpush1.msra.mxu0 0.0
        %3600 = vmatprep.subr.mxu0 0.0
        %3601 = vmatpush1.msra.mxu0 0.0
        %3602 = vmatprep.subr.mxu0 0.0
        %3603 = vmatpush1.msra.mxu0 0.0
        %3604 = vmatprep.subr.mxu0 0.0
        %3605 = vmatpush1.msra.mxu0 0.0
        %3606 = vmatprep.subr.mxu0 0.0
        %3607 = vmatpush1.msra.mxu0 0.0
        %3608 = vmatprep.subr.mxu0 0.0
        %3609 = vmatpush1.msra.mxu0 0.0
        %3610 = vmatprep.subr.mxu0 0.0
        %3611 = vmatpush1.msra.mxu0 0.0
        %3612 = vmatprep.subr.mxu0 0.0
        %3613 = vmatpush1.msra.mxu0 0.0
        %3614 = vmatprep.subr.mxu0 0.0
        %3615 = vmatpush1.msra.mxu0 0.0
        %3616 = vmatprep.subr.mxu0 0.0
        %3617 = vmatpush1.msra.mxu0 0.0
        %3618 = vmatprep.subr.mxu0 0.0
        %3619 = vmatpush1.msra.mxu0 0.0
        %3620 = vmatprep.subr.mxu0 0.0
        %3621 = vmatpush1.msra.mxu0 0.0
        %3622 = vmatprep.subr.mxu0 0.0
        %3623 = vmatpush1.msra.mxu0 0.0
        %3624 = vmatprep.subr.mxu0 0.0
        %3625 = vmatpush1.msra.mxu0 0.0
        %3626 = vmatprep.mubr.f32.mxu0 0.0
        %3627 = vmatmul.mubr.f32.gmra.mrb[0].mxu0 %v3464
        %v3628 = vpop.f32.mrb[0].mxu0
        %v3629 = vadd.f32 %v3353, %v3628
        %v3630 = vpop.f32.mrb[0].mxu0
        %3631 = vmatprep.mubr.f32.mxu0 0.0
        %3632 = vmatmul.mubr.f32.gmra.mrb[0].mxu0 %v3467
        %v3633 = vpop.f32.mrb[0].mxu0
        %v3634 = vadd.f32 %v3355, %v3633
        %v3635 = vpop.f32.mrb[0].mxu0
        %3636 = vmatprep.mubr.f32.mxu0 0.0
        %3637 = vmatmul.mubr.f32.gmra.mrb[0].mxu0 %v3470
        %v3638 = vpop.f32.mrb[0].mxu0
        %v3639 = vadd.f32 %v3358, %v3638
        %v3640 = vpop.f32.mrb[0].mxu0
        %3641 = vmatprep.mubr.f32.mxu0 0.0
        %3642 = vmatmul.mubr.f32.gmra.mrb[0].mxu0 %v3473
        %v3643 = vpop.f32.mrb[0].mxu0
        %v3644 = vadd.f32 %v3360, %v3643
        %v3645 = vpop.f32.mrb[0].mxu0
        %3646 = vmatprep.mubr.f32.mxu0 0.0
        %3647 = vmatmul.mubr.f32.gmra.mrb[0].mxu0 %v3476
        %v3648 = vpop.f32.mrb[0].mxu0
        %v3649 = vadd.f32 %v3363, %v3648
        %v3650 = vpop.f32.mrb[0].mxu0
        %3651 = vmatprep.mubr.f32.mxu0 0.0
        %3652 = vmatmul.mubr.f32.gmra.mrb[0].mxu0 %v3479
        %v3653 = vpop.f32.mrb[0].mxu0
        %v3654 = vadd.f32 %v3365, %v3653
        %v3655 = vpop.f32.mrb[0].mxu0
        %3656 = vmatprep.mubr.f32.mxu0 0.0
        %3657 = vmatmul.mubr.f32.gmra.mrb[0].mxu0 %v3482
        %v3658 = vpop.f32.mrb[0].mxu0
        %v3659 = vadd.f32 %v3368, %v3658
        %v3660 = vpop.f32.mrb[0].mxu0
        %3661 = vmatprep.mubr.f32.mxu0 0.0
        %3662 = vmatmul.mubr.f32.gmra.mrb[0].mxu0 %v3485
        %v3663 = vpop.f32.mrb[0].mxu0
        %v3664 = vadd.f32 %v3370, %v3663
        %v3665 = vpop.f32.mrb[0].mxu0
        %3666 = vmatprep.mubr.f32.mxu0 0.0
        %3667 = vmatmul.mubr.f32.gmra.mrb[0].mxu0 %v3488
        %v3668 = vpop.f32.mrb[0].mxu0
        %v3669 = vadd.f32 %v3373, %v3668
        %v3670 = vpop.f32.mrb[0].mxu0
        %3671 = vmatprep.mubr.f32.mxu0 0.0
        %3672 = vmatmul.mubr.f32.gmra.mrb[0].mxu0 %v3491
        %v3673 = vpop.f32.mrb[0].mxu0
        %v3674 = vadd.f32 %v3375, %v3673
        %v3675 = vpop.f32.mrb[0].mxu0
        %3676 = vmatprep.mubr.f32.mxu0 0.0
        %3677 = vmatmul.mubr.f32.gmra.mrb[0].mxu0 %v3494
        %v3678 = vpop.f32.mrb[0].mxu0
        %v3679 = vadd.f32 %v3378, %v3678
        %v3680 = vpop.f32.mrb[0].mxu0
        %3681 = vmatprep.mubr.f32.mxu0 0.0
        %3682 = vmatmul.mubr.f32.gmra.mrb[0].mxu0 %v3497
        %v3683 = vpop.f32.mrb[0].mxu0
        %v3684 = vadd.f32 %v3380, %v3683
        %v3685 = vpop.f32.mrb[0].mxu0
        %3686 = vmatprep.mubr.f32.mxu0 0.0
        %3687 = vmatmul.mubr.f32.gmra.mrb[0].mxu0 %v3500
        %v3688 = vpop.f32.mrb[0].mxu0
        %v3689 = vadd.f32 %v3383, %v3688
        %v3690 = vpop.f32.mrb[0].mxu0
        %3691 = vmatprep.mubr.f32.mxu0 0.0
        %3692 = vmatmul.mubr.f32.gmra.mrb[0].mxu0 %v3503
        %v3693 = vpop.f32.mrb[0].mxu0
        %v3694 = vadd.f32 %v3385, %v3693
        %v3695 = vpop.f32.mrb[0].mxu0
        %3696 = vmatprep.mubr.f32.mxu0 0.0
        %3697 = vmatmul.mubr.f32.gmra.mrb[0].mxu0 %v3506
        %v3698 = vpop.f32.mrb[0].mxu0
        %v3699 = vadd.f32 %v3388, %v3698
        %v3700 = vpop.f32.mrb[0].mxu0
        %3701 = vmatprep.mubr.f32.mxu0 0.0
        %3702 = vmatmul.mubr.f32.gmra.mrb[0].mxu0 %v3509
        %v3703 = vpop.f32.mrb[0].mxu0
        %v3704 = vadd.f32 %v3390, %v3703
        %v3705 = vpop.f32.mrb[0].mxu0
        %3706 = vmatprep.mubr.f32.mxu0 0.0
        %3707 = vmatmul.mubr.f32.gmra.mrb[0].mxu0 %v3512
        %v3708 = vpop.f32.mrb[0].mxu0
        %v3709 = vadd.f32 %v3393, %v3708
        %v3710 = vpop.f32.mrb[0].mxu0
        %3711 = vmatprep.mubr.f32.mxu0 0.0
        %3712 = vmatmul.mubr.f32.gmra.mrb[0].mxu0 %v3515
        %v3713 = vpop.f32.mrb[0].mxu0
        %v3714 = vadd.f32 %v3395, %v3713
        %v3715 = vpop.f32.mrb[0].mxu0
        %3716 = vmatprep.mubr.f32.mxu0 0.0
        %3717 = vmatmul.mubr.f32.gmra.mrb[0].mxu0 %v3518
        %v3718 = vpop.f32.mrb[0].mxu0
        %v3719 = vadd.f32 %v3398, %v3718
        %v3720 = vpop.f32.mrb[0].mxu0
        %3721 = vmatprep.mubr.f32.mxu0 0.0
        %3722 = vmatmul.mubr.f32.gmra.mrb[0].mxu0 %v3521
        %v3723 = vpop.f32.mrb[0].mxu0
        %v3724 = vadd.f32 %v3400, %v3723
        %v3725 = vpop.f32.mrb[0].mxu0
        %3726 = vmatprep.mubr.f32.mxu0 0.0
        %3727 = vmatmul.mubr.f32.gmra.mrb[0].mxu0 %v3524
        %v3728 = vpop.f32.mrb[0].mxu0
        %v3729 = vadd.f32 %v3403, %v3728
        %v3730 = vpop.f32.mrb[0].mxu0
        %3731 = vmatprep.mubr.f32.mxu0 0.0
        %3732 = vmatmul.mubr.f32.gmra.mrb[0].mxu0 %v3527
        %v3733 = vpop.f32.mrb[0].mxu0
        %v3734 = vadd.f32 %v3405, %v3733
        %v3735 = vpop.f32.mrb[0].mxu0
        %3736 = vmatprep.mubr.f32.mxu0 0.0
        %3737 = vmatmul.mubr.f32.gmra.mrb[0].mxu0 %v3530
        %v3738 = vpop.f32.mrb[0].mxu0
        %v3739 = vadd.f32 %v3408, %v3738
        %v3740 = vpop.f32.mrb[0].mxu0
        %3741 = vmatprep.mubr.f32.mxu0 0.0
        %3742 = vmatmul.mubr.f32.gmra.mrb[0].mxu0 %v3533
        %v3743 = vpop.f32.mrb[0].mxu0
        %v3744 = vadd.f32 %v3410, %v3743
        %v3745 = vpop.f32.mrb[0].mxu0
        %3746 = vmatprep.mubr.f32.mxu0 0.0
        %3747 = vmatmul.mubr.f32.gmra.mrb[0].mxu0 %v3536
        %v3748 = vpop.f32.mrb[0].mxu0
        %v3749 = vadd.f32 %v3413, %v3748
        %v3750 = vpop.f32.mrb[0].mxu0
        %3751 = vmatprep.mubr.f32.mxu0 0.0
        %3752 = vmatmul.mubr.f32.gmra.mrb[0].mxu0 %v3539
        %v3753 = vpop.f32.mrb[0].mxu0
        %v3754 = vadd.f32 %v3415, %v3753
        %v3755 = vpop.f32.mrb[0].mxu0
        %3756 = vmatprep.mubr.f32.mxu0 0.0
        %3757 = vmatmul.mubr.f32.gmra.mrb[0].mxu0 %v3542
        %v3758 = vpop.f32.mrb[0].mxu0
        %v3759 = vadd.f32 %v3418, %v3758
        %v3760 = vpop.f32.mrb[0].mxu0
        %3761 = vmatprep.mubr.f32.mxu0 0.0
        %3762 = vmatmul.mubr.f32.gmra.mrb[0].mxu0 %v3545
        %v3763 = vpop.f32.mrb[0].mxu0
        %v3764 = vadd.f32 %v3420, %v3763
        %v3765 = vpop.f32.mrb[0].mxu0
        %3766 = vmatprep.mubr.f32.mxu0 0.0
        %3767 = vmatmul.mubr.f32.gmra.mrb[0].mxu0 %v3548
        %v3768 = vpop.f32.mrb[0].mxu0
        %v3769 = vadd.f32 %v3423, %v3768
        %v3770 = vpop.f32.mrb[0].mxu0
        %3771 = vmatprep.mubr.f32.mxu0 0.0
        %3772 = vmatmul.mubr.f32.gmra.mrb[0].mxu0 %v3551
        %v3773 = vpop.f32.mrb[0].mxu0
        %v3774 = vadd.f32 %v3425, %v3773
        %v3775 = vpop.f32.mrb[0].mxu0
        %3776 = vmatprep.mubr.f32.mxu0 0.0
        %3777 = vmatmul.mubr.f32.gmra.mrb[0].mxu0 %v3554
        %v3778 = vpop.f32.mrb[0].mxu0
        %v3779 = vadd.f32 %v3428, %v3778
        %v3780 = vpop.f32.mrb[0].mxu0
        %3781 = vmatprep.mubr.f32.mxu0 0.0
        %3782 = vmatmul.mubr.f32.gmra.mrb[0].mxu0 %v3557
        %v3783 = vpop.f32.mrb[0].mxu0
        %v3784 = vadd.f32 %v3430, %v3783
        %v3785 = vpop.f32.mrb[0].mxu0
        %3786 = vdwg.mxu0
        %3787 = vxpose.xlu0.b32.start [1/16] %v3629, 128
        %3788 = vxpose.xlu0.b32.cont [2/16] %v3634, 128
        %3789 = vxpose.xlu0.b32.cont [3/16] %v3639, 128
        %3790 = vxpose.xlu0.b32.cont [4/16] %v3644, 128
        %3791 = vxpose.xlu0.b32.cont [5/16] %v3649, 128
        %3792 = vxpose.xlu0.b32.cont [6/16] %v3654, 128
        %3793 = vxpose.xlu0.b32.cont [7/16] %v3659, 128
        %3794 = vxpose.xlu0.b32.cont [8/16] %v3664, 128
        %3795 = vxpose.xlu0.b32.cont [9/16] %v3669, 128
        %3796 = vxpose.xlu0.b32.cont [10/16] %v3674, 128
        %3797 = vxpose.xlu0.b32.cont [11/16] %v3679, 128
        %3798 = vxpose.xlu0.b32.cont [12/16] %v3684, 128
        %3799 = vxpose.xlu0.b32.cont [13/16] %v3689, 128
        %3800 = vxpose.xlu0.b32.cont [14/16] %v3694, 128
        %3801 = vxpose.xlu0.b32.cont [15/16] %v3699, 128
        %3802 = vxpose.xlu0.b32.end [16/16] %v3704, 128
        %v3803 = vpop.trf.xlu0
        %v3804 = vpop.trf.xlu0
        %v3805 = vpop.trf.xlu0
        %v3806 = vpop.trf.xlu0
        %v3807 = vpop.trf.xlu0
        %v3808 = vpop.trf.xlu0
        %v3809 = vpop.trf.xlu0
        %v3810 = vpop.trf.xlu0
        %v3811 = vpop.trf.xlu0
        %v3812 = vpop.trf.xlu0
        %v3813 = vpop.trf.xlu0
        %v3814 = vpop.trf.xlu0
        %v3815 = vpop.trf.xlu0
        %v3816 = vpop.trf.xlu0
        %v3817 = vpop.trf.xlu0
        %v3818 = vpop.trf.xlu0
        %3819 = vxpose.xlu0.b32.start [1/16] %v3709, 128
        %3820 = vxpose.xlu0.b32.cont [2/16] %v3714, 128
        %3821 = vxpose.xlu0.b32.cont [3/16] %v3719, 128
        %3822 = vxpose.xlu0.b32.cont [4/16] %v3724, 128
        %3823 = vxpose.xlu0.b32.cont [5/16] %v3729, 128
        %3824 = vxpose.xlu0.b32.cont [6/16] %v3734, 128
        %3825 = vxpose.xlu0.b32.cont [7/16] %v3739, 128
        %3826 = vxpose.xlu0.b32.cont [8/16] %v3744, 128
        %3827 = vxpose.xlu0.b32.cont [9/16] %v3749, 128
        %3828 = vxpose.xlu0.b32.cont [10/16] %v3754, 128
        %3829 = vxpose.xlu0.b32.cont [11/16] %v3759, 128
        %3830 = vxpose.xlu0.b32.cont [12/16] %v3764, 128
        %3831 = vxpose.xlu0.b32.cont [13/16] %v3769, 128
        %3832 = vxpose.xlu0.b32.cont [14/16] %v3774, 128
        %3833 = vxpose.xlu0.b32.cont [15/16] %v3779, 128
        %3834 = vxpose.xlu0.b32.end [16/16] %v3784, 128
        %v3835 = vpop.trf.xlu0
        %v3836 = vpop.trf.xlu0
        %v3837 = vpop.trf.xlu0
        %v3838 = vpop.trf.xlu0
        %v3839 = vpop.trf.xlu0
        %v3840 = vpop.trf.xlu0
        %v3841 = vpop.trf.xlu0
        %v3842 = vpop.trf.xlu0
        %v3843 = vpop.trf.xlu0
        %v3844 = vpop.trf.xlu0
        %v3845 = vpop.trf.xlu0
        %v3846 = vpop.trf.xlu0
        %v3847 = vpop.trf.xlu0
        %v3848 = vpop.trf.xlu0
        %v3849 = vpop.trf.xlu0
        %v3850 = vpop.trf.xlu0
        %v3853 = vcombine.low %v3803, %v3835
        %3855 = vst [vmem:[%s163] sm:$0xff] %v3853
        %s3856 = sand.u32 %s93, 1
        %s3857 = scalar_lea.sflag [#allocation4], %s3856
        %s3858 = sand.u32 %s93, 1
        %s3859 = smul.addr %s3858, 8
        %s3860 = scalar_lea.vmem [#allocation3], %s3859
        // Predicated region
        $region33: #{tpu_custom_call.1} parent=31 // pred_check
          %p3861 = pneg %p103
        $region34: #{tpu_custom_call.1} parent=31 // pred_check_branch
          %3863 = sbr.rel (%p3861) target = $region36
        $region35: #{tpu_custom_call.1} parent=31 // pred_region
          %s3865 = ssub.s32 128, 128
          %3866 = vsyncadd %s3857, %s3865
          %s3867 = smul.addr %s17, 2
          %s3868 = smul.addr %s3867, 64
          %s3869 = scalar_lea.hbm %s3, %s3868
          %s3871 = sshll.u32 %s3860, 4
          %s3872 = int_to_ptr.vmem [resolvable:$true] %s3871
          %3874 = dma.vmem_to_hbm [thread:$0]  %s3872, 128, %s3869, %s3857
        $region36: #{tpu_custom_call.1} parent=31 // pred_fallthru
          _
      $region32: #{tpu_custom_call.1} parent=5 // pred_fallthru
        _
      %p3875 = scmp.le.s32.totalorder 2, %s12
      // Predicated region
      $region37: #{tpu_custom_call.1} parent=5 // pred_check
        %p3876 = pneg %p3875
      $region38: #{tpu_custom_call.1} parent=5 // pred_check_branch
        %3878 = sbr.rel (%p3876) target = $region40
      $region39: #{tpu_custom_call.1} parent=5 // pred_region
        %s3879 = ssub.s32 %s12, 2
        // Predicated region
        $region41: #{tpu_custom_call.1} parent=39 // pred_check
          %p3880 = pneg %p109
        $region42: #{tpu_custom_call.1} parent=39 // pred_check_branch
          %3882 = sbr.rel (%p3880) target = $region44
        $region43: #{tpu_custom_call.1} parent=39 // pred_region
          %s3883 = sand.u32 %s94, 1
          %s3884 = scalar_lea.sflag [#allocation4], %s3883
          %s3885 = sand.u32 %s94, 1
          %s3886 = smul.addr %s3885, 8
          %s3887 = scalar_lea.vmem [#allocation3], %s3886
          %3888 = dma.done %s3884, 128
        $region44: #{tpu_custom_call.1} parent=39 // pred_fallthru
          _
      $region40: #{tpu_custom_call.1} parent=5 // pred_fallthru
        _
    $region6: #{tpu_custom_call.1} parent=1 // loop_footer
      %s16 = sadd.s32 1, %s12
    $region7: #{tpu_custom_call.1} parent=1 // loop_footer_branch
      %11 = sbr.rel target = $region3
    $region8: #{tpu_custom_call.1} parent=1 // loop_exit
      _
    %3889 = vsyncpa [#allocation4], 1
    %s3890 = scalar_lea.sflag [#allocation4], 1
    %3891 = vsyncpa %s3890, 1

</llo_original>
